<compile_context>
chip_gen: v7x
topology: tpu7x:2x2x1
jax: 0.10.0
libtpu: 0.0.40
codegen_flags: <defaults>
</compile_context>

<pallas_src>
import math

import jax
import jax.numpy as jnp
from jax import lax
from jax.experimental import pallas as pl
from jax.experimental.pallas import tpu as pltpu  # noqa: F401  (TPU backend)

# ---- small, deterministic config (GPTConfig analogue) ----------------------
VOCAB_SIZE = 512
BLOCK_SIZE = 16          # max sequence length
N_LAYER = 2
N_HEAD = 4
N_EMBD = 128
HEAD_DIM = N_EMBD // N_HEAD
EPS = 1e-5               # LayerNorm eps used by F.layer_norm in the module
NEG_INF = -1e30          # finite mask value (NaN-safe), exp() underflows to 0
# dropout = 0.0, bias = True, use_concat / identity options = False (defaults)


def _layernorm(x, w, b):
    mu = jnp.mean(x, axis=-1, keepdims=True)
    xc = x - mu
    var = jnp.mean(xc * xc, axis=-1, keepdims=True)
    inv = lax.rsqrt(var + EPS)
    return xc * inv * w + b


# ---------------------------------------------------------------------------
# Single fused kernel:
#   x = onehot(idx) @ wte + wpe
#   for each layer: x = x + c_proj( causal_mha( layer_norm(x) ) )
#   logits = layer_norm_f(x_last_token) @ wte.T        (weight tying, in-kernel)
# ---------------------------------------------------------------------------
def _make_fused_kernel(B, T):
    M = B * T
    scale = 1.0 / math.sqrt(HEAD_DIM)

    def kernel(idx_ref, wte_ref, wpe_ref, lnw_ref, lnb_ref, wqkv_ref, bqkv_ref,
               wproj_ref, bproj_ref, lnfw_ref, lnfb_ref, out_ref):
        # ---- fused embedding: one-hot(idx) @ wte + wpe (dropout=0 -> id) ----
        vocab_iota = lax.broadcasted_iota(jnp.int32, (M, VOCAB_SIZE), 1)
        onehot = jnp.where(vocab_iota == idx_ref[...],
                           jnp.float32(1.0), jnp.float32(0.0)).astype(jnp.bfloat16)
        tok_emb = jnp.dot(onehot, wte_ref[...],
                          preferred_element_type=jnp.float32)          # (M, C)
        pos_emb = jnp.concatenate([wpe_ref[...]] * B, axis=0)          # (M, C)
        x = tok_emb + pos_emb                                          # f32

        # plain (T, T) causal mask, shared by every (layer, batch, head)
        rows = lax.broadcasted_iota(jnp.int32, (T, T), 0)
        cols = lax.broadcasted_iota(jnp.int32, (T, T), 1)
        causal = rows >= cols

        for l in range(N_LAYER):                            # static layer loop
            xln = _layernorm(x, lnw_ref[l], lnb_ref[l])
            # fused qkv projection over the whole batch: (M, C) @ (C, 3C)
            qkv = jnp.dot(xln.astype(jnp.bfloat16), wqkv_ref[l],
                          preferred_element_type=jnp.float32) + bqkv_ref[l]
            qkv_b = qkv.astype(jnp.bfloat16)

            # per-batch causal attention (no cross-batch masked work)
            batch_outs = []
            for b in range(B):                              # static batch loop
                r0 = b * T
                head_outs = []
                for h in range(N_HEAD):                     # static head loop
                    s0 = h * HEAD_DIM
                    qh = qkv_b[r0:r0 + T, s0:s0 + HEAD_DIM]
                    kh = qkv_b[r0:r0 + T, N_EMBD + s0:N_EMBD + s0 + HEAD_DIM]
                    vh = qkv_b[r0:r0 + T,
                               2 * N_EMBD + s0:2 * N_EMBD + s0 + HEAD_DIM]
                    # contract last dim of BOTH operands -> no kh.T relayout
                    att = lax.dot_general(
                        qh, kh, (((1,), (1,)), ((), ())),
                        preferred_element_type=jnp.float32) * scale    # (T, T)
                    att = jnp.where(causal, att, NEG_INF)
                    att = att - jnp.max(att, axis=-1, keepdims=True)
                    p = jnp.exp(att)
                    p = p * pl.reciprocal(jnp.sum(p, axis=-1, keepdims=True),
                                          approx=True)      # dropout=0 -> id
                    head_outs.append(jnp.dot(p.astype(jnp.bfloat16), vh,
                                             preferred_element_type=jnp.float32))
                batch_outs.append(jnp.concatenate(head_outs, axis=-1))  # (T, C)
            att_out = jnp.concatenate(batch_outs, axis=0)               # (M, C)

            # single K=128 output projection for all heads, then residual add
            y = jnp.dot(att_out.astype(jnp.bfloat16), wproj_ref[l],
                        preferred_element_type=jnp.float32) + bproj_ref[l]
            x = x + y

        # final LayerNorm + tied lm_head on last-token rows (targets=None path)
        # TODO(synk): training path (targets != None -> full-seq logits + CE loss) not implemented.
        x_last = jnp.concatenate(
            [x[b * T + T - 1:b * T + T, :] for b in range(B)], axis=0)  # (B, C)
        xln = _layernorm(x_last, lnfw_ref[0], lnfb_ref[0])
        # weight tying: contract on the C dim of wte directly (no wte.T copy)
        out_ref[...] = lax.dot_general(
            xln.astype(jnp.bfloat16), wte_ref[...], (((1,), (1,)), ((), ())),
            preferred_element_type=jnp.float32)

    return kernel


# ---------------------------------------------------------------------------
# Parameter init (deterministic; mirrors GPT._init_weights, weight tying on)
# ---------------------------------------------------------------------------
def init_params(key):
    ks = jax.random.split(key, 2 + 2 * N_LAYER)
    wte = 0.02 * jax.random.normal(ks[0], (VOCAB_SIZE, N_EMBD), jnp.float32)
    wpe = 0.02 * jax.random.normal(ks[1], (BLOCK_SIZE, N_EMBD), jnp.float32)
    cproj_std = 0.02 / math.sqrt(2 * N_LAYER)
    w_qkv, w_proj = [], []
    for l in range(N_LAYER):
        kq, kp = ks[2 + 2 * l], ks[3 + 2 * l]
        # nn.Linear weight is (out, in); store transposed (in, out) for x @ W
        w_qkv.append((0.02 * jax.random.normal(
            kq, (3 * N_EMBD, N_EMBD), jnp.float32)).T)
        w_proj.append((cproj_std * jax.random.normal(
            kp, (N_EMBD, N_EMBD), jnp.float32)).T)
    return dict(
        # matmul weights in bf16 (f32 accumulation in-kernel); rest stays f32
        wte=wte.astype(jnp.bfloat16),            # (V, C) — tied lm_head weight
        wpe=wpe,                                 # (BLOCK_SIZE, C) f32
        ln_w=jnp.ones((N_LAYER, N_EMBD), jnp.float32),
        ln_b=jnp.zeros((N_LAYER, N_EMBD), jnp.float32),
        w_qkv=jnp.stack(w_qkv).astype(jnp.bfloat16),    # (L, C, 3C)
        b_qkv=jnp.zeros((N_LAYER, 3 * N_EMBD), jnp.float32),
        w_proj=jnp.stack(w_proj).astype(jnp.bfloat16),  # (L, C, C)
        b_proj=jnp.zeros((N_LAYER, N_EMBD), jnp.float32),
        lnf_w=jnp.ones((1, N_EMBD), jnp.float32),
        lnf_b=jnp.zeros((1, N_EMBD), jnp.float32),
    )


# ---------------------------------------------------------------------------
# Full forward (inference path: targets=None -> logits for last token only)
# ---------------------------------------------------------------------------
@jax.jit
def gpt_forward(params, idx):
    B, T = idx.shape
    assert T <= BLOCK_SIZE
    M, C, V, L, H, D = B * T, N_EMBD, VOCAB_SIZE, N_LAYER, N_HEAD, HEAD_DIM
    idx_col = idx.reshape(M, 1).astype(jnp.int32)

    flops = (2 * M * V * C                                   # embedding matmul
             + L * (2 * M * C * 3 * C                        # qkv projection
                    + H * B * 4 * T * T * D                  # scores + p @ v
                    + 2 * M * C * C)                         # output projection
             + 2 * B * C * V)                                 # lm_head
    transcendentals = L * H * B * T * T + (L + 1) * M         # exp + rsqrt
    bytes_accessed = (V * C * 2 + T * C * 4 + 2 * L * C * 4
                      + L * C * 3 * C * 2 + L * 3 * C * 4
                      + L * C * C * 2 + L * C * 4 + 2 * C * 4
                      + M * 4 + B * V * 4)

    logits = pl.pallas_call(
        _make_fused_kernel(B, T),
        out_shape=jax.ShapeDtypeStruct((B, VOCAB_SIZE), jnp.float32),
        # grid-less: every operand lives whole in VMEM (~0.5 MB), one launch
        cost_estimate=pl.CostEstimate(flops=flops,
                                      transcendentals=transcendentals,
                                      bytes_accessed=bytes_accessed),
    )(idx_col, params["wte"], params["wpe"][:T], params["ln_w"], params["ln_b"],
      params["w_qkv"], params["b_qkv"], params["w_proj"], params["b_proj"],
      params["lnf_w"], params["lnf_b"])
    return logits[:, None, :]                                 # (B, 1, V)


# ---------------------------------------------------------------------------
# Pure-JAX f32 reference (sanity check; uses the same bf16-rounded weights)
# ---------------------------------------------------------------------------
def gpt_forward_ref(params, idx):
    B, T = idx.shape
    wte = params["wte"].astype(jnp.float32)
    x = jnp.take(wte, idx, axis=0) + params["wpe"][:T][None]
    causal = jnp.tril(jnp.ones((T, T), bool))
    for l in range(N_LAYER):
        xln = _layernorm(x, params["ln_w"][l], params["ln_b"][l])
        qkv = xln @ params["w_qkv"][l].astype(jnp.float32) + params["b_qkv"][l]
        q, k, v = jnp.split(qkv, 3, axis=-1)
        q = q.reshape(B, T, N_HEAD, HEAD_DIM).transpose(0, 2, 1, 3)
        k = k.reshape(B, T, N_HEAD, HEAD_DIM).transpose(0, 2, 1, 3)
        v = v.reshape(B, T, N_HEAD, HEAD_DIM).transpose(0, 2, 1, 3)
        att = jnp.einsum("bhqd,bhkd->bhqk", q, k) / math.sqrt(HEAD_DIM)
        att = jnp.where(causal, att, -jnp.inf)
        att = jax.nn.softmax(att, axis=-1)
        y = jnp.einsum("bhqk,bhkd->bhqd", att, v)
        y = y.transpose(0, 2, 1, 3).reshape(B, T, N_EMBD)
        y = y @ params["w_proj"][l].astype(jnp.float32) + params["b_proj"][l]
        x = x + y
    xln = _layernorm(x[:, -1, :], params["lnf_w"][0], params["lnf_b"][0])
    return (xln @ wte.T)[:, None, :]


if __name__ == "__main__":
    key = jax.random.PRNGKey(0)
    pkey, ikey = jax.random.split(key)
    params = init_params(pkey)

    B, T = 2, 8
    idx = jax.random.randint(ikey, (B, T), 0, VOCAB_SIZE, dtype=jnp.int32)

    logits = jax.block_until_ready(gpt_forward(params, idx))

    ref = gpt_forward_ref(params, idx)
    assert logits.shape == (B, 1, VOCAB_SIZE), logits.shape
    # bf16 matmul inputs (f32 accumulation) + approx EUP reciprocal in the
    # kernel vs. the pure-f32 reference -> tolerance reflects that precision.
    assert jnp.allclose(logits, ref, atol=1e-2, rtol=1e-2), (
        float(jnp.max(jnp.abs(logits - ref))))

    print("KERNEL_OK")
</pallas_src>

<mosaic_0001>
module attributes {stable_mosaic.version = 11 : i64} {
  func.func @kernel(%arg0: memref<16x1xi32, #tpu.memory_space<vmem>>, %arg1: memref<512x128xbf16, #tpu.memory_space<vmem>>, %arg2: memref<8x128xf32, #tpu.memory_space<vmem>>, %arg3: memref<2x128xf32, #tpu.memory_space<vmem>>, %arg4: memref<2x128xf32, #tpu.memory_space<vmem>>, %arg5: memref<2x128x384xbf16, #tpu.memory_space<vmem>>, %arg6: memref<2x384xf32, #tpu.memory_space<vmem>>, %arg7: memref<2x128x128xbf16, #tpu.memory_space<vmem>>, %arg8: memref<2x128xf32, #tpu.memory_space<vmem>>, %arg9: memref<1x128xf32, #tpu.memory_space<vmem>>, %arg10: memref<1x128xf32, #tpu.memory_space<vmem>>, %arg11: memref<2x512xf32, #tpu.memory_space<vmem>>) attributes {dimension_semantics = [], scalar_prefetch = 0 : i64, scratch_operands = 0 : i64, tpu.core_type = #tpu.core_type<tc>} {
    %0 = tpu.iota {dimensions = array<i32: 1>} : vector<16x512xi32>
    %c0 = arith.constant 0 : index
    %c0_0 = arith.constant 0 : index
    %1 = vector.load %arg0[%c0, %c0_0] : memref<16x1xi32, #tpu.memory_space<vmem>>, vector<16x1xi32>
    %2 = vector.broadcast %1 : vector<16x1xi32> to vector<16x512xi32>
    %3 = arith.cmpi eq, %0, %2 : vector<16x512xi32>
    %cst = arith.constant 1.000000e+00 : f32
    %cst_1 = arith.constant 0.000000e+00 : f32
    %4 = vector.broadcast %cst : f32 to vector<16x512xf32>
    %5 = vector.broadcast %cst_1 : f32 to vector<16x512xf32>
    %6 = arith.select %3, %4, %5 : vector<16x512xi1>, vector<16x512xf32>
    %7 = arith.truncf %6 : vector<16x512xf32> to vector<16x512xbf16>
    %c0_2 = arith.constant 0 : index
    %c0_3 = arith.constant 0 : index
    %8 = vector.load %arg1[%c0_2, %c0_3] : memref<512x128xbf16, #tpu.memory_space<vmem>>, vector<512x128xbf16>
    %cst_4 = arith.constant dense<0.000000e+00> : vector<16x128xf32>
    %9 = tpu.matmul %7, %8, %cst_4 {dimension_numbers = #tpu.dot_dimension_numbers<[1], [0], [0], [1], [0, 0, 1, 1], [], []>} : vector<16x512xbf16>, vector<512x128xbf16>, vector<16x128xf32> -> vector<16x128xf32>
    %c0_5 = arith.constant 0 : index
    %c0_6 = arith.constant 0 : index
    %10 = vector.load %arg2[%c0_5, %c0_6] : memref<8x128xf32, #tpu.memory_space<vmem>>, vector<8x128xf32>
    %11 = tpu.concatenate %10, %10 in 0 : vector<8x128xf32>, vector<8x128xf32> -> vector<16x128xf32>
    %12 = arith.addf %9, %11 : vector<16x128xf32>
    %13 = tpu.iota {dimensions = array<i32: 0>} : vector<8x8xi32>
    %14 = tpu.iota {dimensions = array<i32: 1>} : vector<8x8xi32>
    %15 = arith.cmpi sge, %13, %14 : vector<8x8xi32>
    %c0_7 = arith.constant 0 : index
    %c0_8 = arith.constant 0 : index
    %16 = vector.load %arg3[%c0_7, %c0_8] : memref<2x128xf32, #tpu.memory_space<vmem>>, vector<1x128xf32>
    %17 = vector.shape_cast %16 : vector<1x128xf32> to vector<128xf32>
    %c0_9 = arith.constant 0 : index
    %c0_10 = arith.constant 0 : index
    %18 = vector.load %arg4[%c0_9, %c0_10] : memref<2x128xf32, #tpu.memory_space<vmem>>, vector<1x128xf32>
    %19 = vector.shape_cast %18 : vector<1x128xf32> to vector<128xf32>
    %cst_11 = arith.constant dense<0.000000e+00> : vector<16xf32>
    %20 = vector.multi_reduction <add>, %12, %cst_11 [1] : vector<16x128xf32> to vector<16xf32>
    %21 = vector.shape_cast %20 : vector<16xf32> to vector<16x1xf32>
    %cst_12 = arith.constant 1.280000e+02 : f32
    %22 = vector.broadcast %cst_12 : f32 to vector<16x1xf32>
    %23 = arith.divf %21, %22 : vector<16x1xf32>
    %24 = vector.broadcast %23 : vector<16x1xf32> to vector<16x128xf32>
    %25 = arith.subf %12, %24 : vector<16x128xf32>
    %26 = arith.mulf %25, %25 : vector<16x128xf32>
    %cst_13 = arith.constant dense<0.000000e+00> : vector<16xf32>
    %27 = vector.multi_reduction <add>, %26, %cst_13 [1] : vector<16x128xf32> to vector<16xf32>
    %28 = vector.shape_cast %27 : vector<16xf32> to vector<16x1xf32>
    %cst_14 = arith.constant 1.280000e+02 : f32
    %29 = vector.broadcast %cst_14 : f32 to vector<16x1xf32>
    %30 = arith.divf %28, %29 : vector<16x1xf32>
    %cst_15 = arith.constant 9.99999974E-6 : f32
    %31 = vector.broadcast %cst_15 : f32 to vector<16x1xf32>
    %32 = arith.addf %30, %31 : vector<16x1xf32>
    %33 = math.rsqrt %32 : vector<16x1xf32>
    %34 = vector.broadcast %33 : vector<16x1xf32> to vector<16x128xf32>
    %35 = arith.mulf %25, %34 : vector<16x128xf32>
    %36 = vector.shape_cast %17 : vector<128xf32> to vector<1x128xf32>
    %37 = vector.broadcast %36 : vector<1x128xf32> to vector<16x128xf32>
    %38 = arith.mulf %35, %37 : vector<16x128xf32>
    %39 = vector.shape_cast %19 : vector<128xf32> to vector<1x128xf32>
    %40 = vector.broadcast %39 : vector<1x128xf32> to vector<16x128xf32>
    %41 = arith.addf %38, %40 : vector<16x128xf32>
    %42 = arith.truncf %41 : vector<16x128xf32> to vector<16x128xbf16>
    %c0_16 = arith.constant 0 : index
    %c0_17 = arith.constant 0 : index
    %c0_18 = arith.constant 0 : index
    %43 = vector.load %arg5[%c0_16, %c0_17, %c0_18] : memref<2x128x384xbf16, #tpu.memory_space<vmem>>, vector<1x128x384xbf16>
    %44 = vector.shape_cast %43 : vector<1x128x384xbf16> to vector<128x384xbf16>
    %cst_19 = arith.constant dense<0.000000e+00> : vector<16x384xf32>
    %45 = tpu.matmul %42, %44, %cst_19 {dimension_numbers = #tpu.dot_dimension_numbers<[1], [0], [0], [1], [0, 0, 1, 1], [], []>} : vector<16x128xbf16>, vector<128x384xbf16>, vector<16x384xf32> -> vector<16x384xf32>
    %c0_20 = arith.constant 0 : index
    %c0_21 = arith.constant 0 : index
    %46 = vector.load %arg6[%c0_20, %c0_21] : memref<2x384xf32, #tpu.memory_space<vmem>>, vector<1x384xf32>
    %47 = vector.shape_cast %46 : vector<1x384xf32> to vector<384xf32>
    %48 = vector.shape_cast %47 : vector<384xf32> to vector<1x384xf32>
    %49 = vector.broadcast %48 : vector<1x384xf32> to vector<16x384xf32>
    %50 = arith.addf %45, %49 : vector<16x384xf32>
    %51 = arith.truncf %50 : vector<16x384xf32> to vector<16x384xbf16>
    %52 = vector.extract_strided_slice %51 {offsets = [0, 0], sizes = [8, 32], strides = [1, 1]} : vector<16x384xbf16> to vector<8x32xbf16>
    %53 = vector.extract_strided_slice %51 {offsets = [0, 128], sizes = [8, 32], strides = [1, 1]} : vector<16x384xbf16> to vector<8x32xbf16>
    %54 = vector.extract_strided_slice %51 {offsets = [0, 256], sizes = [8, 32], strides = [1, 1]} : vector<16x384xbf16> to vector<8x32xbf16>
    %cst_22 = arith.constant dense<0.000000e+00> : vector<8x8xf32>
    %55 = tpu.matmul %52, %53, %cst_22 {dimension_numbers = #tpu.dot_dimension_numbers<[1], [1], [0], [0], [0, 0, 1, 0], [], []>} : vector<8x32xbf16>, vector<8x32xbf16>, vector<8x8xf32> -> vector<8x8xf32>
    %cst_23 = arith.constant 0.176776692 : f32
    %56 = vector.broadcast %cst_23 : f32 to vector<8x8xf32>
    %57 = arith.mulf %55, %56 : vector<8x8xf32>
    %cst_24 = arith.constant -1.000000e+30 : f32
    %58 = vector.broadcast %cst_24 : f32 to vector<8x8xf32>
    %59 = arith.select %15, %57, %58 : vector<8x8xi1>, vector<8x8xf32>
    %cst_25 = arith.constant dense<0xFF800000> : vector<8xf32>
    %60 = vector.multi_reduction <maximumf>, %59, %cst_25 [1] : vector<8x8xf32> to vector<8xf32>
    %61 = vector.shape_cast %60 : vector<8xf32> to vector<8x1xf32>
    %62 = vector.broadcast %61 : vector<8x1xf32> to vector<8x8xf32>
    %63 = arith.subf %59, %62 : vector<8x8xf32>
    %64 = math.exp %63 : vector<8x8xf32>
    %cst_26 = arith.constant dense<0.000000e+00> : vector<8xf32>
    %65 = vector.multi_reduction <add>, %64, %cst_26 [1] : vector<8x8xf32> to vector<8xf32>
    %66 = vector.shape_cast %65 : vector<8xf32> to vector<8x1xf32>
    %67 = tpu.reciprocal %66 {approx = true} : vector<8x1xf32> -> vector<8x1xf32>
    %68 = vector.broadcast %67 : vector<8x1xf32> to vector<8x8xf32>
    %69 = arith.mulf %64, %68 : vector<8x8xf32>
    %70 = arith.truncf %69 : vector<8x8xf32> to vector<8x8xbf16>
    %cst_27 = arith.constant dense<0.000000e+00> : vector<8x32xf32>
    %71 = tpu.matmul %70, %54, %cst_27 {dimension_numbers = #tpu.dot_dimension_numbers<[1], [0], [0], [1], [0, 0, 1, 1], [], []>} : vector<8x8xbf16>, vector<8x32xbf16>, vector<8x32xf32> -> vector<8x32xf32>
    %72 = vector.extract_strided_slice %51 {offsets = [0, 32], sizes = [8, 32], strides = [1, 1]} : vector<16x384xbf16> to vector<8x32xbf16>
    %73 = vector.extract_strided_slice %51 {offsets = [0, 160], sizes = [8, 32], strides = [1, 1]} : vector<16x384xbf16> to vector<8x32xbf16>
    %74 = vector.extract_strided_slice %51 {offsets = [0, 288], sizes = [8, 32], strides = [1, 1]} : vector<16x384xbf16> to vector<8x32xbf16>
    %cst_28 = arith.constant dense<0.000000e+00> : vector<8x8xf32>
    %75 = tpu.matmul %72, %73, %cst_28 {dimension_numbers = #tpu.dot_dimension_numbers<[1], [1], [0], [0], [0, 0, 1, 0], [], []>} : vector<8x32xbf16>, vector<8x32xbf16>, vector<8x8xf32> -> vector<8x8xf32>
    %cst_29 = arith.constant 0.176776692 : f32
    %76 = vector.broadcast %cst_29 : f32 to vector<8x8xf32>
    %77 = arith.mulf %75, %76 : vector<8x8xf32>
    %cst_30 = arith.constant -1.000000e+30 : f32
    %78 = vector.broadcast %cst_30 : f32 to vector<8x8xf32>
    %79 = arith.select %15, %77, %78 : vector<8x8xi1>, vector<8x8xf32>
    %cst_31 = arith.constant dense<0xFF800000> : vector<8xf32>
    %80 = vector.multi_reduction <maximumf>, %79, %cst_31 [1] : vector<8x8xf32> to vector<8xf32>
    %81 = vector.shape_cast %80 : vector<8xf32> to vector<8x1xf32>
    %82 = vector.broadcast %81 : vector<8x1xf32> to vector<8x8xf32>
    %83 = arith.subf %79, %82 : vector<8x8xf32>
    %84 = math.exp %83 : vector<8x8xf32>
    %cst_32 = arith.constant dense<0.000000e+00> : vector<8xf32>
    %85 = vector.multi_reduction <add>, %84, %cst_32 [1] : vector<8x8xf32> to vector<8xf32>
    %86 = vector.shape_cast %85 : vector<8xf32> to vector<8x1xf32>
    %87 = tpu.reciprocal %86 {approx = true} : vector<8x1xf32> -> vector<8x1xf32>
    %88 = vector.broadcast %87 : vector<8x1xf32> to vector<8x8xf32>
    %89 = arith.mulf %84, %88 : vector<8x8xf32>
    %90 = arith.truncf %89 : vector<8x8xf32> to vector<8x8xbf16>
    %cst_33 = arith.constant dense<0.000000e+00> : vector<8x32xf32>
    %91 = tpu.matmul %90, %74, %cst_33 {dimension_numbers = #tpu.dot_dimension_numbers<[1], [0], [0], [1], [0, 0, 1, 1], [], []>} : vector<8x8xbf16>, vector<8x32xbf16>, vector<8x32xf32> -> vector<8x32xf32>
    %92 = vector.extract_strided_slice %51 {offsets = [0, 64], sizes = [8, 32], strides = [1, 1]} : vector<16x384xbf16> to vector<8x32xbf16>
    %93 = vector.extract_strided_slice %51 {offsets = [0, 192], sizes = [8, 32], strides = [1, 1]} : vector<16x384xbf16> to vector<8x32xbf16>
    %94 = vector.extract_strided_slice %51 {offsets = [0, 320], sizes = [8, 32], strides = [1, 1]} : vector<16x384xbf16> to vector<8x32xbf16>
    %cst_34 = arith.constant dense<0.000000e+00> : vector<8x8xf32>
    %95 = tpu.matmul %92, %93, %cst_34 {dimension_numbers = #tpu.dot_dimension_numbers<[1], [1], [0], [0], [0, 0, 1, 0], [], []>} : vector<8x32xbf16>, vector<8x32xbf16>, vector<8x8xf32> -> vector<8x8xf32>
    %cst_35 = arith.constant 0.176776692 : f32
    %96 = vector.broadcast %cst_35 : f32 to vector<8x8xf32>
    %97 = arith.mulf %95, %96 : vector<8x8xf32>
    %cst_36 = arith.constant -1.000000e+30 : f32
    %98 = vector.broadcast %cst_36 : f32 to vector<8x8xf32>
    %99 = arith.select %15, %97, %98 : vector<8x8xi1>, vector<8x8xf32>
    %cst_37 = arith.constant dense<0xFF800000> : vector<8xf32>
    %100 = vector.multi_reduction <maximumf>, %99, %cst_37 [1] : vector<8x8xf32> to vector<8xf32>
    %101 = vector.shape_cast %100 : vector<8xf32> to vector<8x1xf32>
    %102 = vector.broadcast %101 : vector<8x1xf32> to vector<8x8xf32>
    %103 = arith.subf %99, %102 : vector<8x8xf32>
    %104 = math.exp %103 : vector<8x8xf32>
    %cst_38 = arith.constant dense<0.000000e+00> : vector<8xf32>
    %105 = vector.multi_reduction <add>, %104, %cst_38 [1] : vector<8x8xf32> to vector<8xf32>
    %106 = vector.shape_cast %105 : vector<8xf32> to vector<8x1xf32>
    %107 = tpu.reciprocal %106 {approx = true} : vector<8x1xf32> -> vector<8x1xf32>
    %108 = vector.broadcast %107 : vector<8x1xf32> to vector<8x8xf32>
    %109 = arith.mulf %104, %108 : vector<8x8xf32>
    %110 = arith.truncf %109 : vector<8x8xf32> to vector<8x8xbf16>
    %cst_39 = arith.constant dense<0.000000e+00> : vector<8x32xf32>
    %111 = tpu.matmul %110, %94, %cst_39 {dimension_numbers = #tpu.dot_dimension_numbers<[1], [0], [0], [1], [0, 0, 1, 1], [], []>} : vector<8x8xbf16>, vector<8x32xbf16>, vector<8x32xf32> -> vector<8x32xf32>
    %112 = vector.extract_strided_slice %51 {offsets = [0, 96], sizes = [8, 32], strides = [1, 1]} : vector<16x384xbf16> to vector<8x32xbf16>
    %113 = vector.extract_strided_slice %51 {offsets = [0, 224], sizes = [8, 32], strides = [1, 1]} : vector<16x384xbf16> to vector<8x32xbf16>
    %114 = vector.extract_strided_slice %51 {offsets = [0, 352], sizes = [8, 32], strides = [1, 1]} : vector<16x384xbf16> to vector<8x32xbf16>
    %cst_40 = arith.constant dense<0.000000e+00> : vector<8x8xf32>
    %115 = tpu.matmul %112, %113, %cst_40 {dimension_numbers = #tpu.dot_dimension_numbers<[1], [1], [0], [0], [0, 0, 1, 0], [], []>} : vector<8x32xbf16>, vector<8x32xbf16>, vector<8x8xf32> -> vector<8x8xf32>
    %cst_41 = arith.constant 0.176776692 : f32
    %116 = vector.broadcast %cst_41 : f32 to vector<8x8xf32>
    %117 = arith.mulf %115, %116 : vector<8x8xf32>
    %cst_42 = arith.constant -1.000000e+30 : f32
    %118 = vector.broadcast %cst_42 : f32 to vector<8x8xf32>
    %119 = arith.select %15, %117, %118 : vector<8x8xi1>, vector<8x8xf32>
    %cst_43 = arith.constant dense<0xFF800000> : vector<8xf32>
    %120 = vector.multi_reduction <maximumf>, %119, %cst_43 [1] : vector<8x8xf32> to vector<8xf32>
    %121 = vector.shape_cast %120 : vector<8xf32> to vector<8x1xf32>
    %122 = vector.broadcast %121 : vector<8x1xf32> to vector<8x8xf32>
    %123 = arith.subf %119, %122 : vector<8x8xf32>
    %124 = math.exp %123 : vector<8x8xf32>
    %cst_44 = arith.constant dense<0.000000e+00> : vector<8xf32>
    %125 = vector.multi_reduction <add>, %124, %cst_44 [1] : vector<8x8xf32> to vector<8xf32>
    %126 = vector.shape_cast %125 : vector<8xf32> to vector<8x1xf32>
    %127 = tpu.reciprocal %126 {approx = true} : vector<8x1xf32> -> vector<8x1xf32>
    %128 = vector.broadcast %127 : vector<8x1xf32> to vector<8x8xf32>
    %129 = arith.mulf %124, %128 : vector<8x8xf32>
    %130 = arith.truncf %129 : vector<8x8xf32> to vector<8x8xbf16>
    %cst_45 = arith.constant dense<0.000000e+00> : vector<8x32xf32>
    %131 = tpu.matmul %130, %114, %cst_45 {dimension_numbers = #tpu.dot_dimension_numbers<[1], [0], [0], [1], [0, 0, 1, 1], [], []>} : vector<8x8xbf16>, vector<8x32xbf16>, vector<8x32xf32> -> vector<8x32xf32>
    %132 = tpu.concatenate %71, %91, %111, %131 in 1 : vector<8x32xf32>, vector<8x32xf32>, vector<8x32xf32>, vector<8x32xf32> -> vector<8x128xf32>
    %133 = vector.extract_strided_slice %51 {offsets = [8, 0], sizes = [8, 32], strides = [1, 1]} : vector<16x384xbf16> to vector<8x32xbf16>
    %134 = vector.extract_strided_slice %51 {offsets = [8, 128], sizes = [8, 32], strides = [1, 1]} : vector<16x384xbf16> to vector<8x32xbf16>
    %135 = vector.extract_strided_slice %51 {offsets = [8, 256], sizes = [8, 32], strides = [1, 1]} : vector<16x384xbf16> to vector<8x32xbf16>
    %cst_46 = arith.constant dense<0.000000e+00> : vector<8x8xf32>
    %136 = tpu.matmul %133, %134, %cst_46 {dimension_numbers = #tpu.dot_dimension_numbers<[1], [1], [0], [0], [0, 0, 1, 0], [], []>} : vector<8x32xbf16>, vector<8x32xbf16>, vector<8x8xf32> -> vector<8x8xf32>
    %cst_47 = arith.constant 0.176776692 : f32
    %137 = vector.broadcast %cst_47 : f32 to vector<8x8xf32>
    %138 = arith.mulf %136, %137 : vector<8x8xf32>
    %cst_48 = arith.constant -1.000000e+30 : f32
    %139 = vector.broadcast %cst_48 : f32 to vector<8x8xf32>
    %140 = arith.select %15, %138, %139 : vector<8x8xi1>, vector<8x8xf32>
    %cst_49 = arith.constant dense<0xFF800000> : vector<8xf32>
    %141 = vector.multi_reduction <maximumf>, %140, %cst_49 [1] : vector<8x8xf32> to vector<8xf32>
    %142 = vector.shape_cast %141 : vector<8xf32> to vector<8x1xf32>
    %143 = vector.broadcast %142 : vector<8x1xf32> to vector<8x8xf32>
    %144 = arith.subf %140, %143 : vector<8x8xf32>
    %145 = math.exp %144 : vector<8x8xf32>
    %cst_50 = arith.constant dense<0.000000e+00> : vector<8xf32>
    %146 = vector.multi_reduction <add>, %145, %cst_50 [1] : vector<8x8xf32> to vector<8xf32>
    %147 = vector.shape_cast %146 : vector<8xf32> to vector<8x1xf32>
    %148 = tpu.reciprocal %147 {approx = true} : vector<8x1xf32> -> vector<8x1xf32>
    %149 = vector.broadcast %148 : vector<8x1xf32> to vector<8x8xf32>
    %150 = arith.mulf %145, %149 : vector<8x8xf32>
    %151 = arith.truncf %150 : vector<8x8xf32> to vector<8x8xbf16>
    %cst_51 = arith.constant dense<0.000000e+00> : vector<8x32xf32>
    %152 = tpu.matmul %151, %135, %cst_51 {dimension_numbers = #tpu.dot_dimension_numbers<[1], [0], [0], [1], [0, 0, 1, 1], [], []>} : vector<8x8xbf16>, vector<8x32xbf16>, vector<8x32xf32> -> vector<8x32xf32>
    %153 = vector.extract_strided_slice %51 {offsets = [8, 32], sizes = [8, 32], strides = [1, 1]} : vector<16x384xbf16> to vector<8x32xbf16>
    %154 = vector.extract_strided_slice %51 {offsets = [8, 160], sizes = [8, 32], strides = [1, 1]} : vector<16x384xbf16> to vector<8x32xbf16>
    %155 = vector.extract_strided_slice %51 {offsets = [8, 288], sizes = [8, 32], strides = [1, 1]} : vector<16x384xbf16> to vector<8x32xbf16>
    %cst_52 = arith.constant dense<0.000000e+00> : vector<8x8xf32>
    %156 = tpu.matmul %153, %154, %cst_52 {dimension_numbers = #tpu.dot_dimension_numbers<[1], [1], [0], [0], [0, 0, 1, 0], [], []>} : vector<8x32xbf16>, vector<8x32xbf16>, vector<8x8xf32> -> vector<8x8xf32>
    %cst_53 = arith.constant 0.176776692 : f32
    %157 = vector.broadcast %cst_53 : f32 to vector<8x8xf32>
    %158 = arith.mulf %156, %157 : vector<8x8xf32>
    %cst_54 = arith.constant -1.000000e+30 : f32
    %159 = vector.broadcast %cst_54 : f32 to vector<8x8xf32>
    %160 = arith.select %15, %158, %159 : vector<8x8xi1>, vector<8x8xf32>
    %cst_55 = arith.constant dense<0xFF800000> : vector<8xf32>
    %161 = vector.multi_reduction <maximumf>, %160, %cst_55 [1] : vector<8x8xf32> to vector<8xf32>
    %162 = vector.shape_cast %161 : vector<8xf32> to vector<8x1xf32>
    %163 = vector.broadcast %162 : vector<8x1xf32> to vector<8x8xf32>
    %164 = arith.subf %160, %163 : vector<8x8xf32>
    %165 = math.exp %164 : vector<8x8xf32>
    %cst_56 = arith.constant dense<0.000000e+00> : vector<8xf32>
    %166 = vector.multi_reduction <add>, %165, %cst_56 [1] : vector<8x8xf32> to vector<8xf32>
    %167 = vector.shape_cast %166 : vector<8xf32> to vector<8x1xf32>
    %168 = tpu.reciprocal %167 {approx = true} : vector<8x1xf32> -> vector<8x1xf32>
    %169 = vector.broadcast %168 : vector<8x1xf32> to vector<8x8xf32>
    %170 = arith.mulf %165, %169 : vector<8x8xf32>
    %171 = arith.truncf %170 : vector<8x8xf32> to vector<8x8xbf16>
    %cst_57 = arith.constant dense<0.000000e+00> : vector<8x32xf32>
    %172 = tpu.matmul %171, %155, %cst_57 {dimension_numbers = #tpu.dot_dimension_numbers<[1], [0], [0], [1], [0, 0, 1, 1], [], []>} : vector<8x8xbf16>, vector<8x32xbf16>, vector<8x32xf32> -> vector<8x32xf32>
    %173 = vector.extract_strided_slice %51 {offsets = [8, 64], sizes = [8, 32], strides = [1, 1]} : vector<16x384xbf16> to vector<8x32xbf16>
    %174 = vector.extract_strided_slice %51 {offsets = [8, 192], sizes = [8, 32], strides = [1, 1]} : vector<16x384xbf16> to vector<8x32xbf16>
    %175 = vector.extract_strided_slice %51 {offsets = [8, 320], sizes = [8, 32], strides = [1, 1]} : vector<16x384xbf16> to vector<8x32xbf16>
    %cst_58 = arith.constant dense<0.000000e+00> : vector<8x8xf32>
    %176 = tpu.matmul %173, %174, %cst_58 {dimension_numbers = #tpu.dot_dimension_numbers<[1], [1], [0], [0], [0, 0, 1, 0], [], []>} : vector<8x32xbf16>, vector<8x32xbf16>, vector<8x8xf32> -> vector<8x8xf32>
    %cst_59 = arith.constant 0.176776692 : f32
    %177 = vector.broadcast %cst_59 : f32 to vector<8x8xf32>
    %178 = arith.mulf %176, %177 : vector<8x8xf32>
    %cst_60 = arith.constant -1.000000e+30 : f32
    %179 = vector.broadcast %cst_60 : f32 to vector<8x8xf32>
    %180 = arith.select %15, %178, %179 : vector<8x8xi1>, vector<8x8xf32>
    %cst_61 = arith.constant dense<0xFF800000> : vector<8xf32>
    %181 = vector.multi_reduction <maximumf>, %180, %cst_61 [1] : vector<8x8xf32> to vector<8xf32>
    %182 = vector.shape_cast %181 : vector<8xf32> to vector<8x1xf32>
    %183 = vector.broadcast %182 : vector<8x1xf32> to vector<8x8xf32>
    %184 = arith.subf %180, %183 : vector<8x8xf32>
    %185 = math.exp %184 : vector<8x8xf32>
    %cst_62 = arith.constant dense<0.000000e+00> : vector<8xf32>
    %186 = vector.multi_reduction <add>, %185, %cst_62 [1] : vector<8x8xf32> to vector<8xf32>
    %187 = vector.shape_cast %186 : vector<8xf32> to vector<8x1xf32>
    %188 = tpu.reciprocal %187 {approx = true} : vector<8x1xf32> -> vector<8x1xf32>
    %189 = vector.broadcast %188 : vector<8x1xf32> to vector<8x8xf32>
    %190 = arith.mulf %185, %189 : vector<8x8xf32>
    %191 = arith.truncf %190 : vector<8x8xf32> to vector<8x8xbf16>
    %cst_63 = arith.constant dense<0.000000e+00> : vector<8x32xf32>
    %192 = tpu.matmul %191, %175, %cst_63 {dimension_numbers = #tpu.dot_dimension_numbers<[1], [0], [0], [1], [0, 0, 1, 1], [], []>} : vector<8x8xbf16>, vector<8x32xbf16>, vector<8x32xf32> -> vector<8x32xf32>
    %193 = vector.extract_strided_slice %51 {offsets = [8, 96], sizes = [8, 32], strides = [1, 1]} : vector<16x384xbf16> to vector<8x32xbf16>
    %194 = vector.extract_strided_slice %51 {offsets = [8, 224], sizes = [8, 32], strides = [1, 1]} : vector<16x384xbf16> to vector<8x32xbf16>
    %195 = vector.extract_strided_slice %51 {offsets = [8, 352], sizes = [8, 32], strides = [1, 1]} : vector<16x384xbf16> to vector<8x32xbf16>
    %cst_64 = arith.constant dense<0.000000e+00> : vector<8x8xf32>
    %196 = tpu.matmul %193, %194, %cst_64 {dimension_numbers = #tpu.dot_dimension_numbers<[1], [1], [0], [0], [0, 0, 1, 0], [], []>} : vector<8x32xbf16>, vector<8x32xbf16>, vector<8x8xf32> -> vector<8x8xf32>
    %cst_65 = arith.constant 0.176776692 : f32
    %197 = vector.broadcast %cst_65 : f32 to vector<8x8xf32>
    %198 = arith.mulf %196, %197 : vector<8x8xf32>
    %cst_66 = arith.constant -1.000000e+30 : f32
    %199 = vector.broadcast %cst_66 : f32 to vector<8x8xf32>
    %200 = arith.select %15, %198, %199 : vector<8x8xi1>, vector<8x8xf32>
    %cst_67 = arith.constant dense<0xFF800000> : vector<8xf32>
    %201 = vector.multi_reduction <maximumf>, %200, %cst_67 [1] : vector<8x8xf32> to vector<8xf32>
    %202 = vector.shape_cast %201 : vector<8xf32> to vector<8x1xf32>
    %203 = vector.broadcast %202 : vector<8x1xf32> to vector<8x8xf32>
    %204 = arith.subf %200, %203 : vector<8x8xf32>
    %205 = math.exp %204 : vector<8x8xf32>
    %cst_68 = arith.constant dense<0.000000e+00> : vector<8xf32>
    %206 = vector.multi_reduction <add>, %205, %cst_68 [1] : vector<8x8xf32> to vector<8xf32>
    %207 = vector.shape_cast %206 : vector<8xf32> to vector<8x1xf32>
    %208 = tpu.reciprocal %207 {approx = true} : vector<8x1xf32> -> vector<8x1xf32>
    %209 = vector.broadcast %208 : vector<8x1xf32> to vector<8x8xf32>
    %210 = arith.mulf %205, %209 : vector<8x8xf32>
    %211 = arith.truncf %210 : vector<8x8xf32> to vector<8x8xbf16>
    %cst_69 = arith.constant dense<0.000000e+00> : vector<8x32xf32>
    %212 = tpu.matmul %211, %195, %cst_69 {dimension_numbers = #tpu.dot_dimension_numbers<[1], [0], [0], [1], [0, 0, 1, 1], [], []>} : vector<8x8xbf16>, vector<8x32xbf16>, vector<8x32xf32> -> vector<8x32xf32>
    %213 = tpu.concatenate %152, %172, %192, %212 in 1 : vector<8x32xf32>, vector<8x32xf32>, vector<8x32xf32>, vector<8x32xf32> -> vector<8x128xf32>
    %214 = tpu.concatenate %132, %213 in 0 : vector<8x128xf32>, vector<8x128xf32> -> vector<16x128xf32>
    %215 = arith.truncf %214 : vector<16x128xf32> to vector<16x128xbf16>
    %c0_70 = arith.constant 0 : index
    %c0_71 = arith.constant 0 : index
    %c0_72 = arith.constant 0 : index
    %216 = vector.load %arg7[%c0_70, %c0_71, %c0_72] : memref<2x128x128xbf16, #tpu.memory_space<vmem>>, vector<1x128x128xbf16>
    %217 = vector.shape_cast %216 : vector<1x128x128xbf16> to vector<128x128xbf16>
    %cst_73 = arith.constant dense<0.000000e+00> : vector<16x128xf32>
    %218 = tpu.matmul %215, %217, %cst_73 {dimension_numbers = #tpu.dot_dimension_numbers<[1], [0], [0], [1], [0, 0, 1, 1], [], []>} : vector<16x128xbf16>, vector<128x128xbf16>, vector<16x128xf32> -> vector<16x128xf32>
    %c0_74 = arith.constant 0 : index
    %c0_75 = arith.constant 0 : index
    %219 = vector.load %arg8[%c0_74, %c0_75] : memref<2x128xf32, #tpu.memory_space<vmem>>, vector<1x128xf32>
    %220 = vector.shape_cast %219 : vector<1x128xf32> to vector<128xf32>
    %221 = vector.shape_cast %220 : vector<128xf32> to vector<1x128xf32>
    %222 = vector.broadcast %221 : vector<1x128xf32> to vector<16x128xf32>
    %223 = arith.addf %218, %222 : vector<16x128xf32>
    %224 = arith.addf %12, %223 : vector<16x128xf32>
    %c1 = arith.constant 1 : index
    %c0_76 = arith.constant 0 : index
    %225 = vector.load %arg3[%c1, %c0_76] : memref<2x128xf32, #tpu.memory_space<vmem>>, vector<1x128xf32>
    %226 = vector.shape_cast %225 : vector<1x128xf32> to vector<128xf32>
    %c1_77 = arith.constant 1 : index
    %c0_78 = arith.constant 0 : index
    %227 = vector.load %arg4[%c1_77, %c0_78] : memref<2x128xf32, #tpu.memory_space<vmem>>, vector<1x128xf32>
    %228 = vector.shape_cast %227 : vector<1x128xf32> to vector<128xf32>
    %cst_79 = arith.constant dense<0.000000e+00> : vector<16xf32>
    %229 = vector.multi_reduction <add>, %224, %cst_79 [1] : vector<16x128xf32> to vector<16xf32>
    %230 = vector.shape_cast %229 : vector<16xf32> to vector<16x1xf32>
    %cst_80 = arith.constant 1.280000e+02 : f32
    %231 = vector.broadcast %cst_80 : f32 to vector<16x1xf32>
    %232 = arith.divf %230, %231 : vector<16x1xf32>
    %233 = vector.broadcast %232 : vector<16x1xf32> to vector<16x128xf32>
    %234 = arith.subf %224, %233 : vector<16x128xf32>
    %235 = arith.mulf %234, %234 : vector<16x128xf32>
    %cst_81 = arith.constant dense<0.000000e+00> : vector<16xf32>
    %236 = vector.multi_reduction <add>, %235, %cst_81 [1] : vector<16x128xf32> to vector<16xf32>
    %237 = vector.shape_cast %236 : vector<16xf32> to vector<16x1xf32>
    %cst_82 = arith.constant 1.280000e+02 : f32
    %238 = vector.broadcast %cst_82 : f32 to vector<16x1xf32>
    %239 = arith.divf %237, %238 : vector<16x1xf32>
    %cst_83 = arith.constant 9.99999974E-6 : f32
    %240 = vector.broadcast %cst_83 : f32 to vector<16x1xf32>
    %241 = arith.addf %239, %240 : vector<16x1xf32>
    %242 = math.rsqrt %241 : vector<16x1xf32>
    %243 = vector.broadcast %242 : vector<16x1xf32> to vector<16x128xf32>
    %244 = arith.mulf %234, %243 : vector<16x128xf32>
    %245 = vector.shape_cast %226 : vector<128xf32> to vector<1x128xf32>
    %246 = vector.broadcast %245 : vector<1x128xf32> to vector<16x128xf32>
    %247 = arith.mulf %244, %246 : vector<16x128xf32>
    %248 = vector.shape_cast %228 : vector<128xf32> to vector<1x128xf32>
    %249 = vector.broadcast %248 : vector<1x128xf32> to vector<16x128xf32>
    %250 = arith.addf %247, %249 : vector<16x128xf32>
    %251 = arith.truncf %250 : vector<16x128xf32> to vector<16x128xbf16>
    %c1_84 = arith.constant 1 : index
    %c0_85 = arith.constant 0 : index
    %c0_86 = arith.constant 0 : index
    %252 = vector.load %arg5[%c1_84, %c0_85, %c0_86] : memref<2x128x384xbf16, #tpu.memory_space<vmem>>, vector<1x128x384xbf16>
    %253 = vector.shape_cast %252 : vector<1x128x384xbf16> to vector<128x384xbf16>
    %cst_87 = arith.constant dense<0.000000e+00> : vector<16x384xf32>
    %254 = tpu.matmul %251, %253, %cst_87 {dimension_numbers = #tpu.dot_dimension_numbers<[1], [0], [0], [1], [0, 0, 1, 1], [], []>} : vector<16x128xbf16>, vector<128x384xbf16>, vector<16x384xf32> -> vector<16x384xf32>
    %c1_88 = arith.constant 1 : index
    %c0_89 = arith.constant 0 : index
    %255 = vector.load %arg6[%c1_88, %c0_89] : memref<2x384xf32, #tpu.memory_space<vmem>>, vector<1x384xf32>
    %256 = vector.shape_cast %255 : vector<1x384xf32> to vector<384xf32>
    %257 = vector.shape_cast %256 : vector<384xf32> to vector<1x384xf32>
    %258 = vector.broadcast %257 : vector<1x384xf32> to vector<16x384xf32>
    %259 = arith.addf %254, %258 : vector<16x384xf32>
    %260 = arith.truncf %259 : vector<16x384xf32> to vector<16x384xbf16>
    %261 = vector.extract_strided_slice %260 {offsets = [0, 0], sizes = [8, 32], strides = [1, 1]} : vector<16x384xbf16> to vector<8x32xbf16>
    %262 = vector.extract_strided_slice %260 {offsets = [0, 128], sizes = [8, 32], strides = [1, 1]} : vector<16x384xbf16> to vector<8x32xbf16>
    %263 = vector.extract_strided_slice %260 {offsets = [0, 256], sizes = [8, 32], strides = [1, 1]} : vector<16x384xbf16> to vector<8x32xbf16>
    %cst_90 = arith.constant dense<0.000000e+00> : vector<8x8xf32>
    %264 = tpu.matmul %261, %262, %cst_90 {dimension_numbers = #tpu.dot_dimension_numbers<[1], [1], [0], [0], [0, 0, 1, 0], [], []>} : vector<8x32xbf16>, vector<8x32xbf16>, vector<8x8xf32> -> vector<8x8xf32>
    %cst_91 = arith.constant 0.176776692 : f32
    %265 = vector.broadcast %cst_91 : f32 to vector<8x8xf32>
    %266 = arith.mulf %264, %265 : vector<8x8xf32>
    %cst_92 = arith.constant -1.000000e+30 : f32
    %267 = vector.broadcast %cst_92 : f32 to vector<8x8xf32>
    %268 = arith.select %15, %266, %267 : vector<8x8xi1>, vector<8x8xf32>
    %cst_93 = arith.constant dense<0xFF800000> : vector<8xf32>
    %269 = vector.multi_reduction <maximumf>, %268, %cst_93 [1] : vector<8x8xf32> to vector<8xf32>
    %270 = vector.shape_cast %269 : vector<8xf32> to vector<8x1xf32>
    %271 = vector.broadcast %270 : vector<8x1xf32> to vector<8x8xf32>
    %272 = arith.subf %268, %271 : vector<8x8xf32>
    %273 = math.exp %272 : vector<8x8xf32>
    %cst_94 = arith.constant dense<0.000000e+00> : vector<8xf32>
    %274 = vector.multi_reduction <add>, %273, %cst_94 [1] : vector<8x8xf32> to vector<8xf32>
    %275 = vector.shape_cast %274 : vector<8xf32> to vector<8x1xf32>
    %276 = tpu.reciprocal %275 {approx = true} : vector<8x1xf32> -> vector<8x1xf32>
    %277 = vector.broadcast %276 : vector<8x1xf32> to vector<8x8xf32>
    %278 = arith.mulf %273, %277 : vector<8x8xf32>
    %279 = arith.truncf %278 : vector<8x8xf32> to vector<8x8xbf16>
    %cst_95 = arith.constant dense<0.000000e+00> : vector<8x32xf32>
    %280 = tpu.matmul %279, %263, %cst_95 {dimension_numbers = #tpu.dot_dimension_numbers<[1], [0], [0], [1], [0, 0, 1, 1], [], []>} : vector<8x8xbf16>, vector<8x32xbf16>, vector<8x32xf32> -> vector<8x32xf32>
    %281 = vector.extract_strided_slice %260 {offsets = [0, 32], sizes = [8, 32], strides = [1, 1]} : vector<16x384xbf16> to vector<8x32xbf16>
    %282 = vector.extract_strided_slice %260 {offsets = [0, 160], sizes = [8, 32], strides = [1, 1]} : vector<16x384xbf16> to vector<8x32xbf16>
    %283 = vector.extract_strided_slice %260 {offsets = [0, 288], sizes = [8, 32], strides = [1, 1]} : vector<16x384xbf16> to vector<8x32xbf16>
    %cst_96 = arith.constant dense<0.000000e+00> : vector<8x8xf32>
    %284 = tpu.matmul %281, %282, %cst_96 {dimension_numbers = #tpu.dot_dimension_numbers<[1], [1], [0], [0], [0, 0, 1, 0], [], []>} : vector<8x32xbf16>, vector<8x32xbf16>, vector<8x8xf32> -> vector<8x8xf32>
    %cst_97 = arith.constant 0.176776692 : f32
    %285 = vector.broadcast %cst_97 : f32 to vector<8x8xf32>
    %286 = arith.mulf %284, %285 : vector<8x8xf32>
    %cst_98 = arith.constant -1.000000e+30 : f32
    %287 = vector.broadcast %cst_98 : f32 to vector<8x8xf32>
    %288 = arith.select %15, %286, %287 : vector<8x8xi1>, vector<8x8xf32>
    %cst_99 = arith.constant dense<0xFF800000> : vector<8xf32>
    %289 = vector.multi_reduction <maximumf>, %288, %cst_99 [1] : vector<8x8xf32> to vector<8xf32>
    %290 = vector.shape_cast %289 : vector<8xf32> to vector<8x1xf32>
    %291 = vector.broadcast %290 : vector<8x1xf32> to vector<8x8xf32>
    %292 = arith.subf %288, %291 : vector<8x8xf32>
    %293 = math.exp %292 : vector<8x8xf32>
    %cst_100 = arith.constant dense<0.000000e+00> : vector<8xf32>
    %294 = vector.multi_reduction <add>, %293, %cst_100 [1] : vector<8x8xf32> to vector<8xf32>
    %295 = vector.shape_cast %294 : vector<8xf32> to vector<8x1xf32>
    %296 = tpu.reciprocal %295 {approx = true} : vector<8x1xf32> -> vector<8x1xf32>
    %297 = vector.broadcast %296 : vector<8x1xf32> to vector<8x8xf32>
    %298 = arith.mulf %293, %297 : vector<8x8xf32>
    %299 = arith.truncf %298 : vector<8x8xf32> to vector<8x8xbf16>
    %cst_101 = arith.constant dense<0.000000e+00> : vector<8x32xf32>
    %300 = tpu.matmul %299, %283, %cst_101 {dimension_numbers = #tpu.dot_dimension_numbers<[1], [0], [0], [1], [0, 0, 1, 1], [], []>} : vector<8x8xbf16>, vector<8x32xbf16>, vector<8x32xf32> -> vector<8x32xf32>
    %301 = vector.extract_strided_slice %260 {offsets = [0, 64], sizes = [8, 32], strides = [1, 1]} : vector<16x384xbf16> to vector<8x32xbf16>
    %302 = vector.extract_strided_slice %260 {offsets = [0, 192], sizes = [8, 32], strides = [1, 1]} : vector<16x384xbf16> to vector<8x32xbf16>
    %303 = vector.extract_strided_slice %260 {offsets = [0, 320], sizes = [8, 32], strides = [1, 1]} : vector<16x384xbf16> to vector<8x32xbf16>
    %cst_102 = arith.constant dense<0.000000e+00> : vector<8x8xf32>
    %304 = tpu.matmul %301, %302, %cst_102 {dimension_numbers = #tpu.dot_dimension_numbers<[1], [1], [0], [0], [0, 0, 1, 0], [], []>} : vector<8x32xbf16>, vector<8x32xbf16>, vector<8x8xf32> -> vector<8x8xf32>
    %cst_103 = arith.constant 0.176776692 : f32
    %305 = vector.broadcast %cst_103 : f32 to vector<8x8xf32>
    %306 = arith.mulf %304, %305 : vector<8x8xf32>
    %cst_104 = arith.constant -1.000000e+30 : f32
    %307 = vector.broadcast %cst_104 : f32 to vector<8x8xf32>
    %308 = arith.select %15, %306, %307 : vector<8x8xi1>, vector<8x8xf32>
    %cst_105 = arith.constant dense<0xFF800000> : vector<8xf32>
    %309 = vector.multi_reduction <maximumf>, %308, %cst_105 [1] : vector<8x8xf32> to vector<8xf32>
    %310 = vector.shape_cast %309 : vector<8xf32> to vector<8x1xf32>
    %311 = vector.broadcast %310 : vector<8x1xf32> to vector<8x8xf32>
    %312 = arith.subf %308, %311 : vector<8x8xf32>
    %313 = math.exp %312 : vector<8x8xf32>
    %cst_106 = arith.constant dense<0.000000e+00> : vector<8xf32>
    %314 = vector.multi_reduction <add>, %313, %cst_106 [1] : vector<8x8xf32> to vector<8xf32>
    %315 = vector.shape_cast %314 : vector<8xf32> to vector<8x1xf32>
    %316 = tpu.reciprocal %315 {approx = true} : vector<8x1xf32> -> vector<8x1xf32>
    %317 = vector.broadcast %316 : vector<8x1xf32> to vector<8x8xf32>
    %318 = arith.mulf %313, %317 : vector<8x8xf32>
    %319 = arith.truncf %318 : vector<8x8xf32> to vector<8x8xbf16>
    %cst_107 = arith.constant dense<0.000000e+00> : vector<8x32xf32>
    %320 = tpu.matmul %319, %303, %cst_107 {dimension_numbers = #tpu.dot_dimension_numbers<[1], [0], [0], [1], [0, 0, 1, 1], [], []>} : vector<8x8xbf16>, vector<8x32xbf16>, vector<8x32xf32> -> vector<8x32xf32>
    %321 = vector.extract_strided_slice %260 {offsets = [0, 96], sizes = [8, 32], strides = [1, 1]} : vector<16x384xbf16> to vector<8x32xbf16>
    %322 = vector.extract_strided_slice %260 {offsets = [0, 224], sizes = [8, 32], strides = [1, 1]} : vector<16x384xbf16> to vector<8x32xbf16>
    %323 = vector.extract_strided_slice %260 {offsets = [0, 352], sizes = [8, 32], strides = [1, 1]} : vector<16x384xbf16> to vector<8x32xbf16>
    %cst_108 = arith.constant dense<0.000000e+00> : vector<8x8xf32>
    %324 = tpu.matmul %321, %322, %cst_108 {dimension_numbers = #tpu.dot_dimension_numbers<[1], [1], [0], [0], [0, 0, 1, 0], [], []>} : vector<8x32xbf16>, vector<8x32xbf16>, vector<8x8xf32> -> vector<8x8xf32>
    %cst_109 = arith.constant 0.176776692 : f32
    %325 = vector.broadcast %cst_109 : f32 to vector<8x8xf32>
    %326 = arith.mulf %324, %325 : vector<8x8xf32>
    %cst_110 = arith.constant -1.000000e+30 : f32
    %327 = vector.broadcast %cst_110 : f32 to vector<8x8xf32>
    %328 = arith.select %15, %326, %327 : vector<8x8xi1>, vector<8x8xf32>
    %cst_111 = arith.constant dense<0xFF800000> : vector<8xf32>
    %329 = vector.multi_reduction <maximumf>, %328, %cst_111 [1] : vector<8x8xf32> to vector<8xf32>
    %330 = vector.shape_cast %329 : vector<8xf32> to vector<8x1xf32>
    %331 = vector.broadcast %330 : vector<8x1xf32> to vector<8x8xf32>
    %332 = arith.subf %328, %331 : vector<8x8xf32>
    %333 = math.exp %332 : vector<8x8xf32>
    %cst_112 = arith.constant dense<0.000000e+00> : vector<8xf32>
    %334 = vector.multi_reduction <add>, %333, %cst_112 [1] : vector<8x8xf32> to vector<8xf32>
    %335 = vector.shape_cast %334 : vector<8xf32> to vector<8x1xf32>
    %336 = tpu.reciprocal %335 {approx = true} : vector<8x1xf32> -> vector<8x1xf32>
    %337 = vector.broadcast %336 : vector<8x1xf32> to vector<8x8xf32>
    %338 = arith.mulf %333, %337 : vector<8x8xf32>
    %339 = arith.truncf %338 : vector<8x8xf32> to vector<8x8xbf16>
    %cst_113 = arith.constant dense<0.000000e+00> : vector<8x32xf32>
    %340 = tpu.matmul %339, %323, %cst_113 {dimension_numbers = #tpu.dot_dimension_numbers<[1], [0], [0], [1], [0, 0, 1, 1], [], []>} : vector<8x8xbf16>, vector<8x32xbf16>, vector<8x32xf32> -> vector<8x32xf32>
    %341 = tpu.concatenate %280, %300, %320, %340 in 1 : vector<8x32xf32>, vector<8x32xf32>, vector<8x32xf32>, vector<8x32xf32> -> vector<8x128xf32>
    %342 = vector.extract_strided_slice %260 {offsets = [8, 0], sizes = [8, 32], strides = [1, 1]} : vector<16x384xbf16> to vector<8x32xbf16>
    %343 = vector.extract_strided_slice %260 {offsets = [8, 128], sizes = [8, 32], strides = [1, 1]} : vector<16x384xbf16> to vector<8x32xbf16>
    %344 = vector.extract_strided_slice %260 {offsets = [8, 256], sizes = [8, 32], strides = [1, 1]} : vector<16x384xbf16> to vector<8x32xbf16>
    %cst_114 = arith.constant dense<0.000000e+00> : vector<8x8xf32>
    %345 = tpu.matmul %342, %343, %cst_114 {dimension_numbers = #tpu.dot_dimension_numbers<[1], [1], [0], [0], [0, 0, 1, 0], [], []>} : vector<8x32xbf16>, vector<8x32xbf16>, vector<8x8xf32> -> vector<8x8xf32>
    %cst_115 = arith.constant 0.176776692 : f32
    %346 = vector.broadcast %cst_115 : f32 to vector<8x8xf32>
    %347 = arith.mulf %345, %346 : vector<8x8xf32>
    %cst_116 = arith.constant -1.000000e+30 : f32
    %348 = vector.broadcast %cst_116 : f32 to vector<8x8xf32>
    %349 = arith.select %15, %347, %348 : vector<8x8xi1>, vector<8x8xf32>
    %cst_117 = arith.constant dense<0xFF800000> : vector<8xf32>
    %350 = vector.multi_reduction <maximumf>, %349, %cst_117 [1] : vector<8x8xf32> to vector<8xf32>
    %351 = vector.shape_cast %350 : vector<8xf32> to vector<8x1xf32>
    %352 = vector.broadcast %351 : vector<8x1xf32> to vector<8x8xf32>
    %353 = arith.subf %349, %352 : vector<8x8xf32>
    %354 = math.exp %353 : vector<8x8xf32>
    %cst_118 = arith.constant dense<0.000000e+00> : vector<8xf32>
    %355 = vector.multi_reduction <add>, %354, %cst_118 [1] : vector<8x8xf32> to vector<8xf32>
    %356 = vector.shape_cast %355 : vector<8xf32> to vector<8x1xf32>
    %357 = tpu.reciprocal %356 {approx = true} : vector<8x1xf32> -> vector<8x1xf32>
    %358 = vector.broadcast %357 : vector<8x1xf32> to vector<8x8xf32>
    %359 = arith.mulf %354, %358 : vector<8x8xf32>
    %360 = arith.truncf %359 : vector<8x8xf32> to vector<8x8xbf16>
    %cst_119 = arith.constant dense<0.000000e+00> : vector<8x32xf32>
    %361 = tpu.matmul %360, %344, %cst_119 {dimension_numbers = #tpu.dot_dimension_numbers<[1], [0], [0], [1], [0, 0, 1, 1], [], []>} : vector<8x8xbf16>, vector<8x32xbf16>, vector<8x32xf32> -> vector<8x32xf32>
    %362 = vector.extract_strided_slice %260 {offsets = [8, 32], sizes = [8, 32], strides = [1, 1]} : vector<16x384xbf16> to vector<8x32xbf16>
    %363 = vector.extract_strided_slice %260 {offsets = [8, 160], sizes = [8, 32], strides = [1, 1]} : vector<16x384xbf16> to vector<8x32xbf16>
    %364 = vector.extract_strided_slice %260 {offsets = [8, 288], sizes = [8, 32], strides = [1, 1]} : vector<16x384xbf16> to vector<8x32xbf16>
    %cst_120 = arith.constant dense<0.000000e+00> : vector<8x8xf32>
    %365 = tpu.matmul %362, %363, %cst_120 {dimension_numbers = #tpu.dot_dimension_numbers<[1], [1], [0], [0], [0, 0, 1, 0], [], []>} : vector<8x32xbf16>, vector<8x32xbf16>, vector<8x8xf32> -> vector<8x8xf32>
    %cst_121 = arith.constant 0.176776692 : f32
    %366 = vector.broadcast %cst_121 : f32 to vector<8x8xf32>
    %367 = arith.mulf %365, %366 : vector<8x8xf32>
    %cst_122 = arith.constant -1.000000e+30 : f32
    %368 = vector.broadcast %cst_122 : f32 to vector<8x8xf32>
    %369 = arith.select %15, %367, %368 : vector<8x8xi1>, vector<8x8xf32>
    %cst_123 = arith.constant dense<0xFF800000> : vector<8xf32>
    %370 = vector.multi_reduction <maximumf>, %369, %cst_123 [1] : vector<8x8xf32> to vector<8xf32>
    %371 = vector.shape_cast %370 : vector<8xf32> to vector<8x1xf32>
    %372 = vector.broadcast %371 : vector<8x1xf32> to vector<8x8xf32>
    %373 = arith.subf %369, %372 : vector<8x8xf32>
    %374 = math.exp %373 : vector<8x8xf32>
    %cst_124 = arith.constant dense<0.000000e+00> : vector<8xf32>
    %375 = vector.multi_reduction <add>, %374, %cst_124 [1] : vector<8x8xf32> to vector<8xf32>
    %376 = vector.shape_cast %375 : vector<8xf32> to vector<8x1xf32>
    %377 = tpu.reciprocal %376 {approx = true} : vector<8x1xf32> -> vector<8x1xf32>
    %378 = vector.broadcast %377 : vector<8x1xf32> to vector<8x8xf32>
    %379 = arith.mulf %374, %378 : vector<8x8xf32>
    %380 = arith.truncf %379 : vector<8x8xf32> to vector<8x8xbf16>
    %cst_125 = arith.constant dense<0.000000e+00> : vector<8x32xf32>
    %381 = tpu.matmul %380, %364, %cst_125 {dimension_numbers = #tpu.dot_dimension_numbers<[1], [0], [0], [1], [0, 0, 1, 1], [], []>} : vector<8x8xbf16>, vector<8x32xbf16>, vector<8x32xf32> -> vector<8x32xf32>
    %382 = vector.extract_strided_slice %260 {offsets = [8, 64], sizes = [8, 32], strides = [1, 1]} : vector<16x384xbf16> to vector<8x32xbf16>
    %383 = vector.extract_strided_slice %260 {offsets = [8, 192], sizes = [8, 32], strides = [1, 1]} : vector<16x384xbf16> to vector<8x32xbf16>
    %384 = vector.extract_strided_slice %260 {offsets = [8, 320], sizes = [8, 32], strides = [1, 1]} : vector<16x384xbf16> to vector<8x32xbf16>
    %cst_126 = arith.constant dense<0.000000e+00> : vector<8x8xf32>
    %385 = tpu.matmul %382, %383, %cst_126 {dimension_numbers = #tpu.dot_dimension_numbers<[1], [1], [0], [0], [0, 0, 1, 0], [], []>} : vector<8x32xbf16>, vector<8x32xbf16>, vector<8x8xf32> -> vector<8x8xf32>
    %cst_127 = arith.constant 0.176776692 : f32
    %386 = vector.broadcast %cst_127 : f32 to vector<8x8xf32>
    %387 = arith.mulf %385, %386 : vector<8x8xf32>
    %cst_128 = arith.constant -1.000000e+30 : f32
    %388 = vector.broadcast %cst_128 : f32 to vector<8x8xf32>
    %389 = arith.select %15, %387, %388 : vector<8x8xi1>, vector<8x8xf32>
    %cst_129 = arith.constant dense<0xFF800000> : vector<8xf32>
    %390 = vector.multi_reduction <maximumf>, %389, %cst_129 [1] : vector<8x8xf32> to vector<8xf32>
    %391 = vector.shape_cast %390 : vector<8xf32> to vector<8x1xf32>
    %392 = vector.broadcast %391 : vector<8x1xf32> to vector<8x8xf32>
    %393 = arith.subf %389, %392 : vector<8x8xf32>
    %394 = math.exp %393 : vector<8x8xf32>
    %cst_130 = arith.constant dense<0.000000e+00> : vector<8xf32>
    %395 = vector.multi_reduction <add>, %394, %cst_130 [1] : vector<8x8xf32> to vector<8xf32>
    %396 = vector.shape_cast %395 : vector<8xf32> to vector<8x1xf32>
    %397 = tpu.reciprocal %396 {approx = true} : vector<8x1xf32> -> vector<8x1xf32>
    %398 = vector.broadcast %397 : vector<8x1xf32> to vector<8x8xf32>
    %399 = arith.mulf %394, %398 : vector<8x8xf32>
    %400 = arith.truncf %399 : vector<8x8xf32> to vector<8x8xbf16>
    %cst_131 = arith.constant dense<0.000000e+00> : vector<8x32xf32>
    %401 = tpu.matmul %400, %384, %cst_131 {dimension_numbers = #tpu.dot_dimension_numbers<[1], [0], [0], [1], [0, 0, 1, 1], [], []>} : vector<8x8xbf16>, vector<8x32xbf16>, vector<8x32xf32> -> vector<8x32xf32>
    %402 = vector.extract_strided_slice %260 {offsets = [8, 96], sizes = [8, 32], strides = [1, 1]} : vector<16x384xbf16> to vector<8x32xbf16>
    %403 = vector.extract_strided_slice %260 {offsets = [8, 224], sizes = [8, 32], strides = [1, 1]} : vector<16x384xbf16> to vector<8x32xbf16>
    %404 = vector.extract_strided_slice %260 {offsets = [8, 352], sizes = [8, 32], strides = [1, 1]} : vector<16x384xbf16> to vector<8x32xbf16>
    %cst_132 = arith.constant dense<0.000000e+00> : vector<8x8xf32>
    %405 = tpu.matmul %402, %403, %cst_132 {dimension_numbers = #tpu.dot_dimension_numbers<[1], [1], [0], [0], [0, 0, 1, 0], [], []>} : vector<8x32xbf16>, vector<8x32xbf16>, vector<8x8xf32> -> vector<8x8xf32>
    %cst_133 = arith.constant 0.176776692 : f32
    %406 = vector.broadcast %cst_133 : f32 to vector<8x8xf32>
    %407 = arith.mulf %405, %406 : vector<8x8xf32>
    %cst_134 = arith.constant -1.000000e+30 : f32
    %408 = vector.broadcast %cst_134 : f32 to vector<8x8xf32>
    %409 = arith.select %15, %407, %408 : vector<8x8xi1>, vector<8x8xf32>
    %cst_135 = arith.constant dense<0xFF800000> : vector<8xf32>
    %410 = vector.multi_reduction <maximumf>, %409, %cst_135 [1] : vector<8x8xf32> to vector<8xf32>
    %411 = vector.shape_cast %410 : vector<8xf32> to vector<8x1xf32>
    %412 = vector.broadcast %411 : vector<8x1xf32> to vector<8x8xf32>
    %413 = arith.subf %409, %412 : vector<8x8xf32>
    %414 = math.exp %413 : vector<8x8xf32>
    %cst_136 = arith.constant dense<0.000000e+00> : vector<8xf32>
    %415 = vector.multi_reduction <add>, %414, %cst_136 [1] : vector<8x8xf32> to vector<8xf32>
    %416 = vector.shape_cast %415 : vector<8xf32> to vector<8x1xf32>
    %417 = tpu.reciprocal %416 {approx = true} : vector<8x1xf32> -> vector<8x1xf32>
    %418 = vector.broadcast %417 : vector<8x1xf32> to vector<8x8xf32>
    %419 = arith.mulf %414, %418 : vector<8x8xf32>
    %420 = arith.truncf %419 : vector<8x8xf32> to vector<8x8xbf16>
    %cst_137 = arith.constant dense<0.000000e+00> : vector<8x32xf32>
    %421 = tpu.matmul %420, %404, %cst_137 {dimension_numbers = #tpu.dot_dimension_numbers<[1], [0], [0], [1], [0, 0, 1, 1], [], []>} : vector<8x8xbf16>, vector<8x32xbf16>, vector<8x32xf32> -> vector<8x32xf32>
    %422 = tpu.concatenate %361, %381, %401, %421 in 1 : vector<8x32xf32>, vector<8x32xf32>, vector<8x32xf32>, vector<8x32xf32> -> vector<8x128xf32>
    %423 = tpu.concatenate %341, %422 in 0 : vector<8x128xf32>, vector<8x128xf32> -> vector<16x128xf32>
    %424 = arith.truncf %423 : vector<16x128xf32> to vector<16x128xbf16>
    %c1_138 = arith.constant 1 : index
    %c0_139 = arith.constant 0 : index
    %c0_140 = arith.constant 0 : index
    %425 = vector.load %arg7[%c1_138, %c0_139, %c0_140] : memref<2x128x128xbf16, #tpu.memory_space<vmem>>, vector<1x128x128xbf16>
    %426 = vector.shape_cast %425 : vector<1x128x128xbf16> to vector<128x128xbf16>
    %cst_141 = arith.constant dense<0.000000e+00> : vector<16x128xf32>
    %427 = tpu.matmul %424, %426, %cst_141 {dimension_numbers = #tpu.dot_dimension_numbers<[1], [0], [0], [1], [0, 0, 1, 1], [], []>} : vector<16x128xbf16>, vector<128x128xbf16>, vector<16x128xf32> -> vector<16x128xf32>
    %c1_142 = arith.constant 1 : index
    %c0_143 = arith.constant 0 : index
    %428 = vector.load %arg8[%c1_142, %c0_143] : memref<2x128xf32, #tpu.memory_space<vmem>>, vector<1x128xf32>
    %429 = vector.shape_cast %428 : vector<1x128xf32> to vector<128xf32>
    %430 = vector.shape_cast %429 : vector<128xf32> to vector<1x128xf32>
    %431 = vector.broadcast %430 : vector<1x128xf32> to vector<16x128xf32>
    %432 = arith.addf %427, %431 : vector<16x128xf32>
    %433 = arith.addf %224, %432 : vector<16x128xf32>
    %434 = vector.extract_strided_slice %433 {offsets = [7, 0], sizes = [1, 128], strides = [1, 1]} : vector<16x128xf32> to vector<1x128xf32>
    %435 = vector.extract_strided_slice %433 {offsets = [15, 0], sizes = [1, 128], strides = [1, 1]} : vector<16x128xf32> to vector<1x128xf32>
    %436 = tpu.concatenate %434, %435 in 0 : vector<1x128xf32>, vector<1x128xf32> -> vector<2x128xf32>
    %c0_144 = arith.constant 0 : index
    %c0_145 = arith.constant 0 : index
    %437 = vector.load %arg9[%c0_144, %c0_145] : memref<1x128xf32, #tpu.memory_space<vmem>>, vector<1x128xf32>
    %438 = vector.shape_cast %437 : vector<1x128xf32> to vector<128xf32>
    %c0_146 = arith.constant 0 : index
    %c0_147 = arith.constant 0 : index
    %439 = vector.load %arg10[%c0_146, %c0_147] : memref<1x128xf32, #tpu.memory_space<vmem>>, vector<1x128xf32>
    %440 = vector.shape_cast %439 : vector<1x128xf32> to vector<128xf32>
    %cst_148 = arith.constant dense<0.000000e+00> : vector<2xf32>
    %441 = vector.multi_reduction <add>, %436, %cst_148 [1] : vector<2x128xf32> to vector<2xf32>
    %442 = vector.shape_cast %441 : vector<2xf32> to vector<2x1xf32>
    %cst_149 = arith.constant 1.280000e+02 : f32
    %443 = vector.broadcast %cst_149 : f32 to vector<2x1xf32>
    %444 = arith.divf %442, %443 : vector<2x1xf32>
    %445 = vector.broadcast %444 : vector<2x1xf32> to vector<2x128xf32>
    %446 = arith.subf %436, %445 : vector<2x128xf32>
    %447 = arith.mulf %446, %446 : vector<2x128xf32>
    %cst_150 = arith.constant dense<0.000000e+00> : vector<2xf32>
    %448 = vector.multi_reduction <add>, %447, %cst_150 [1] : vector<2x128xf32> to vector<2xf32>
    %449 = vector.shape_cast %448 : vector<2xf32> to vector<2x1xf32>
    %cst_151 = arith.constant 1.280000e+02 : f32
    %450 = vector.broadcast %cst_151 : f32 to vector<2x1xf32>
    %451 = arith.divf %449, %450 : vector<2x1xf32>
    %cst_152 = arith.constant 9.99999974E-6 : f32
    %452 = vector.broadcast %cst_152 : f32 to vector<2x1xf32>
    %453 = arith.addf %451, %452 : vector<2x1xf32>
    %454 = math.rsqrt %453 : vector<2x1xf32>
    %455 = vector.broadcast %454 : vector<2x1xf32> to vector<2x128xf32>
    %456 = arith.mulf %446, %455 : vector<2x128xf32>
    %457 = vector.shape_cast %438 : vector<128xf32> to vector<1x128xf32>
    %458 = vector.broadcast %457 : vector<1x128xf32> to vector<2x128xf32>
    %459 = arith.mulf %456, %458 : vector<2x128xf32>
    %460 = vector.shape_cast %440 : vector<128xf32> to vector<1x128xf32>
    %461 = vector.broadcast %460 : vector<1x128xf32> to vector<2x128xf32>
    %462 = arith.addf %459, %461 : vector<2x128xf32>
    %463 = arith.truncf %462 : vector<2x128xf32> to vector<2x128xbf16>
    %c0_153 = arith.constant 0 : index
    %c0_154 = arith.constant 0 : index
    %464 = vector.load %arg1[%c0_153, %c0_154] : memref<512x128xbf16, #tpu.memory_space<vmem>>, vector<512x128xbf16>
    %cst_155 = arith.constant dense<0.000000e+00> : vector<2x512xf32>
    %465 = tpu.matmul %463, %464, %cst_155 {dimension_numbers = #tpu.dot_dimension_numbers<[1], [1], [0], [0], [0, 0, 1, 0], [], []>} : vector<2x128xbf16>, vector<512x128xbf16>, vector<2x512xf32> -> vector<2x512xf32>
    %c0_156 = arith.constant 0 : index
    %c0_157 = arith.constant 0 : index
    %466 = vector.load %arg11[%c0_156, %c0_157] : memref<2x512xf32, #tpu.memory_space<vmem>>, vector<2x512xf32>
    tpu.vector_store %arg11[%c0_156, %c0_157], %465 {strides = array<i32>} : memref<2x512xf32, #tpu.memory_space<vmem>>, vector<2x512xf32>,
    return
  }
}

</mosaic_0001>

<llo_original>
// kernel: gpt_forward.1
$region0: #{gpt_forward.1}
  #allocation0 [shape = 'u32[]', space=smem, size = 0x4, offset = 0x4, fixed_abs, tag = 'smem constant byte address 0x4 - core index']
  #allocation1 [shape = 'u32[144,128]{1,0:T(1,128)}', space=vmem, size = 0x12000, scoped, tag = 'internal scratch']
  %s0 = inlined_call_operand.vmem [shape: s32[16,1], index: 0, kind: input, shape index: {}]
  %s1 = inlined_call_operand.hbm [shape: bf16[512,128], index: 1, kind: input, shape index: {}]
  %s2 = inlined_call_operand.vmem [shape: f32[8,128], index: 2, kind: input, shape index: {}]
  %s3 = inlined_call_operand.vmem [shape: f32[2,128], index: 3, kind: input, shape index: {}]
  %s4 = inlined_call_operand.vmem [shape: f32[2,128], index: 4, kind: input, shape index: {}]
  %s5 = inlined_call_operand.hbm [shape: bf16[2,128,384], index: 5, kind: input, shape index: {}]
  %s6 = inlined_call_operand.vmem [shape: f32[2,384], index: 6, kind: input, shape index: {}]
  %s7 = inlined_call_operand.hbm [shape: bf16[2,128,128], index: 7, kind: input, shape index: {}]
  %s8 = inlined_call_operand.vmem [shape: f32[2,128], index: 8, kind: input, shape index: {}]
  %s9 = inlined_call_operand.vmem [shape: f32[1,128], index: 9, kind: input, shape index: {}]
  %s10 = inlined_call_operand.vmem [shape: f32[1,128], index: 10, kind: input, shape index: {}]
  %s11 = inlined_call_operand.vmem [shape: f32[2,512], index: 11, kind: output, shape index: {}]
  %s12 = sld [smem:[#allocation0]]
  $region66: #{gpt_forward.1} parent=0
    _
  %s14 = ssub.s32 1, %s12
  %s15 = scalar_select 0, %s14, %s12
  $region1: #{gpt_forward.1} parent=0
    #allocation2 [shape = 'u8[131072]{0}', space=vmem, size = 0x20000, scoped, tag = 'input window, operand 1, single buffered']
    #allocation3 [shape = 's32[1]{0}', space=sflag, size = 0x4, scoped, tag = 'scoped memory for gpt_forward.1']
    #allocation4 [shape = 'u8[196608]{0}', space=vmem, size = 0x30000, scoped, tag = 'input window, operand 5, single buffered']
    #allocation5 [shape = 's32[1]{0}', space=sflag, size = 0x4, scoped, tag = 'scoped memory for gpt_forward.1']
    #allocation6 [shape = 'u8[65536]{0}', space=vmem, size = 0x10000, scoped, tag = 'input window, operand 7, single buffered']
    %16 = vsyncpa [#allocation3], 0
    %17 = vsyncpa [#allocation5], 0
    // Predicated region
    $region2: #{gpt_forward.1} parent=1 // pred_check
      _
    $region3: #{gpt_forward.1} parent=1 // pred_check_branch
      %19 = sbr.rel (0) target = $region5
    $region4: #{gpt_forward.1} parent=1 // pred_region
      _
    $region5: #{gpt_forward.1} parent=1 // pred_fallthru
      _
    // Predicated region
    $region6: #{gpt_forward.1} parent=1 // pred_check
      _
    $region7: #{gpt_forward.1} parent=1 // pred_check_branch
      %21 = sbr.rel (0) target = $region9
    $region8: #{gpt_forward.1} parent=1 // pred_region
      %s23 = ssub.s32 4096, 4096
      %24 = vsyncadd [#allocation3], %s23
      %s25 = sshll.u32 [#allocation2], 4
      %s26 = int_to_ptr.vmem [resolvable:$true] %s25
      %31 = dma.hbm_to_vmem [thread:$0]  %s1, 4096, %s26, [#allocation3], 64, 64, 4
    $region9: #{gpt_forward.1} parent=1 // pred_fallthru
      _
    // Predicated region
    $region10: #{gpt_forward.1} parent=1 // pred_check
      _
    $region11: #{gpt_forward.1} parent=1 // pred_check_branch
      %33 = sbr.rel (0) target = $region13
    $region12: #{gpt_forward.1} parent=1 // pred_region
      _
    $region13: #{gpt_forward.1} parent=1 // pred_fallthru
      _
    // Predicated region
    $region14: #{gpt_forward.1} parent=1 // pred_check
      _
    $region15: #{gpt_forward.1} parent=1 // pred_check_branch
      %35 = sbr.rel (0) target = $region17
    $region16: #{gpt_forward.1} parent=1 // pred_region
      _
    $region17: #{gpt_forward.1} parent=1 // pred_fallthru
      _
    // Predicated region
    $region18: #{gpt_forward.1} parent=1 // pred_check
      _
    $region19: #{gpt_forward.1} parent=1 // pred_check_branch
      %37 = sbr.rel (0) target = $region21
    $region20: #{gpt_forward.1} parent=1 // pred_region
      _
    $region21: #{gpt_forward.1} parent=1 // pred_fallthru
      _
    // Predicated region
    $region22: #{gpt_forward.1} parent=1 // pred_check
      _
    $region23: #{gpt_forward.1} parent=1 // pred_check_branch
      %39 = sbr.rel (0) target = $region25
    $region24: #{gpt_forward.1} parent=1 // pred_region
      %s41 = ssub.s32 6144, 6144
      %42 = vsyncadd [#allocation5], %s41
      %s43 = sshll.u32 [#allocation4], 4
      %s44 = int_to_ptr.vmem [resolvable:$true] %s43
      %49 = dma.hbm_to_vmem [thread:$0]  %s5, 6144, %s44, [#allocation5], 192, 192, 12
    $region25: #{gpt_forward.1} parent=1 // pred_fallthru
      _
    // Predicated region
    $region26: #{gpt_forward.1} parent=1 // pred_check
      _
    $region27: #{gpt_forward.1} parent=1 // pred_check_branch
      %51 = sbr.rel (0) target = $region29
    $region28: #{gpt_forward.1} parent=1 // pred_region
      _
    $region29: #{gpt_forward.1} parent=1 // pred_fallthru
      _
    // Predicated region
    $region30: #{gpt_forward.1} parent=1 // pred_check
      _
    $region31: #{gpt_forward.1} parent=1 // pred_check_branch
      %53 = sbr.rel (0) target = $region33
    $region32: #{gpt_forward.1} parent=1 // pred_region
      %s55 = ssub.s32 2048, 2048
      %56 = vsyncadd [#allocation5], %s55
      %s57 = sshll.u32 [#allocation6], 4
      %s58 = int_to_ptr.vmem [resolvable:$true] %s57
      %63 = dma.hbm_to_vmem [thread:$0]  %s7, 2048, %s58, [#allocation5], 64, 64, 4
    $region33: #{gpt_forward.1} parent=1 // pred_fallthru
      _
    // Predicated region
    $region34: #{gpt_forward.1} parent=1 // pred_check
      _
    $region35: #{gpt_forward.1} parent=1 // pred_check_branch
      %65 = sbr.rel (0) target = $region37
    $region36: #{gpt_forward.1} parent=1 // pred_region
      _
    $region37: #{gpt_forward.1} parent=1 // pred_fallthru
      _
    // Predicated region
    $region38: #{gpt_forward.1} parent=1 // pred_check
      _
    $region39: #{gpt_forward.1} parent=1 // pred_check_branch
      %67 = sbr.rel (0) target = $region41
    $region40: #{gpt_forward.1} parent=1 // pred_region
      _
    $region41: #{gpt_forward.1} parent=1 // pred_fallthru
      _
    // Predicated region
    $region42: #{gpt_forward.1} parent=1 // pred_check
      _
    $region43: #{gpt_forward.1} parent=1 // pred_check_branch
      %69 = sbr.rel (0) target = $region45
    $region44: #{gpt_forward.1} parent=1 // pred_region
      _
    $region45: #{gpt_forward.1} parent=1 // pred_fallthru
      _
    // Predicated region
    $region46: #{gpt_forward.1} parent=1 // pred_check
      _
    $region47: #{gpt_forward.1} parent=1 // pred_check_branch
      %71 = sbr.rel (0) target = $region49
    $region48: #{gpt_forward.1} parent=1 // pred_region
      %72 = dma.done [#allocation3], 4096
    $region49: #{gpt_forward.1} parent=1 // pred_fallthru
      _
    // Predicated region
    $region50: #{gpt_forward.1} parent=1 // pred_check
      _
    $region51: #{gpt_forward.1} parent=1 // pred_check_branch
      %74 = sbr.rel (0) target = $region53
    $region52: #{gpt_forward.1} parent=1 // pred_region
      %75 = dma.done [#allocation5], 6144
    $region53: #{gpt_forward.1} parent=1 // pred_fallthru
      _
    // Predicated region
    $region54: #{gpt_forward.1} parent=1 // pred_check
      _
    $region55: #{gpt_forward.1} parent=1 // pred_check_branch
      %77 = sbr.rel (0) target = $region57
    $region56: #{gpt_forward.1} parent=1 // pred_region
      %78 = dma.done [#allocation5], 2048
    $region57: #{gpt_forward.1} parent=1 // pred_fallthru
      _
    %v80 = vlaneseq
    %v81 = vand.u32 %v80, 127
    %v82 = vadd.s32 %v81, 128
    %v83 = vadd.s32 %v81, 256
    %v84 = vadd.s32 %v81, 384
    %v85 = vld [vmem:[%s0] sm:$0xff]
    %v86 = vld [vmem:[%s0 + $0x8] sm:$0xff]
    %87 = vset.pattern.permute.xlu0 0
    %88 = vperm.xlu0 %87, %v85
    %v89 = vpop.permute.xlu0 %88
    %90 = vset.pattern.permute.xlu0 0
    %91 = vperm.xlu0 %90, %v86
    %v92 = vpop.permute.xlu0 %91
    %vm93 = vcmp.eq.s32.totalorder %v81, %v89
    %vm94 = vcmp.eq.s32.totalorder %v82, %v89
    %vm95 = vcmp.eq.s32.totalorder %v83, %v89
    %vm96 = vcmp.eq.s32.totalorder %v84, %v89
    %vm97 = vcmp.eq.s32.totalorder %v81, %v92
    %vm98 = vcmp.eq.s32.totalorder %v82, %v92
    %vm99 = vcmp.eq.s32.totalorder %v83, %v92
    %vm100 = vcmp.eq.s32.totalorder %v84, %v92
    %v101 = vsel %vm93, 1.0, 0.0
    %v102 = vsel %vm94, 1.0, 0.0
    %v103 = vsel %vm95, 1.0, 0.0
    %v104 = vsel %vm96, 1.0, 0.0
    %v105 = vsel %vm97, 1.0, 0.0
    %v106 = vsel %vm98, 1.0, 0.0
    %v107 = vsel %vm99, 1.0, 0.0
    %v108 = vsel %vm100, 1.0, 0.0
    %v109 = vpack.c.bf16 %v105, %v101
    %v110 = vpack.c.bf16 %v106, %v102
    %v111 = vpack.c.bf16 %v107, %v103
    %v112 = vpack.c.bf16 %v108, %v104
    %v113 = vld [vmem:[#allocation2] sm:$0xf]
    %v114 = vld [vmem:[#allocation2 + $0x4] sm:$0xf]
    %v115 = vld [vmem:[#allocation2 + $0x8] sm:$0xf]
    %v116 = vld [vmem:[#allocation2 + $0xc] sm:$0xf]
    %v117 = vld [vmem:[#allocation2 + $0x10] sm:$0xf]
    %v118 = vld [vmem:[#allocation2 + $0x14] sm:$0xf]
    %v119 = vld [vmem:[#allocation2 + $0x18] sm:$0xf]
    %v120 = vld [vmem:[#allocation2 + $0x1c] sm:$0xf]
    %v121 = vld [vmem:[#allocation2 + $0x20] sm:$0xf]
    %v122 = vld [vmem:[#allocation2 + $0x24] sm:$0xf]
    %v123 = vld [vmem:[#allocation2 + $0x28] sm:$0xf]
    %v124 = vld [vmem:[#allocation2 + $0x2c] sm:$0xf]
    %v125 = vld [vmem:[#allocation2 + $0x30] sm:$0xf]
    %v126 = vld [vmem:[#allocation2 + $0x34] sm:$0xf]
    %v127 = vld [vmem:[#allocation2 + $0x38] sm:$0xf]
    %v128 = vld [vmem:[#allocation2 + $0x3c] sm:$0xf]
    %v129 = vld [vmem:[#allocation2 + $0x40] sm:$0xf]
    %v130 = vld [vmem:[#allocation2 + $0x44] sm:$0xf]
    %v131 = vld [vmem:[#allocation2 + $0x48] sm:$0xf]
    %v132 = vld [vmem:[#allocation2 + $0x4c] sm:$0xf]
    %v133 = vld [vmem:[#allocation2 + $0x50] sm:$0xf]
    %v134 = vld [vmem:[#allocation2 + $0x54] sm:$0xf]
    %v135 = vld [vmem:[#allocation2 + $0x58] sm:$0xf]
    %v136 = vld [vmem:[#allocation2 + $0x5c] sm:$0xf]
    %v137 = vld [vmem:[#allocation2 + $0x60] sm:$0xf]
    %v138 = vld [vmem:[#allocation2 + $0x64] sm:$0xf]
    %v139 = vld [vmem:[#allocation2 + $0x68] sm:$0xf]
    %v140 = vld [vmem:[#allocation2 + $0x6c] sm:$0xf]
    %v141 = vld [vmem:[#allocation2 + $0x70] sm:$0xf]
    %v142 = vld [vmem:[#allocation2 + $0x74] sm:$0xf]
    %v143 = vld [vmem:[#allocation2 + $0x78] sm:$0xf]
    %v144 = vld [vmem:[#allocation2 + $0x7c] sm:$0xf]
    %v145 = vld [vmem:[#allocation2 + $0x80] sm:$0xf]
    %v146 = vld [vmem:[#allocation2 + $0x84] sm:$0xf]
    %v147 = vld [vmem:[#allocation2 + $0x88] sm:$0xf]
    %v148 = vld [vmem:[#allocation2 + $0x8c] sm:$0xf]
    %v149 = vld [vmem:[#allocation2 + $0x90] sm:$0xf]
    %v150 = vld [vmem:[#allocation2 + $0x94] sm:$0xf]
    %v151 = vld [vmem:[#allocation2 + $0x98] sm:$0xf]
    %v152 = vld [vmem:[#allocation2 + $0x9c] sm:$0xf]
    %v153 = vld [vmem:[#allocation2 + $0xa0] sm:$0xf]
    %v154 = vld [vmem:[#allocation2 + $0xa4] sm:$0xf]
    %v155 = vld [vmem:[#allocation2 + $0xa8] sm:$0xf]
    %v156 = vld [vmem:[#allocation2 + $0xac] sm:$0xf]
    %v157 = vld [vmem:[#allocation2 + $0xb0] sm:$0xf]
    %v158 = vld [vmem:[#allocation2 + $0xb4] sm:$0xf]
    %v159 = vld [vmem:[#allocation2 + $0xb8] sm:$0xf]
    %v160 = vld [vmem:[#allocation2 + $0xbc] sm:$0xf]
    %v161 = vld [vmem:[#allocation2 + $0xc0] sm:$0xf]
    %v162 = vld [vmem:[#allocation2 + $0xc4] sm:$0xf]
    %v163 = vld [vmem:[#allocation2 + $0xc8] sm:$0xf]
    %v164 = vld [vmem:[#allocation2 + $0xcc] sm:$0xf]
    %v165 = vld [vmem:[#allocation2 + $0xd0] sm:$0xf]
    %v166 = vld [vmem:[#allocation2 + $0xd4] sm:$0xf]
    %v167 = vld [vmem:[#allocation2 + $0xd8] sm:$0xf]
    %v168 = vld [vmem:[#allocation2 + $0xdc] sm:$0xf]
    %v169 = vld [vmem:[#allocation2 + $0xe0] sm:$0xf]
    %v170 = vld [vmem:[#allocation2 + $0xe4] sm:$0xf]
    %v171 = vld [vmem:[#allocation2 + $0xe8] sm:$0xf]
    %v172 = vld [vmem:[#allocation2 + $0xec] sm:$0xf]
    %v173 = vld [vmem:[#allocation2 + $0xf0] sm:$0xf]
    %v174 = vld [vmem:[#allocation2 + $0xf4] sm:$0xf]
    %v175 = vld [vmem:[#allocation2 + $0xf8] sm:$0xf]
    %v176 = vld [vmem:[#allocation2 + $0xfc] sm:$0xf]
    %v177 = vld [vmem:[%s2] sm:$0xff]
    %v242 = vunpack.c.l.b16 %v113
    %v243 = vunpack.c.l.b16 %v114
    %v244 = vunpack.c.l.b16 %v115
    %v245 = vunpack.c.l.b16 %v116
    %v246 = vunpack.c.l.b16 %v117
    %v247 = vunpack.c.l.b16 %v118
    %v248 = vunpack.c.l.b16 %v119
    %v249 = vunpack.c.l.b16 %v120
    %v250 = vunpack.c.l.b16 %v121
    %v251 = vunpack.c.l.b16 %v122
    %v252 = vunpack.c.l.b16 %v123
    %v253 = vunpack.c.l.b16 %v124
    %v254 = vunpack.c.l.b16 %v125
    %v255 = vunpack.c.l.b16 %v126
    %v256 = vunpack.c.l.b16 %v127
    %v257 = vunpack.c.l.b16 %v128
    %v258 = vunpack.c.l.b16 %v129
    %v259 = vunpack.c.l.b16 %v130
    %v260 = vunpack.c.l.b16 %v131
    %v261 = vunpack.c.l.b16 %v132
    %v262 = vunpack.c.l.b16 %v133
    %v263 = vunpack.c.l.b16 %v134
    %v264 = vunpack.c.l.b16 %v135
    %v265 = vunpack.c.l.b16 %v136
    %v266 = vunpack.c.l.b16 %v137
    %v267 = vunpack.c.l.b16 %v138
    %v268 = vunpack.c.l.b16 %v139
    %v269 = vunpack.c.l.b16 %v140
    %v270 = vunpack.c.l.b16 %v141
    %v271 = vunpack.c.l.b16 %v142
    %v272 = vunpack.c.l.b16 %v143
    %v273 = vunpack.c.l.b16 %v144
    %v274 = vunpack.c.l.b16 %v145
    %v275 = vunpack.c.l.b16 %v146
    %v276 = vunpack.c.l.b16 %v147
    %v277 = vunpack.c.l.b16 %v148
    %v278 = vunpack.c.l.b16 %v149
    %v279 = vunpack.c.l.b16 %v150
    %v280 = vunpack.c.l.b16 %v151
    %v281 = vunpack.c.l.b16 %v152
    %v282 = vunpack.c.l.b16 %v153
    %v283 = vunpack.c.l.b16 %v154
    %v284 = vunpack.c.l.b16 %v155
    %v285 = vunpack.c.l.b16 %v156
    %v286 = vunpack.c.l.b16 %v157
    %v287 = vunpack.c.l.b16 %v158
    %v288 = vunpack.c.l.b16 %v159
    %v289 = vunpack.c.l.b16 %v160
    %v290 = vunpack.c.l.b16 %v161
    %v291 = vunpack.c.l.b16 %v162
    %v292 = vunpack.c.l.b16 %v163
    %v293 = vunpack.c.l.b16 %v164
    %v294 = vunpack.c.l.b16 %v165
    %v295 = vunpack.c.l.b16 %v166
    %v296 = vunpack.c.l.b16 %v167
    %v297 = vunpack.c.l.b16 %v168
    %v298 = vunpack.c.l.b16 %v169
    %v299 = vunpack.c.l.b16 %v170
    %v300 = vunpack.c.l.b16 %v171
    %v301 = vunpack.c.l.b16 %v172
    %v302 = vunpack.c.l.b16 %v173
    %v303 = vunpack.c.l.b16 %v174
    %v304 = vunpack.c.l.b16 %v175
    %v305 = vunpack.c.l.b16 %v176
    %v306 = vpack.c.b16 %v243, %v242
    %v307 = vpack.c.b16 %v245, %v244
    %v308 = vpack.c.b16 %v247, %v246
    %v309 = vpack.c.b16 %v249, %v248
    %v310 = vpack.c.b16 %v251, %v250
    %v311 = vpack.c.b16 %v253, %v252
    %v312 = vpack.c.b16 %v255, %v254
    %v313 = vpack.c.b16 %v257, %v256
    %v314 = vpack.c.b16 %v259, %v258
    %v315 = vpack.c.b16 %v261, %v260
    %v316 = vpack.c.b16 %v263, %v262
    %v317 = vpack.c.b16 %v265, %v264
    %v318 = vpack.c.b16 %v267, %v266
    %v319 = vpack.c.b16 %v269, %v268
    %v320 = vpack.c.b16 %v271, %v270
    %v321 = vpack.c.b16 %v273, %v272
    %v322 = vpack.c.b16 %v275, %v274
    %v323 = vpack.c.b16 %v277, %v276
    %v324 = vpack.c.b16 %v279, %v278
    %v325 = vpack.c.b16 %v281, %v280
    %v326 = vpack.c.b16 %v283, %v282
    %v327 = vpack.c.b16 %v285, %v284
    %v328 = vpack.c.b16 %v287, %v286
    %v329 = vpack.c.b16 %v289, %v288
    %v330 = vpack.c.b16 %v291, %v290
    %v331 = vpack.c.b16 %v293, %v292
    %v332 = vpack.c.b16 %v295, %v294
    %v333 = vpack.c.b16 %v297, %v296
    %v334 = vpack.c.b16 %v299, %v298
    %v335 = vpack.c.b16 %v301, %v300
    %v336 = vpack.c.b16 %v303, %v302
    %v337 = vpack.c.b16 %v305, %v304
    %370 = vmatprep.subr.bf16.mxu0 0
    %371 = vmatpush1.bf16.msra.mxu0 %v306
    %372 = vmatprep.subr.bf16.mxu0 0
    %373 = vmatpush1.bf16.msra.mxu0 %v307
    %374 = vmatprep.subr.bf16.mxu0 0
    %375 = vmatpush1.bf16.msra.mxu0 %v308
    %376 = vmatprep.subr.bf16.mxu0 0
    %377 = vmatpush1.bf16.msra.mxu0 %v309
    %378 = vmatprep.subr.bf16.mxu0 0
    %379 = vmatpush1.bf16.msra.mxu0 %v310
    %380 = vmatprep.subr.bf16.mxu0 0
    %381 = vmatpush1.bf16.msra.mxu0 %v311
    %382 = vmatprep.subr.bf16.mxu0 0
    %383 = vmatpush1.bf16.msra.mxu0 %v312
    %384 = vmatprep.subr.bf16.mxu0 0
    %385 = vmatpush1.bf16.msra.mxu0 %v313
    %386 = vmatprep.subr.bf16.mxu0 0
    %387 = vmatpush1.bf16.msra.mxu0 %v314
    %388 = vmatprep.subr.bf16.mxu0 0
    %389 = vmatpush1.bf16.msra.mxu0 %v315
    %390 = vmatprep.subr.bf16.mxu0 0
    %391 = vmatpush1.bf16.msra.mxu0 %v316
    %392 = vmatprep.subr.bf16.mxu0 0
    %393 = vmatpush1.bf16.msra.mxu0 %v317
    %394 = vmatprep.subr.bf16.mxu0 0
    %395 = vmatpush1.bf16.msra.mxu0 %v318
    %396 = vmatprep.subr.bf16.mxu0 0
    %397 = vmatpush1.bf16.msra.mxu0 %v319
    %398 = vmatprep.subr.bf16.mxu0 0
    %399 = vmatpush1.bf16.msra.mxu0 %v320
    %400 = vmatprep.subr.bf16.mxu0 0
    %401 = vmatpush1.bf16.msra.mxu0 %v321
    %402 = vmatprep.mubr.bf16.mxu0 %v110
    %403 = vmatmul.mubr.bf16.gmra.mrb[0].mxu0 %v109
    %v404 = vpop.f32.mrb[0].mxu0
    %v405 = vadd.f32 %v177, %v404
    %v406 = vpop.f32.mrb[0].mxu0
    %v407 = vpop.f32.mrb[0].mxu0
    %v408 = vadd.f32 %v177, %v407
    %v409 = vpop.f32.mrb[0].mxu0
    %410 = vdwg.mxu0
    %411 = vmatprep.subr.bf16.mxu0 0
    %412 = vmatpush1.bf16.msra.mxu0 %v322
    %413 = vmatprep.subr.bf16.mxu0 0
    %414 = vmatpush1.bf16.msra.mxu0 %v323
    %415 = vmatprep.subr.bf16.mxu0 0
    %416 = vmatpush1.bf16.msra.mxu0 %v324
    %417 = vmatprep.subr.bf16.mxu0 0
    %418 = vmatpush1.bf16.msra.mxu0 %v325
    %419 = vmatprep.subr.bf16.mxu0 0
    %420 = vmatpush1.bf16.msra.mxu0 %v326
    %421 = vmatprep.subr.bf16.mxu0 0
    %422 = vmatpush1.bf16.msra.mxu0 %v327
    %423 = vmatprep.subr.bf16.mxu0 0
    %424 = vmatpush1.bf16.msra.mxu0 %v328
    %425 = vmatprep.subr.bf16.mxu0 0
    %426 = vmatpush1.bf16.msra.mxu0 %v329
    %427 = vmatprep.subr.bf16.mxu0 0
    %428 = vmatpush1.bf16.msra.mxu0 %v330
    %429 = vmatprep.subr.bf16.mxu0 0
    %430 = vmatpush1.bf16.msra.mxu0 %v331
    %431 = vmatprep.subr.bf16.mxu0 0
    %432 = vmatpush1.bf16.msra.mxu0 %v332
    %433 = vmatprep.subr.bf16.mxu0 0
    %434 = vmatpush1.bf16.msra.mxu0 %v333
    %435 = vmatprep.subr.bf16.mxu0 0
    %436 = vmatpush1.bf16.msra.mxu0 %v334
    %437 = vmatprep.subr.bf16.mxu0 0
    %438 = vmatpush1.bf16.msra.mxu0 %v335
    %439 = vmatprep.subr.bf16.mxu0 0
    %440 = vmatpush1.bf16.msra.mxu0 %v336
    %441 = vmatprep.subr.bf16.mxu0 0
    %442 = vmatpush1.bf16.msra.mxu0 %v337
    %443 = vmatprep.mubr.bf16.mxu0 %v112
    %444 = vmatmul.mubr.bf16.gmra.mrb[0].mxu0 %v111
    %v445 = vpop.f32.mrb[0].mxu0
    %v446 = vadd.f32 %v405, %v445
    %v447 = vpop.f32.mrb[0].mxu0
    %v448 = vpop.f32.mrb[0].mxu0
    %v449 = vadd.f32 %v408, %v448
    %v450 = vpop.f32.mrb[0].mxu0
    %451 = vdwg.mxu0
    %v452 = vlaneseq
    %v453 = vshrl.u32 %v452, 7
    %vm454 = vcmp.ge.s32.totalorder %v453, %v81
    %v455 = vld [vmem:[%s3] sm:$0x1]
    %v456 = vld [vmem:[%s4] sm:$0x1]
    %457 = vadd.xlane.f32.xlu0 %v446
    %v458 = vpop.xlane.xlu0 %457
    %459 = vadd.xlane.f32.xlu0 %v449
    %v460 = vpop.xlane.xlu0 %459
    %v461 = vrcp.pop 128.0
    %v462 = vmul.f32 %v458, %v461
    %v463 = vmul.f32 %v460, %v461
    %v464 = vsub.f32 %v446, %v462
    %v465 = vsub.f32 %v449, %v463
    %v466 = vmul.f32 %v464, %v464
    %v467 = vmul.f32 %v465, %v465
    %468 = vadd.xlane.f32.xlu0 %v466
    %v469 = vpop.xlane.xlu0 %468
    %470 = vadd.xlane.f32.xlu0 %v467
    %v471 = vpop.xlane.xlu0 %470
    %v472 = vmul.f32 %v469, %v461
    %v473 = vmul.f32 %v471, %v461
    %v474 = vadd.f32 %v472, 1e-05
    %v475 = vadd.f32 %v473, 1e-05
    %v476 = vrsqrt.pop %v474
    %v477 = vrsqrt.pop %v475
    %v478 = vmul.f32 %v464, %v476
    %v479 = vmul.f32 %v465, %v477
    %v480 = vlaneseq
    %v481 = vshrl.u32 %v480, 7
    %v482 = vsub.s32 0, %v481
    %v483 = vrot.slane %v455, %v482
    %v484 = vmul.f32 %v478, %v483
    %v485 = vmul.f32 %v479, %v483
    %v486 = vlaneseq
    %v487 = vshrl.u32 %v486, 7
    %v488 = vsub.s32 0, %v487
    %v489 = vrot.slane %v456, %v488
    %v490 = vadd.f32 %v484, %v489
    %v491 = vadd.f32 %v485, %v489
    %v492 = vpack.c.bf16 %v491, %v490
    %v493 = vld [vmem:[#allocation4] sm:$0xff]
    %v494 = vld [vmem:[#allocation4 + $0x8] sm:$0xf]
    %v495 = vld [vmem:[#allocation4 + $0xc] sm:$0xff]
    %v496 = vld [vmem:[#allocation4 + $0x14] sm:$0xf]
    %v497 = vld [vmem:[#allocation4 + $0x18] sm:$0xff]
    %v498 = vld [vmem:[#allocation4 + $0x20] sm:$0xf]
    %v499 = vld [vmem:[#allocation4 + $0x24] sm:$0xff]
    %v500 = vld [vmem:[#allocation4 + $0x2c] sm:$0xf]
    %v501 = vld [vmem:[#allocation4 + $0x30] sm:$0xff]
    %v502 = vld [vmem:[#allocation4 + $0x38] sm:$0xf]
    %v503 = vld [vmem:[#allocation4 + $0x3c] sm:$0xff]
    %v504 = vld [vmem:[#allocation4 + $0x44] sm:$0xf]
    %v505 = vld [vmem:[#allocation4 + $0x48] sm:$0xff]
    %v506 = vld [vmem:[#allocation4 + $0x50] sm:$0xf]
    %v507 = vld [vmem:[#allocation4 + $0x54] sm:$0xff]
    %v508 = vld [vmem:[#allocation4 + $0x5c] sm:$0xf]
    %v509 = vld [vmem:[#allocation4 + $0x60] sm:$0xff]
    %v510 = vld [vmem:[#allocation4 + $0x68] sm:$0xf]
    %v511 = vld [vmem:[#allocation4 + $0x6c] sm:$0xff]
    %v512 = vld [vmem:[#allocation4 + $0x74] sm:$0xf]
    %v513 = vld [vmem:[#allocation4 + $0x78] sm:$0xff]
    %v514 = vld [vmem:[#allocation4 + $0x80] sm:$0xf]
    %v515 = vld [vmem:[#allocation4 + $0x84] sm:$0xff]
    %v516 = vld [vmem:[#allocation4 + $0x8c] sm:$0xf]
    %v517 = vld [vmem:[#allocation4 + $0x90] sm:$0xff]
    %v518 = vld [vmem:[#allocation4 + $0x98] sm:$0xf]
    %v519 = vld [vmem:[#allocation4 + $0x9c] sm:$0xff]
    %v520 = vld [vmem:[#allocation4 + $0xa4] sm:$0xf]
    %v521 = vld [vmem:[#allocation4 + $0xa8] sm:$0xff]
    %v522 = vld [vmem:[#allocation4 + $0xb0] sm:$0xf]
    %v523 = vld [vmem:[#allocation4 + $0xb4] sm:$0xff]
    %v524 = vld [vmem:[#allocation4 + $0xbc] sm:$0xf]
    %v525 = vld [vmem:[%s6] ss:$2 sm:$0x7]
    %v527 = vlaneseq
    %v528 = vshrl.u32 %v527, 7
    %v529 = vsub.s32 0, %v528
    %v530 = vrot.slane %v525, %v529
    %v531 = vlaneseq
    %v532 = vshrl.u32 %v531, 7
    %v533 = vsub.s32 1, %v532
    %v534 = vrot.slane %v525, %v533
    %v535 = vlaneseq
    %v536 = vshrl.u32 %v535, 7
    %v537 = vsub.s32 2, %v536
    %v538 = vrot.slane %v525, %v537
    %v574 = vunpack.c.l.b16 %v493
    %v575 = vunpack.c.h.b16 %v493
    %v576 = vunpack.c.l.b16 %v494
    %v577 = vunpack.c.l.b16 %v495
    %v578 = vunpack.c.h.b16 %v495
    %v579 = vunpack.c.l.b16 %v496
    %v580 = vunpack.c.l.b16 %v497
    %v581 = vunpack.c.h.b16 %v497
    %v582 = vunpack.c.l.b16 %v498
    %v583 = vunpack.c.l.b16 %v499
    %v584 = vunpack.c.h.b16 %v499
    %v585 = vunpack.c.l.b16 %v500
    %v586 = vunpack.c.l.b16 %v501
    %v587 = vunpack.c.h.b16 %v501
    %v588 = vunpack.c.l.b16 %v502
    %v589 = vunpack.c.l.b16 %v503
    %v590 = vunpack.c.h.b16 %v503
    %v591 = vunpack.c.l.b16 %v504
    %v592 = vunpack.c.l.b16 %v505
    %v593 = vunpack.c.h.b16 %v505
    %v594 = vunpack.c.l.b16 %v506
    %v595 = vunpack.c.l.b16 %v507
    %v596 = vunpack.c.h.b16 %v507
    %v597 = vunpack.c.l.b16 %v508
    %v598 = vunpack.c.l.b16 %v509
    %v599 = vunpack.c.h.b16 %v509
    %v600 = vunpack.c.l.b16 %v510
    %v601 = vunpack.c.l.b16 %v511
    %v602 = vunpack.c.h.b16 %v511
    %v603 = vunpack.c.l.b16 %v512
    %v604 = vunpack.c.l.b16 %v513
    %v605 = vunpack.c.h.b16 %v513
    %v606 = vunpack.c.l.b16 %v514
    %v607 = vunpack.c.l.b16 %v515
    %v608 = vunpack.c.h.b16 %v515
    %v609 = vunpack.c.l.b16 %v516
    %v610 = vunpack.c.l.b16 %v517
    %v611 = vunpack.c.h.b16 %v517
    %v612 = vunpack.c.l.b16 %v518
    %v613 = vunpack.c.l.b16 %v519
    %v614 = vunpack.c.h.b16 %v519
    %v615 = vunpack.c.l.b16 %v520
    %v616 = vunpack.c.l.b16 %v521
    %v617 = vunpack.c.h.b16 %v521
    %v618 = vunpack.c.l.b16 %v522
    %v619 = vunpack.c.l.b16 %v523
    %v620 = vunpack.c.h.b16 %v523
    %v621 = vunpack.c.l.b16 %v524
    %v622 = vpack.c.b16 %v577, %v574
    %v623 = vpack.c.b16 %v578, %v575
    %v624 = vpack.c.b16 %v579, %v576
    %v625 = vpack.c.b16 %v583, %v580
    %v626 = vpack.c.b16 %v584, %v581
    %v627 = vpack.c.b16 %v585, %v582
    %v628 = vpack.c.b16 %v589, %v586
    %v629 = vpack.c.b16 %v590, %v587
    %v630 = vpack.c.b16 %v591, %v588
    %v631 = vpack.c.b16 %v595, %v592
    %v632 = vpack.c.b16 %v596, %v593
    %v633 = vpack.c.b16 %v597, %v594
    %v634 = vpack.c.b16 %v601, %v598
    %v635 = vpack.c.b16 %v602, %v599
    %v636 = vpack.c.b16 %v603, %v600
    %v637 = vpack.c.b16 %v607, %v604
    %v638 = vpack.c.b16 %v608, %v605
    %v639 = vpack.c.b16 %v609, %v606
    %v640 = vpack.c.b16 %v613, %v610
    %v641 = vpack.c.b16 %v614, %v611
    %v642 = vpack.c.b16 %v615, %v612
    %v643 = vpack.c.b16 %v619, %v616
    %v644 = vpack.c.b16 %v620, %v617
    %v645 = vpack.c.b16 %v621, %v618
    %670 = vmatprep.subr.bf16.mxu0 %v623
    %671 = vmatpush1.bf16.msra.mxu0 %v622
    %672 = vmatprep.subr.bf16.mxu0 %v626
    %673 = vmatpush1.bf16.msra.mxu0 %v625
    %674 = vmatprep.subr.bf16.mxu0 %v629
    %675 = vmatpush1.bf16.msra.mxu0 %v628
    %676 = vmatprep.subr.bf16.mxu0 %v632
    %677 = vmatpush1.bf16.msra.mxu0 %v631
    %678 = vmatprep.subr.bf16.mxu0 %v635
    %679 = vmatpush1.bf16.msra.mxu0 %v634
    %680 = vmatprep.subr.bf16.mxu0 %v638
    %681 = vmatpush1.bf16.msra.mxu0 %v637
    %682 = vmatprep.subr.bf16.mxu0 %v641
    %683 = vmatpush1.bf16.msra.mxu0 %v640
    %684 = vmatprep.subr.bf16.mxu0 %v644
    %685 = vmatpush1.bf16.msra.mxu0 %v643
    %686 = vmatprep.subr.bf16.mxu0 0
    %687 = vmatpush1.bf16.msra.mxu0 0
    %688 = vmatprep.subr.bf16.mxu0 0
    %689 = vmatpush1.bf16.msra.mxu0 0
    %690 = vmatprep.subr.bf16.mxu0 0
    %691 = vmatpush1.bf16.msra.mxu0 0
    %692 = vmatprep.subr.bf16.mxu0 0
    %693 = vmatpush1.bf16.msra.mxu0 0
    %694 = vmatprep.subr.bf16.mxu0 0
    %695 = vmatpush1.bf16.msra.mxu0 0
    %696 = vmatprep.subr.bf16.mxu0 0
    %697 = vmatpush1.bf16.msra.mxu0 0
    %698 = vmatprep.subr.bf16.mxu0 0
    %699 = vmatpush1.bf16.msra.mxu0 0
    %700 = vmatprep.subr.bf16.mxu0 0
    %701 = vmatpush1.bf16.msra.mxu0 0
    %702 = vmatprep.mubr.bf16.mxu0 0
    %703 = vmatmul.mubr.bf16.gmra.mrb[0].mxu0 %v492
    %v704 = vpop.f32.mrb[0].mxu0
    %v705 = vadd.f32 %v530, %v704
    %v706 = vpop.f32.mrb[0].mxu0
    %v707 = vadd.f32 %v534, %v706
    %v708 = vpop.f32.mrb[0].mxu0
    %v709 = vadd.f32 %v530, %v708
    %v710 = vpop.f32.mrb[0].mxu0
    %v711 = vadd.f32 %v534, %v710
    %712 = vdwg.mxu0
    %713 = vmatprep.subr.bf16.mxu0 0
    %714 = vmatpush1.bf16.msra.mxu0 %v624
    %715 = vmatprep.subr.bf16.mxu0 0
    %716 = vmatpush1.bf16.msra.mxu0 %v627
    %717 = vmatprep.subr.bf16.mxu0 0
    %718 = vmatpush1.bf16.msra.mxu0 %v630
    %719 = vmatprep.subr.bf16.mxu0 0
    %720 = vmatpush1.bf16.msra.mxu0 %v633
    %721 = vmatprep.subr.bf16.mxu0 0
    %722 = vmatpush1.bf16.msra.mxu0 %v636
    %723 = vmatprep.subr.bf16.mxu0 0
    %724 = vmatpush1.bf16.msra.mxu0 %v639
    %725 = vmatprep.subr.bf16.mxu0 0
    %726 = vmatpush1.bf16.msra.mxu0 %v642
    %727 = vmatprep.subr.bf16.mxu0 0
    %728 = vmatpush1.bf16.msra.mxu0 %v645
    %729 = vmatprep.subr.bf16.mxu0 0
    %730 = vmatpush1.bf16.msra.mxu0 0
    %731 = vmatprep.subr.bf16.mxu0 0
    %732 = vmatpush1.bf16.msra.mxu0 0
    %733 = vmatprep.subr.bf16.mxu0 0
    %734 = vmatpush1.bf16.msra.mxu0 0
    %735 = vmatprep.subr.bf16.mxu0 0
    %736 = vmatpush1.bf16.msra.mxu0 0
    %737 = vmatprep.subr.bf16.mxu0 0
    %738 = vmatpush1.bf16.msra.mxu0 0
    %739 = vmatprep.subr.bf16.mxu0 0
    %740 = vmatpush1.bf16.msra.mxu0 0
    %741 = vmatprep.subr.bf16.mxu0 0
    %742 = vmatpush1.bf16.msra.mxu0 0
    %743 = vmatprep.subr.bf16.mxu0 0
    %744 = vmatpush1.bf16.msra.mxu0 0
    %745 = vmatprep.mubr.bf16.mxu0 0
    %746 = vmatmul.mubr.bf16.gmra.mrb[0].mxu0 %v492
    %v747 = vpop.f32.mrb[0].mxu0
    %v748 = vadd.f32 %v538, %v747
    %v749 = vpop.f32.mrb[0].mxu0
    %v750 = vpop.f32.mrb[0].mxu0
    %v751 = vadd.f32 %v538, %v750
    %v752 = vpop.f32.mrb[0].mxu0
    %753 = vdwg.mxu0
    %v754 = vpack.c.bf16 %v709, %v705
    %v755 = vpack.c.bf16 %v711, %v707
    %v756 = vpack.c.bf16 %v751, %v748
    %vm757 = vcmask 261120
    %v759 = vsel %vm757, %v754, 0
    %v762 = vsel %vm757, %v755, 0
    %764 = vmatprep.subr.bf16.mxu0 0
    %765 = vmatpush1.bf16.xpose.msra.mxu0 %v762
    %766 = vmatprep.subr.bf16.mxu0 0
    %767 = vmatpush1.bf16.xpose.msra.mxu0 0
    %768 = vmatprep.subr.bf16.mxu0 0
    %769 = vmatpush1.bf16.xpose.msra.mxu0 0
    %770 = vmatprep.subr.bf16.mxu0 0
    %771 = vmatpush1.bf16.xpose.msra.mxu0 0
    %772 = vmatprep.subr.bf16.mxu0 0
    %773 = vmatpush1.bf16.xpose.msra.mxu0 0
    %774 = vmatprep.subr.bf16.mxu0 0
    %775 = vmatpush1.bf16.xpose.msra.mxu0 0
    %776 = vmatprep.subr.bf16.mxu0 0
    %777 = vmatpush1.bf16.xpose.msra.mxu0 0
    %778 = vmatprep.subr.bf16.mxu0 0
    %779 = vmatpush1.bf16.xpose.msra.mxu0 0
    %780 = vmatprep.subr.bf16.mxu0 0
    %781 = vmatpush1.bf16.xpose.msra.mxu0 0
    %782 = vmatprep.subr.bf16.mxu0 0
    %783 = vmatpush1.bf16.xpose.msra.mxu0 0
    %784 = vmatprep.subr.bf16.mxu0 0
    %785 = vmatpush1.bf16.xpose.msra.mxu0 0
    %786 = vmatprep.subr.bf16.mxu0 0
    %787 = vmatpush1.bf16.xpose.msra.mxu0 0
    %788 = vmatprep.subr.bf16.mxu0 0
    %789 = vmatpush1.bf16.xpose.msra.mxu0 0
    %790 = vmatprep.subr.bf16.mxu0 0
    %791 = vmatpush1.bf16.xpose.msra.mxu0 0
    %792 = vmatprep.subr.bf16.mxu0 0
    %793 = vmatpush1.bf16.xpose.msra.mxu0 0
    %794 = vmatprep.subr.bf16.mxu0 0
    %795 = vmatpush1.bf16.xpose.msra.mxu0 0
    %796 = vmatprep.mubr.bf16.mxu0 0
    %797 = vmatmul.mubr.bf16.gmra.mrb[0].mxu0 %v759
    %v798 = vpop.f32.mrb[0].mxu0
    %v799 = vadd.f32 0.0, %v798
    %v800 = vpop.f32.mrb[0].mxu0
    %v801 = vpop.f32.mrb[0].mxu0
    %v802 = vpop.f32.mrb[0].mxu0
    %803 = vdwg.mxu0
    %v804 = vmul.f32 %v799, 0.17677669
    %v805 = vsel %vm454, %v804, -1e+30
    %vm806 = vcmask 64512
    %v807 = vsel %vm806, %v805, -inf
    %808 = vmax.xlane.f32.xlu0 %v807
    %v809 = vpop.xlane.xlu0 %808
    %v810 = vsub.f32 %v805, %v809
    %v811 = vmul.f32 %v810, 1.442695
    %v812 = vpow.pop %v811
    %v813 = vsel %vm806, %v812, 0.0
    %814 = vadd.xlane.f32.xlu0 %v813
    %v815 = vpop.xlane.xlu0 %814
    %v816 = vrcp.pop %v815
    %v817 = vmul.f32 %v812, %v816
    %v818 = vpack.c.bf16 %v817, %v817
    %v820 = vsel %vm806, %v818, 0
    %vm822 = vcmask 1043456
    %v824 = vsel %vm822, %v756, 0
    %826 = vmatprep.subr.bf16.mxu0 0
    %827 = vmatpush1.bf16.msra.mxu0 %v824
    %828 = vmatprep.subr.bf16.mxu0 0
    %829 = vmatpush1.bf16.msra.mxu0 0
    %830 = vmatprep.subr.bf16.mxu0 0
    %831 = vmatpush1.bf16.msra.mxu0 0
    %832 = vmatprep.subr.bf16.mxu0 0
    %833 = vmatpush1.bf16.msra.mxu0 0
    %834 = vmatprep.subr.bf16.mxu0 0
    %835 = vmatpush1.bf16.msra.mxu0 0
    %836 = vmatprep.subr.bf16.mxu0 0
    %837 = vmatpush1.bf16.msra.mxu0 0
    %838 = vmatprep.subr.bf16.mxu0 0
    %839 = vmatpush1.bf16.msra.mxu0 0
    %840 = vmatprep.subr.bf16.mxu0 0
    %841 = vmatpush1.bf16.msra.mxu0 0
    %842 = vmatprep.subr.bf16.mxu0 0
    %843 = vmatpush1.bf16.msra.mxu0 0
    %844 = vmatprep.subr.bf16.mxu0 0
    %845 = vmatpush1.bf16.msra.mxu0 0
    %846 = vmatprep.subr.bf16.mxu0 0
    %847 = vmatpush1.bf16.msra.mxu0 0
    %848 = vmatprep.subr.bf16.mxu0 0
    %849 = vmatpush1.bf16.msra.mxu0 0
    %850 = vmatprep.subr.bf16.mxu0 0
    %851 = vmatpush1.bf16.msra.mxu0 0
    %852 = vmatprep.subr.bf16.mxu0 0
    %853 = vmatpush1.bf16.msra.mxu0 0
    %854 = vmatprep.subr.bf16.mxu0 0
    %855 = vmatpush1.bf16.msra.mxu0 0
    %856 = vmatprep.subr.bf16.mxu0 0
    %857 = vmatpush1.bf16.msra.mxu0 0
    %858 = vmatprep.mubr.bf16.mxu0 0
    %859 = vmatmul.mubr.bf16.gmra.mrb[0].mxu0 %v820
    %v860 = vpop.f32.mrb[0].mxu0
    %v861 = vadd.f32 0.0, %v860
    %v862 = vpop.f32.mrb[0].mxu0
    %v863 = vpop.f32.mrb[0].mxu0
    %v864 = vpop.f32.mrb[0].mxu0
    %865 = vdwg.mxu0
    %867 = vrot.lane.b32.xlu0 %v754, 96
    %v868 = vpop.permute.xlu0 %867
    %870 = vrot.lane.b32.xlu0 %v755, 96
    %v871 = vpop.permute.xlu0 %870
    %v873 = vsel %vm757, %v868, 0
    %v876 = vsel %vm757, %v871, 0
    %878 = vmatprep.subr.bf16.mxu0 0
    %879 = vmatpush1.bf16.xpose.msra.mxu0 %v876
    %880 = vmatprep.subr.bf16.mxu0 0
    %881 = vmatpush1.bf16.xpose.msra.mxu0 0
    %882 = vmatprep.subr.bf16.mxu0 0
    %883 = vmatpush1.bf16.xpose.msra.mxu0 0
    %884 = vmatprep.subr.bf16.mxu0 0
    %885 = vmatpush1.bf16.xpose.msra.mxu0 0
    %886 = vmatprep.subr.bf16.mxu0 0
    %887 = vmatpush1.bf16.xpose.msra.mxu0 0
    %888 = vmatprep.subr.bf16.mxu0 0
    %889 = vmatpush1.bf16.xpose.msra.mxu0 0
    %890 = vmatprep.subr.bf16.mxu0 0
    %891 = vmatpush1.bf16.xpose.msra.mxu0 0
    %892 = vmatprep.subr.bf16.mxu0 0
    %893 = vmatpush1.bf16.xpose.msra.mxu0 0
    %894 = vmatprep.subr.bf16.mxu0 0
    %895 = vmatpush1.bf16.xpose.msra.mxu0 0
    %896 = vmatprep.subr.bf16.mxu0 0
    %897 = vmatpush1.bf16.xpose.msra.mxu0 0
    %898 = vmatprep.subr.bf16.mxu0 0
    %899 = vmatpush1.bf16.xpose.msra.mxu0 0
    %900 = vmatprep.subr.bf16.mxu0 0
    %901 = vmatpush1.bf16.xpose.msra.mxu0 0
    %902 = vmatprep.subr.bf16.mxu0 0
    %903 = vmatpush1.bf16.xpose.msra.mxu0 0
    %904 = vmatprep.subr.bf16.mxu0 0
    %905 = vmatpush1.bf16.xpose.msra.mxu0 0
    %906 = vmatprep.subr.bf16.mxu0 0
    %907 = vmatpush1.bf16.xpose.msra.mxu0 0
    %908 = vmatprep.subr.bf16.mxu0 0
    %909 = vmatpush1.bf16.xpose.msra.mxu0 0
    %910 = vmatprep.mubr.bf16.mxu0 0
    %911 = vmatmul.mubr.bf16.gmra.mrb[0].mxu0 %v873
    %v912 = vpop.f32.mrb[0].mxu0
    %v913 = vadd.f32 0.0, %v912
    %v914 = vpop.f32.mrb[0].mxu0
    %v915 = vpop.f32.mrb[0].mxu0
    %v916 = vpop.f32.mrb[0].mxu0
    %917 = vdwg.mxu0
    %v918 = vmul.f32 %v913, 0.17677669
    %v919 = vsel %vm454, %v918, -1e+30
    %v920 = vsel %vm806, %v919, -inf
    %921 = vmax.xlane.f32.xlu0 %v920
    %v922 = vpop.xlane.xlu0 %921
    %v923 = vsub.f32 %v919, %v922
    %v924 = vmul.f32 %v923, 1.442695
    %v925 = vpow.pop %v924
    %v926 = vsel %vm806, %v925, 0.0
    %927 = vadd.xlane.f32.xlu0 %v926
    %v928 = vpop.xlane.xlu0 %927
    %v929 = vrcp.pop %v928
    %v930 = vmul.f32 %v925, %v929
    %v931 = vpack.c.bf16 %v930, %v930
    %933 = vrot.lane.b32.xlu0 %v756, 96
    %v934 = vpop.permute.xlu0 %933
    %v936 = vsel %vm806, %v931, 0
    %v939 = vsel %vm822, %v934, 0
    %941 = vmatprep.subr.bf16.mxu0 0
    %942 = vmatpush1.bf16.msra.mxu0 %v939
    %943 = vmatprep.subr.bf16.mxu0 0
    %944 = vmatpush1.bf16.msra.mxu0 0
    %945 = vmatprep.subr.bf16.mxu0 0
    %946 = vmatpush1.bf16.msra.mxu0 0
    %947 = vmatprep.subr.bf16.mxu0 0
    %948 = vmatpush1.bf16.msra.mxu0 0
    %949 = vmatprep.subr.bf16.mxu0 0
    %950 = vmatpush1.bf16.msra.mxu0 0
    %951 = vmatprep.subr.bf16.mxu0 0
    %952 = vmatpush1.bf16.msra.mxu0 0
    %953 = vmatprep.subr.bf16.mxu0 0
    %954 = vmatpush1.bf16.msra.mxu0 0
    %955 = vmatprep.subr.bf16.mxu0 0
    %956 = vmatpush1.bf16.msra.mxu0 0
    %957 = vmatprep.subr.bf16.mxu0 0
    %958 = vmatpush1.bf16.msra.mxu0 0
    %959 = vmatprep.subr.bf16.mxu0 0
    %960 = vmatpush1.bf16.msra.mxu0 0
    %961 = vmatprep.subr.bf16.mxu0 0
    %962 = vmatpush1.bf16.msra.mxu0 0
    %963 = vmatprep.subr.bf16.mxu0 0
    %964 = vmatpush1.bf16.msra.mxu0 0
    %965 = vmatprep.subr.bf16.mxu0 0
    %966 = vmatpush1.bf16.msra.mxu0 0
    %967 = vmatprep.subr.bf16.mxu0 0
    %968 = vmatpush1.bf16.msra.mxu0 0
    %969 = vmatprep.subr.bf16.mxu0 0
    %970 = vmatpush1.bf16.msra.mxu0 0
    %971 = vmatprep.subr.bf16.mxu0 0
    %972 = vmatpush1.bf16.msra.mxu0 0
    %973 = vmatprep.mubr.bf16.mxu0 0
    %974 = vmatmul.mubr.bf16.gmra.mrb[0].mxu0 %v936
    %v975 = vpop.f32.mrb[0].mxu0
    %v976 = vadd.f32 0.0, %v975
    %v977 = vpop.f32.mrb[0].mxu0
    %v978 = vpop.f32.mrb[0].mxu0
    %v979 = vpop.f32.mrb[0].mxu0
    %980 = vdwg.mxu0
    %981 = vrot.lane.b32.xlu0 %v754, 64
    %v982 = vpop.permute.xlu0 %981
    %983 = vrot.lane.b32.xlu0 %v755, 64
    %v984 = vpop.permute.xlu0 %983
    %v986 = vsel %vm757, %v982, 0
    %v989 = vsel %vm757, %v984, 0
    %991 = vmatprep.subr.bf16.mxu0 0
    %992 = vmatpush1.bf16.xpose.msra.mxu0 %v989
    %993 = vmatprep.subr.bf16.mxu0 0
    %994 = vmatpush1.bf16.xpose.msra.mxu0 0
    %995 = vmatprep.subr.bf16.mxu0 0
    %996 = vmatpush1.bf16.xpose.msra.mxu0 0
    %997 = vmatprep.subr.bf16.mxu0 0
    %998 = vmatpush1.bf16.xpose.msra.mxu0 0
    %999 = vmatprep.subr.bf16.mxu0 0
    %1000 = vmatpush1.bf16.xpose.msra.mxu0 0
    %1001 = vmatprep.subr.bf16.mxu0 0
    %1002 = vmatpush1.bf16.xpose.msra.mxu0 0
    %1003 = vmatprep.subr.bf16.mxu0 0
    %1004 = vmatpush1.bf16.xpose.msra.mxu0 0
    %1005 = vmatprep.subr.bf16.mxu0 0
    %1006 = vmatpush1.bf16.xpose.msra.mxu0 0
    %1007 = vmatprep.subr.bf16.mxu0 0
    %1008 = vmatpush1.bf16.xpose.msra.mxu0 0
    %1009 = vmatprep.subr.bf16.mxu0 0
    %1010 = vmatpush1.bf16.xpose.msra.mxu0 0
    %1011 = vmatprep.subr.bf16.mxu0 0
    %1012 = vmatpush1.bf16.xpose.msra.mxu0 0
    %1013 = vmatprep.subr.bf16.mxu0 0
    %1014 = vmatpush1.bf16.xpose.msra.mxu0 0
    %1015 = vmatprep.subr.bf16.mxu0 0
    %1016 = vmatpush1.bf16.xpose.msra.mxu0 0
    %1017 = vmatprep.subr.bf16.mxu0 0
    %1018 = vmatpush1.bf16.xpose.msra.mxu0 0
    %1019 = vmatprep.subr.bf16.mxu0 0
    %1020 = vmatpush1.bf16.xpose.msra.mxu0 0
    %1021 = vmatprep.subr.bf16.mxu0 0
    %1022 = vmatpush1.bf16.xpose.msra.mxu0 0
    %1023 = vmatprep.mubr.bf16.mxu0 0
    %1024 = vmatmul.mubr.bf16.gmra.mrb[0].mxu0 %v986
    %v1025 = vpop.f32.mrb[0].mxu0
    %v1026 = vadd.f32 0.0, %v1025
    %v1027 = vpop.f32.mrb[0].mxu0
    %v1028 = vpop.f32.mrb[0].mxu0
    %v1029 = vpop.f32.mrb[0].mxu0
    %1030 = vdwg.mxu0
    %v1031 = vmul.f32 %v1026, 0.17677669
    %v1032 = vsel %vm454, %v1031, -1e+30
    %v1033 = vsel %vm806, %v1032, -inf
    %1034 = vmax.xlane.f32.xlu0 %v1033
    %v1035 = vpop.xlane.xlu0 %1034
    %v1036 = vsub.f32 %v1032, %v1035
    %v1037 = vmul.f32 %v1036, 1.442695
    %v1038 = vpow.pop %v1037
    %v1039 = vsel %vm806, %v1038, 0.0
    %1040 = vadd.xlane.f32.xlu0 %v1039
    %v1041 = vpop.xlane.xlu0 %1040
    %v1042 = vrcp.pop %v1041
    %v1043 = vmul.f32 %v1038, %v1042
    %v1044 = vpack.c.bf16 %v1043, %v1043
    %1045 = vrot.lane.b32.xlu0 %v756, 64
    %v1046 = vpop.permute.xlu0 %1045
    %v1048 = vsel %vm806, %v1044, 0
    %v1051 = vsel %vm822, %v1046, 0
    %1053 = vmatprep.subr.bf16.mxu0 0
    %1054 = vmatpush1.bf16.msra.mxu0 %v1051
    %1055 = vmatprep.subr.bf16.mxu0 0
    %1056 = vmatpush1.bf16.msra.mxu0 0
    %1057 = vmatprep.subr.bf16.mxu0 0
    %1058 = vmatpush1.bf16.msra.mxu0 0
    %1059 = vmatprep.subr.bf16.mxu0 0
    %1060 = vmatpush1.bf16.msra.mxu0 0
    %1061 = vmatprep.subr.bf16.mxu0 0
    %1062 = vmatpush1.bf16.msra.mxu0 0
    %1063 = vmatprep.subr.bf16.mxu0 0
    %1064 = vmatpush1.bf16.msra.mxu0 0
    %1065 = vmatprep.subr.bf16.mxu0 0
    %1066 = vmatpush1.bf16.msra.mxu0 0
    %1067 = vmatprep.subr.bf16.mxu0 0
    %1068 = vmatpush1.bf16.msra.mxu0 0
    %1069 = vmatprep.subr.bf16.mxu0 0
    %1070 = vmatpush1.bf16.msra.mxu0 0
    %1071 = vmatprep.subr.bf16.mxu0 0
    %1072 = vmatpush1.bf16.msra.mxu0 0
    %1073 = vmatprep.subr.bf16.mxu0 0
    %1074 = vmatpush1.bf16.msra.mxu0 0
    %1075 = vmatprep.subr.bf16.mxu0 0
    %1076 = vmatpush1.bf16.msra.mxu0 0
    %1077 = vmatprep.subr.bf16.mxu0 0
    %1078 = vmatpush1.bf16.msra.mxu0 0
    %1079 = vmatprep.subr.bf16.mxu0 0
    %1080 = vmatpush1.bf16.msra.mxu0 0
    %1081 = vmatprep.subr.bf16.mxu0 0
    %1082 = vmatpush1.bf16.msra.mxu0 0
    %1083 = vmatprep.subr.bf16.mxu0 0
    %1084 = vmatpush1.bf16.msra.mxu0 0
    %1085 = vmatprep.mubr.bf16.mxu0 0
    %1086 = vmatmul.mubr.bf16.gmra.mrb[0].mxu0 %v1048
    %v1087 = vpop.f32.mrb[0].mxu0
    %v1088 = vadd.f32 0.0, %v1087
    %v1089 = vpop.f32.mrb[0].mxu0
    %v1090 = vpop.f32.mrb[0].mxu0
    %v1091 = vpop.f32.mrb[0].mxu0
    %1092 = vdwg.mxu0
    %1093 = vrot.lane.b32.xlu0 %v754, 32
    %v1094 = vpop.permute.xlu0 %1093
    %1095 = vrot.lane.b32.xlu0 %v755, 32
    %v1096 = vpop.permute.xlu0 %1095
    %v1098 = vsel %vm757, %v1094, 0
    %v1101 = vsel %vm757, %v1096, 0
    %1103 = vmatprep.subr.bf16.mxu0 0
    %1104 = vmatpush1.bf16.xpose.msra.mxu0 %v1101
    %1105 = vmatprep.subr.bf16.mxu0 0
    %1106 = vmatpush1.bf16.xpose.msra.mxu0 0
    %1107 = vmatprep.subr.bf16.mxu0 0
    %1108 = vmatpush1.bf16.xpose.msra.mxu0 0
    %1109 = vmatprep.subr.bf16.mxu0 0
    %1110 = vmatpush1.bf16.xpose.msra.mxu0 0
    %1111 = vmatprep.subr.bf16.mxu0 0
    %1112 = vmatpush1.bf16.xpose.msra.mxu0 0
    %1113 = vmatprep.subr.bf16.mxu0 0
    %1114 = vmatpush1.bf16.xpose.msra.mxu0 0
    %1115 = vmatprep.subr.bf16.mxu0 0
    %1116 = vmatpush1.bf16.xpose.msra.mxu0 0
    %1117 = vmatprep.subr.bf16.mxu0 0
    %1118 = vmatpush1.bf16.xpose.msra.mxu0 0
    %1119 = vmatprep.subr.bf16.mxu0 0
    %1120 = vmatpush1.bf16.xpose.msra.mxu0 0
    %1121 = vmatprep.subr.bf16.mxu0 0
    %1122 = vmatpush1.bf16.xpose.msra.mxu0 0
    %1123 = vmatprep.subr.bf16.mxu0 0
    %1124 = vmatpush1.bf16.xpose.msra.mxu0 0
    %1125 = vmatprep.subr.bf16.mxu0 0
    %1126 = vmatpush1.bf16.xpose.msra.mxu0 0
    %1127 = vmatprep.subr.bf16.mxu0 0
    %1128 = vmatpush1.bf16.xpose.msra.mxu0 0
    %1129 = vmatprep.subr.bf16.mxu0 0
    %1130 = vmatpush1.bf16.xpose.msra.mxu0 0
    %1131 = vmatprep.subr.bf16.mxu0 0
    %1132 = vmatpush1.bf16.xpose.msra.mxu0 0
    %1133 = vmatprep.subr.bf16.mxu0 0
    %1134 = vmatpush1.bf16.xpose.msra.mxu0 0
    %1135 = vmatprep.mubr.bf16.mxu0 0
    %1136 = vmatmul.mubr.bf16.gmra.mrb[0].mxu0 %v1098
    %v1137 = vpop.f32.mrb[0].mxu0
    %v1138 = vadd.f32 0.0, %v1137
    %v1139 = vpop.f32.mrb[0].mxu0
    %v1140 = vpop.f32.mrb[0].mxu0
    %v1141 = vpop.f32.mrb[0].mxu0
    %1142 = vdwg.mxu0
    %v1143 = vmul.f32 %v1138, 0.17677669
    %v1144 = vsel %vm454, %v1143, -1e+30
    %v1145 = vsel %vm806, %v1144, -inf
    %1146 = vmax.xlane.f32.xlu0 %v1145
    %v1147 = vpop.xlane.xlu0 %1146
    %v1148 = vsub.f32 %v1144, %v1147
    %v1149 = vmul.f32 %v1148, 1.442695
    %v1150 = vpow.pop %v1149
    %v1151 = vsel %vm806, %v1150, 0.0
    %1152 = vadd.xlane.f32.xlu0 %v1151
    %v1153 = vpop.xlane.xlu0 %1152
    %v1154 = vrcp.pop %v1153
    %v1155 = vmul.f32 %v1150, %v1154
    %v1156 = vpack.c.bf16 %v1155, %v1155
    %1157 = vrot.lane.b32.xlu0 %v756, 32
    %v1158 = vpop.permute.xlu0 %1157
    %v1160 = vsel %vm806, %v1156, 0
    %v1163 = vsel %vm822, %v1158, 0
    %1165 = vmatprep.subr.bf16.mxu0 0
    %1166 = vmatpush1.bf16.msra.mxu0 %v1163
    %1167 = vmatprep.subr.bf16.mxu0 0
    %1168 = vmatpush1.bf16.msra.mxu0 0
    %1169 = vmatprep.subr.bf16.mxu0 0
    %1170 = vmatpush1.bf16.msra.mxu0 0
    %1171 = vmatprep.subr.bf16.mxu0 0
    %1172 = vmatpush1.bf16.msra.mxu0 0
    %1173 = vmatprep.subr.bf16.mxu0 0
    %1174 = vmatpush1.bf16.msra.mxu0 0
    %1175 = vmatprep.subr.bf16.mxu0 0
    %1176 = vmatpush1.bf16.msra.mxu0 0
    %1177 = vmatprep.subr.bf16.mxu0 0
    %1178 = vmatpush1.bf16.msra.mxu0 0
    %1179 = vmatprep.subr.bf16.mxu0 0
    %1180 = vmatpush1.bf16.msra.mxu0 0
    %1181 = vmatprep.subr.bf16.mxu0 0
    %1182 = vmatpush1.bf16.msra.mxu0 0
    %1183 = vmatprep.subr.bf16.mxu0 0
    %1184 = vmatpush1.bf16.msra.mxu0 0
    %1185 = vmatprep.subr.bf16.mxu0 0
    %1186 = vmatpush1.bf16.msra.mxu0 0
    %1187 = vmatprep.subr.bf16.mxu0 0
    %1188 = vmatpush1.bf16.msra.mxu0 0
    %1189 = vmatprep.subr.bf16.mxu0 0
    %1190 = vmatpush1.bf16.msra.mxu0 0
    %1191 = vmatprep.subr.bf16.mxu0 0
    %1192 = vmatpush1.bf16.msra.mxu0 0
    %1193 = vmatprep.subr.bf16.mxu0 0
    %1194 = vmatpush1.bf16.msra.mxu0 0
    %1195 = vmatprep.subr.bf16.mxu0 0
    %1196 = vmatpush1.bf16.msra.mxu0 0
    %1197 = vmatprep.mubr.bf16.mxu0 0
    %1198 = vmatmul.mubr.bf16.gmra.mrb[0].mxu0 %v1160
    %v1199 = vpop.f32.mrb[0].mxu0
    %v1200 = vadd.f32 0.0, %v1199
    %v1201 = vpop.f32.mrb[0].mxu0
    %v1202 = vpop.f32.mrb[0].mxu0
    %v1203 = vpop.f32.mrb[0].mxu0
    %1204 = vdwg.mxu0
    %1206 = vrot.lane.b32.xlu0 %v976, 32
    %v1207 = vpop.permute.xlu0 %1206
    %1210 = vrot.lane.b32.xlu0 %v1088, 64
    %v1211 = vpop.permute.xlu0 %1210
    %1214 = vrot.lane.b32.xlu0 %v1200, 96
    %v1215 = vpop.permute.xlu0 %1214
    %v1217 = vsel %vm757, %v861, %v1207
    %vm1218 = vcmask 523264
    %v1219 = vsel %vm1218, %v1217, %v1211
    %vm1220 = vcmask 785408
    %v1221 = vsel %vm1220, %v1219, %v1215
    %v1222 = vrot.slane %v754, 4
    %v1223 = vrot.slane %v755, 4
    %v1225 = vsel %vm757, %v1222, 0
    %v1228 = vsel %vm757, %v1223, 0
    %1230 = vmatprep.subr.bf16.mxu0 0
    %1231 = vmatpush1.bf16.xpose.msra.mxu0 %v1228
    %1232 = vmatprep.subr.bf16.mxu0 0
    %1233 = vmatpush1.bf16.xpose.msra.mxu0 0
    %1234 = vmatprep.subr.bf16.mxu0 0
    %1235 = vmatpush1.bf16.xpose.msra.mxu0 0
    %1236 = vmatprep.subr.bf16.mxu0 0
    %1237 = vmatpush1.bf16.xpose.msra.mxu0 0
    %1238 = vmatprep.subr.bf16.mxu0 0
    %1239 = vmatpush1.bf16.xpose.msra.mxu0 0
    %1240 = vmatprep.subr.bf16.mxu0 0
    %1241 = vmatpush1.bf16.xpose.msra.mxu0 0
    %1242 = vmatprep.subr.bf16.mxu0 0
    %1243 = vmatpush1.bf16.xpose.msra.mxu0 0
    %1244 = vmatprep.subr.bf16.mxu0 0
    %1245 = vmatpush1.bf16.xpose.msra.mxu0 0
    %1246 = vmatprep.subr.bf16.mxu0 0
    %1247 = vmatpush1.bf16.xpose.msra.mxu0 0
    %1248 = vmatprep.subr.bf16.mxu0 0
    %1249 = vmatpush1.bf16.xpose.msra.mxu0 0
    %1250 = vmatprep.subr.bf16.mxu0 0
    %1251 = vmatpush1.bf16.xpose.msra.mxu0 0
    %1252 = vmatprep.subr.bf16.mxu0 0
    %1253 = vmatpush1.bf16.xpose.msra.mxu0 0
    %1254 = vmatprep.subr.bf16.mxu0 0
    %1255 = vmatpush1.bf16.xpose.msra.mxu0 0
    %1256 = vmatprep.subr.bf16.mxu0 0
    %1257 = vmatpush1.bf16.xpose.msra.mxu0 0
    %1258 = vmatprep.subr.bf16.mxu0 0
    %1259 = vmatpush1.bf16.xpose.msra.mxu0 0
    %1260 = vmatprep.subr.bf16.mxu0 0
    %1261 = vmatpush1.bf16.xpose.msra.mxu0 0
    %1262 = vmatprep.mubr.bf16.mxu0 0
    %1263 = vmatmul.mubr.bf16.gmra.mrb[0].mxu0 %v1225
    %v1264 = vpop.f32.mrb[0].mxu0
    %v1265 = vadd.f32 0.0, %v1264
    %v1266 = vpop.f32.mrb[0].mxu0
    %v1267 = vpop.f32.mrb[0].mxu0
    %v1268 = vpop.f32.mrb[0].mxu0
    %1269 = vdwg.mxu0
    %v1270 = vmul.f32 %v1265, 0.17677669
    %v1271 = vsel %vm454, %v1270, -1e+30
    %v1272 = vsel %vm806, %v1271, -inf
    %1273 = vmax.xlane.f32.xlu0 %v1272
    %v1274 = vpop.xlane.xlu0 %1273
    %v1275 = vsub.f32 %v1271, %v1274
    %v1276 = vmul.f32 %v1275, 1.442695
    %v1277 = vpow.pop %v1276
    %v1278 = vsel %vm806, %v1277, 0.0
    %1279 = vadd.xlane.f32.xlu0 %v1278
    %v1280 = vpop.xlane.xlu0 %1279
    %v1281 = vrcp.pop %v1280
    %v1282 = vmul.f32 %v1277, %v1281
    %v1283 = vpack.c.bf16 %v1282, %v1282
    %v1284 = vrot.slane %v756, 4
    %v1286 = vsel %vm806, %v1283, 0
    %v1289 = vsel %vm822, %v1284, 0
    %1291 = vmatprep.subr.bf16.mxu0 0
    %1292 = vmatpush1.bf16.msra.mxu0 %v1289
    %1293 = vmatprep.subr.bf16.mxu0 0
    %1294 = vmatpush1.bf16.msra.mxu0 0
    %1295 = vmatprep.subr.bf16.mxu0 0
    %1296 = vmatpush1.bf16.msra.mxu0 0
    %1297 = vmatprep.subr.bf16.mxu0 0
    %1298 = vmatpush1.bf16.msra.mxu0 0
    %1299 = vmatprep.subr.bf16.mxu0 0
    %1300 = vmatpush1.bf16.msra.mxu0 0
    %1301 = vmatprep.subr.bf16.mxu0 0
    %1302 = vmatpush1.bf16.msra.mxu0 0
    %1303 = vmatprep.subr.bf16.mxu0 0
    %1304 = vmatpush1.bf16.msra.mxu0 0
    %1305 = vmatprep.subr.bf16.mxu0 0
    %1306 = vmatpush1.bf16.msra.mxu0 0
    %1307 = vmatprep.subr.bf16.mxu0 0
    %1308 = vmatpush1.bf16.msra.mxu0 0
    %1309 = vmatprep.subr.bf16.mxu0 0
    %1310 = vmatpush1.bf16.msra.mxu0 0
    %1311 = vmatprep.subr.bf16.mxu0 0
    %1312 = vmatpush1.bf16.msra.mxu0 0
    %1313 = vmatprep.subr.bf16.mxu0 0
    %1314 = vmatpush1.bf16.msra.mxu0 0
    %1315 = vmatprep.subr.bf16.mxu0 0
    %1316 = vmatpush1.bf16.msra.mxu0 0
    %1317 = vmatprep.subr.bf16.mxu0 0
    %1318 = vmatpush1.bf16.msra.mxu0 0
    %1319 = vmatprep.subr.bf16.mxu0 0
    %1320 = vmatpush1.bf16.msra.mxu0 0
    %1321 = vmatprep.subr.bf16.mxu0 0
    %1322 = vmatpush1.bf16.msra.mxu0 0
    %1323 = vmatprep.mubr.bf16.mxu0 0
    %1324 = vmatmul.mubr.bf16.gmra.mrb[0].mxu0 %v1286
    %v1325 = vpop.f32.mrb[0].mxu0
    %v1326 = vadd.f32 0.0, %v1325
    %v1327 = vpop.f32.mrb[0].mxu0
    %v1328 = vpop.f32.mrb[0].mxu0
    %v1329 = vpop.f32.mrb[0].mxu0
    %1330 = vdwg.mxu0
    %1331 = vrot.lane.b32.xlu0 %v1222, 96
    %v1332 = vpop.permute.xlu0 %1331
    %1333 = vrot.lane.b32.xlu0 %v1223, 96
    %v1334 = vpop.permute.xlu0 %1333
    %v1336 = vsel %vm757, %v1332, 0
    %v1339 = vsel %vm757, %v1334, 0
    %1341 = vmatprep.subr.bf16.mxu0 0
    %1342 = vmatpush1.bf16.xpose.msra.mxu0 %v1339
    %1343 = vmatprep.subr.bf16.mxu0 0
    %1344 = vmatpush1.bf16.xpose.msra.mxu0 0
    %1345 = vmatprep.subr.bf16.mxu0 0
    %1346 = vmatpush1.bf16.xpose.msra.mxu0 0
    %1347 = vmatprep.subr.bf16.mxu0 0
    %1348 = vmatpush1.bf16.xpose.msra.mxu0 0
    %1349 = vmatprep.subr.bf16.mxu0 0
    %1350 = vmatpush1.bf16.xpose.msra.mxu0 0
    %1351 = vmatprep.subr.bf16.mxu0 0
    %1352 = vmatpush1.bf16.xpose.msra.mxu0 0
    %1353 = vmatprep.subr.bf16.mxu0 0
    %1354 = vmatpush1.bf16.xpose.msra.mxu0 0
    %1355 = vmatprep.subr.bf16.mxu0 0
    %1356 = vmatpush1.bf16.xpose.msra.mxu0 0
    %1357 = vmatprep.subr.bf16.mxu0 0
    %1358 = vmatpush1.bf16.xpose.msra.mxu0 0
    %1359 = vmatprep.subr.bf16.mxu0 0
    %1360 = vmatpush1.bf16.xpose.msra.mxu0 0
    %1361 = vmatprep.subr.bf16.mxu0 0
    %1362 = vmatpush1.bf16.xpose.msra.mxu0 0
    %1363 = vmatprep.subr.bf16.mxu0 0
    %1364 = vmatpush1.bf16.xpose.msra.mxu0 0
    %1365 = vmatprep.subr.bf16.mxu0 0
    %1366 = vmatpush1.bf16.xpose.msra.mxu0 0
    %1367 = vmatprep.subr.bf16.mxu0 0
    %1368 = vmatpush1.bf16.xpose.msra.mxu0 0
    %1369 = vmatprep.subr.bf16.mxu0 0
    %1370 = vmatpush1.bf16.xpose.msra.mxu0 0
    %1371 = vmatprep.subr.bf16.mxu0 0
    %1372 = vmatpush1.bf16.xpose.msra.mxu0 0
    %1373 = vmatprep.mubr.bf16.mxu0 0
    %1374 = vmatmul.mubr.bf16.gmra.mrb[0].mxu0 %v1336
    %v1375 = vpop.f32.mrb[0].mxu0
    %v1376 = vadd.f32 0.0, %v1375
    %v1377 = vpop.f32.mrb[0].mxu0
    %v1378 = vpop.f32.mrb[0].mxu0
    %v1379 = vpop.f32.mrb[0].mxu0
    %1380 = vdwg.mxu0
    %v1381 = vmul.f32 %v1376, 0.17677669
    %v1382 = vsel %vm454, %v1381, -1e+30
    %v1383 = vsel %vm806, %v1382, -inf
    %1384 = vmax.xlane.f32.xlu0 %v1383
    %v1385 = vpop.xlane.xlu0 %1384
    %v1386 = vsub.f32 %v1382, %v1385
    %v1387 = vmul.f32 %v1386, 1.442695
    %v1388 = vpow.pop %v1387
    %v1389 = vsel %vm806, %v1388, 0.0
    %1390 = vadd.xlane.f32.xlu0 %v1389
    %v1391 = vpop.xlane.xlu0 %1390
    %v1392 = vrcp.pop %v1391
    %v1393 = vmul.f32 %v1388, %v1392
    %v1394 = vpack.c.bf16 %v1393, %v1393
    %1395 = vrot.lane.b32.xlu0 %v1284, 96
    %v1396 = vpop.permute.xlu0 %1395
    %v1398 = vsel %vm806, %v1394, 0
    %v1401 = vsel %vm822, %v1396, 0
    %1403 = vmatprep.subr.bf16.mxu0 0
    %1404 = vmatpush1.bf16.msra.mxu0 %v1401
    %1405 = vmatprep.subr.bf16.mxu0 0
    %1406 = vmatpush1.bf16.msra.mxu0 0
    %1407 = vmatprep.subr.bf16.mxu0 0
    %1408 = vmatpush1.bf16.msra.mxu0 0
    %1409 = vmatprep.subr.bf16.mxu0 0
    %1410 = vmatpush1.bf16.msra.mxu0 0
    %1411 = vmatprep.subr.bf16.mxu0 0
    %1412 = vmatpush1.bf16.msra.mxu0 0
    %1413 = vmatprep.subr.bf16.mxu0 0
    %1414 = vmatpush1.bf16.msra.mxu0 0
    %1415 = vmatprep.subr.bf16.mxu0 0
    %1416 = vmatpush1.bf16.msra.mxu0 0
    %1417 = vmatprep.subr.bf16.mxu0 0
    %1418 = vmatpush1.bf16.msra.mxu0 0
    %1419 = vmatprep.subr.bf16.mxu0 0
    %1420 = vmatpush1.bf16.msra.mxu0 0
    %1421 = vmatprep.subr.bf16.mxu0 0
    %1422 = vmatpush1.bf16.msra.mxu0 0
    %1423 = vmatprep.subr.bf16.mxu0 0
    %1424 = vmatpush1.bf16.msra.mxu0 0
    %1425 = vmatprep.subr.bf16.mxu0 0
    %1426 = vmatpush1.bf16.msra.mxu0 0
    %1427 = vmatprep.subr.bf16.mxu0 0
    %1428 = vmatpush1.bf16.msra.mxu0 0
    %1429 = vmatprep.subr.bf16.mxu0 0
    %1430 = vmatpush1.bf16.msra.mxu0 0
    %1431 = vmatprep.subr.bf16.mxu0 0
    %1432 = vmatpush1.bf16.msra.mxu0 0
    %1433 = vmatprep.subr.bf16.mxu0 0
    %1434 = vmatpush1.bf16.msra.mxu0 0
    %1435 = vmatprep.mubr.bf16.mxu0 0
    %1436 = vmatmul.mubr.bf16.gmra.mrb[0].mxu0 %v1398
    %v1437 = vpop.f32.mrb[0].mxu0
    %v1438 = vadd.f32 0.0, %v1437
    %v1439 = vpop.f32.mrb[0].mxu0
    %v1440 = vpop.f32.mrb[0].mxu0
    %v1441 = vpop.f32.mrb[0].mxu0
    %1442 = vdwg.mxu0
    %1443 = vrot.lane.b32.xlu0 %v1222, 64
    %v1444 = vpop.permute.xlu0 %1443
    %1445 = vrot.lane.b32.xlu0 %v1223, 64
    %v1446 = vpop.permute.xlu0 %1445
    %v1448 = vsel %vm757, %v1444, 0
    %v1451 = vsel %vm757, %v1446, 0
    %1453 = vmatprep.subr.bf16.mxu0 0
    %1454 = vmatpush1.bf16.xpose.msra.mxu0 %v1451
    %1455 = vmatprep.subr.bf16.mxu0 0
    %1456 = vmatpush1.bf16.xpose.msra.mxu0 0
    %1457 = vmatprep.subr.bf16.mxu0 0
    %1458 = vmatpush1.bf16.xpose.msra.mxu0 0
    %1459 = vmatprep.subr.bf16.mxu0 0
    %1460 = vmatpush1.bf16.xpose.msra.mxu0 0
    %1461 = vmatprep.subr.bf16.mxu0 0
    %1462 = vmatpush1.bf16.xpose.msra.mxu0 0
    %1463 = vmatprep.subr.bf16.mxu0 0
    %1464 = vmatpush1.bf16.xpose.msra.mxu0 0
    %1465 = vmatprep.subr.bf16.mxu0 0
    %1466 = vmatpush1.bf16.xpose.msra.mxu0 0
    %1467 = vmatprep.subr.bf16.mxu0 0
    %1468 = vmatpush1.bf16.xpose.msra.mxu0 0
    %1469 = vmatprep.subr.bf16.mxu0 0
    %1470 = vmatpush1.bf16.xpose.msra.mxu0 0
    %1471 = vmatprep.subr.bf16.mxu0 0
    %1472 = vmatpush1.bf16.xpose.msra.mxu0 0
    %1473 = vmatprep.subr.bf16.mxu0 0
    %1474 = vmatpush1.bf16.xpose.msra.mxu0 0
    %1475 = vmatprep.subr.bf16.mxu0 0
    %1476 = vmatpush1.bf16.xpose.msra.mxu0 0
    %1477 = vmatprep.subr.bf16.mxu0 0
    %1478 = vmatpush1.bf16.xpose.msra.mxu0 0
    %1479 = vmatprep.subr.bf16.mxu0 0
    %1480 = vmatpush1.bf16.xpose.msra.mxu0 0
    %1481 = vmatprep.subr.bf16.mxu0 0
    %1482 = vmatpush1.bf16.xpose.msra.mxu0 0
    %1483 = vmatprep.subr.bf16.mxu0 0
    %1484 = vmatpush1.bf16.xpose.msra.mxu0 0
    %1485 = vmatprep.mubr.bf16.mxu0 0
    %1486 = vmatmul.mubr.bf16.gmra.mrb[0].mxu0 %v1448
    %v1487 = vpop.f32.mrb[0].mxu0
    %v1488 = vadd.f32 0.0, %v1487
    %v1489 = vpop.f32.mrb[0].mxu0
    %v1490 = vpop.f32.mrb[0].mxu0
    %v1491 = vpop.f32.mrb[0].mxu0
    %1492 = vdwg.mxu0
    %v1493 = vmul.f32 %v1488, 0.17677669
    %v1494 = vsel %vm454, %v1493, -1e+30
    %v1495 = vsel %vm806, %v1494, -inf
    %1496 = vmax.xlane.f32.xlu0 %v1495
    %v1497 = vpop.xlane.xlu0 %1496
    %v1498 = vsub.f32 %v1494, %v1497
    %v1499 = vmul.f32 %v1498, 1.442695
    %v1500 = vpow.pop %v1499
    %v1501 = vsel %vm806, %v1500, 0.0
    %1502 = vadd.xlane.f32.xlu0 %v1501
    %v1503 = vpop.xlane.xlu0 %1502
    %v1504 = vrcp.pop %v1503
    %v1505 = vmul.f32 %v1500, %v1504
    %v1506 = vpack.c.bf16 %v1505, %v1505
    %1507 = vrot.lane.b32.xlu0 %v1284, 64
    %v1508 = vpop.permute.xlu0 %1507
    %v1510 = vsel %vm806, %v1506, 0
    %v1513 = vsel %vm822, %v1508, 0
    %1515 = vmatprep.subr.bf16.mxu0 0
    %1516 = vmatpush1.bf16.msra.mxu0 %v1513
    %1517 = vmatprep.subr.bf16.mxu0 0
    %1518 = vmatpush1.bf16.msra.mxu0 0
    %1519 = vmatprep.subr.bf16.mxu0 0
    %1520 = vmatpush1.bf16.msra.mxu0 0
    %1521 = vmatprep.subr.bf16.mxu0 0
    %1522 = vmatpush1.bf16.msra.mxu0 0
    %1523 = vmatprep.subr.bf16.mxu0 0
    %1524 = vmatpush1.bf16.msra.mxu0 0
    %1525 = vmatprep.subr.bf16.mxu0 0
    %1526 = vmatpush1.bf16.msra.mxu0 0
    %1527 = vmatprep.subr.bf16.mxu0 0
    %1528 = vmatpush1.bf16.msra.mxu0 0
    %1529 = vmatprep.subr.bf16.mxu0 0
    %1530 = vmatpush1.bf16.msra.mxu0 0
    %1531 = vmatprep.subr.bf16.mxu0 0
    %1532 = vmatpush1.bf16.msra.mxu0 0
    %1533 = vmatprep.subr.bf16.mxu0 0
    %1534 = vmatpush1.bf16.msra.mxu0 0
    %1535 = vmatprep.subr.bf16.mxu0 0
    %1536 = vmatpush1.bf16.msra.mxu0 0
    %1537 = vmatprep.subr.bf16.mxu0 0
    %1538 = vmatpush1.bf16.msra.mxu0 0
    %1539 = vmatprep.subr.bf16.mxu0 0
    %1540 = vmatpush1.bf16.msra.mxu0 0
    %1541 = vmatprep.subr.bf16.mxu0 0
    %1542 = vmatpush1.bf16.msra.mxu0 0
    %1543 = vmatprep.subr.bf16.mxu0 0
    %1544 = vmatpush1.bf16.msra.mxu0 0
    %1545 = vmatprep.subr.bf16.mxu0 0
    %1546 = vmatpush1.bf16.msra.mxu0 0
    %1547 = vmatprep.mubr.bf16.mxu0 0
    %1548 = vmatmul.mubr.bf16.gmra.mrb[0].mxu0 %v1510
    %v1549 = vpop.f32.mrb[0].mxu0
    %v1550 = vadd.f32 0.0, %v1549
    %v1551 = vpop.f32.mrb[0].mxu0
    %v1552 = vpop.f32.mrb[0].mxu0
    %v1553 = vpop.f32.mrb[0].mxu0
    %1554 = vdwg.mxu0
    %1555 = vrot.lane.b32.xlu0 %v1222, 32
    %v1556 = vpop.permute.xlu0 %1555
    %1557 = vrot.lane.b32.xlu0 %v1223, 32
    %v1558 = vpop.permute.xlu0 %1557
    %v1560 = vsel %vm757, %v1556, 0
    %v1563 = vsel %vm757, %v1558, 0
    %1565 = vmatprep.subr.bf16.mxu0 0
    %1566 = vmatpush1.bf16.xpose.msra.mxu0 %v1563
    %1567 = vmatprep.subr.bf16.mxu0 0
    %1568 = vmatpush1.bf16.xpose.msra.mxu0 0
    %1569 = vmatprep.subr.bf16.mxu0 0
    %1570 = vmatpush1.bf16.xpose.msra.mxu0 0
    %1571 = vmatprep.subr.bf16.mxu0 0
    %1572 = vmatpush1.bf16.xpose.msra.mxu0 0
    %1573 = vmatprep.subr.bf16.mxu0 0
    %1574 = vmatpush1.bf16.xpose.msra.mxu0 0
    %1575 = vmatprep.subr.bf16.mxu0 0
    %1576 = vmatpush1.bf16.xpose.msra.mxu0 0
    %1577 = vmatprep.subr.bf16.mxu0 0
    %1578 = vmatpush1.bf16.xpose.msra.mxu0 0
    %1579 = vmatprep.subr.bf16.mxu0 0
    %1580 = vmatpush1.bf16.xpose.msra.mxu0 0
    %1581 = vmatprep.subr.bf16.mxu0 0
    %1582 = vmatpush1.bf16.xpose.msra.mxu0 0
    %1583 = vmatprep.subr.bf16.mxu0 0
    %1584 = vmatpush1.bf16.xpose.msra.mxu0 0
    %1585 = vmatprep.subr.bf16.mxu0 0
    %1586 = vmatpush1.bf16.xpose.msra.mxu0 0
    %1587 = vmatprep.subr.bf16.mxu0 0
    %1588 = vmatpush1.bf16.xpose.msra.mxu0 0
    %1589 = vmatprep.subr.bf16.mxu0 0
    %1590 = vmatpush1.bf16.xpose.msra.mxu0 0
    %1591 = vmatprep.subr.bf16.mxu0 0
    %1592 = vmatpush1.bf16.xpose.msra.mxu0 0
    %1593 = vmatprep.subr.bf16.mxu0 0
    %1594 = vmatpush1.bf16.xpose.msra.mxu0 0
    %1595 = vmatprep.subr.bf16.mxu0 0
    %1596 = vmatpush1.bf16.xpose.msra.mxu0 0
    %1597 = vmatprep.mubr.bf16.mxu0 0
    %1598 = vmatmul.mubr.bf16.gmra.mrb[0].mxu0 %v1560
    %v1599 = vpop.f32.mrb[0].mxu0
    %v1600 = vadd.f32 0.0, %v1599
    %v1601 = vpop.f32.mrb[0].mxu0
    %v1602 = vpop.f32.mrb[0].mxu0
    %v1603 = vpop.f32.mrb[0].mxu0
    %1604 = vdwg.mxu0
    %v1605 = vmul.f32 %v1600, 0.17677669
    %v1606 = vsel %vm454, %v1605, -1e+30
    %v1607 = vsel %vm806, %v1606, -inf
    %1608 = vmax.xlane.f32.xlu0 %v1607
    %v1609 = vpop.xlane.xlu0 %1608
    %v1610 = vsub.f32 %v1606, %v1609
    %v1611 = vmul.f32 %v1610, 1.442695
    %v1612 = vpow.pop %v1611
    %v1613 = vsel %vm806, %v1612, 0.0
    %1614 = vadd.xlane.f32.xlu0 %v1613
    %v1615 = vpop.xlane.xlu0 %1614
    %v1616 = vrcp.pop %v1615
    %v1617 = vmul.f32 %v1612, %v1616
    %v1618 = vpack.c.bf16 %v1617, %v1617
    %1619 = vrot.lane.b32.xlu0 %v1284, 32
    %v1620 = vpop.permute.xlu0 %1619
    %v1622 = vsel %vm806, %v1618, 0
    %v1625 = vsel %vm822, %v1620, 0
    %1627 = vmatprep.subr.bf16.mxu0 0
    %1628 = vmatpush1.bf16.msra.mxu0 %v1625
    %1629 = vmatprep.subr.bf16.mxu0 0
    %1630 = vmatpush1.bf16.msra.mxu0 0
    %1631 = vmatprep.subr.bf16.mxu0 0
    %1632 = vmatpush1.bf16.msra.mxu0 0
    %1633 = vmatprep.subr.bf16.mxu0 0
    %1634 = vmatpush1.bf16.msra.mxu0 0
    %1635 = vmatprep.subr.bf16.mxu0 0
    %1636 = vmatpush1.bf16.msra.mxu0 0
    %1637 = vmatprep.subr.bf16.mxu0 0
    %1638 = vmatpush1.bf16.msra.mxu0 0
    %1639 = vmatprep.subr.bf16.mxu0 0
    %1640 = vmatpush1.bf16.msra.mxu0 0
    %1641 = vmatprep.subr.bf16.mxu0 0
    %1642 = vmatpush1.bf16.msra.mxu0 0
    %1643 = vmatprep.subr.bf16.mxu0 0
    %1644 = vmatpush1.bf16.msra.mxu0 0
    %1645 = vmatprep.subr.bf16.mxu0 0
    %1646 = vmatpush1.bf16.msra.mxu0 0
    %1647 = vmatprep.subr.bf16.mxu0 0
    %1648 = vmatpush1.bf16.msra.mxu0 0
    %1649 = vmatprep.subr.bf16.mxu0 0
    %1650 = vmatpush1.bf16.msra.mxu0 0
    %1651 = vmatprep.subr.bf16.mxu0 0
    %1652 = vmatpush1.bf16.msra.mxu0 0
    %1653 = vmatprep.subr.bf16.mxu0 0
    %1654 = vmatpush1.bf16.msra.mxu0 0
    %1655 = vmatprep.subr.bf16.mxu0 0
    %1656 = vmatpush1.bf16.msra.mxu0 0
    %1657 = vmatprep.subr.bf16.mxu0 0
    %1658 = vmatpush1.bf16.msra.mxu0 0
    %1659 = vmatprep.mubr.bf16.mxu0 0
    %1660 = vmatmul.mubr.bf16.gmra.mrb[0].mxu0 %v1622
    %v1661 = vpop.f32.mrb[0].mxu0
    %v1662 = vadd.f32 0.0, %v1661
    %v1663 = vpop.f32.mrb[0].mxu0
    %v1664 = vpop.f32.mrb[0].mxu0
    %v1665 = vpop.f32.mrb[0].mxu0
    %1666 = vdwg.mxu0
    %1668 = vrot.lane.b32.xlu0 %v1438, 32
    %v1669 = vpop.permute.xlu0 %1668
    %1672 = vrot.lane.b32.xlu0 %v1550, 64
    %v1673 = vpop.permute.xlu0 %1672
    %1676 = vrot.lane.b32.xlu0 %v1662, 96
    %v1677 = vpop.permute.xlu0 %1676
    %v1679 = vsel %vm757, %v1326, %v1669
    %v1680 = vsel %vm1218, %v1679, %v1673
    %v1681 = vsel %vm1220, %v1680, %v1677
    %v1682 = vpack.c.bf16 %v1681, %v1221
    %v1683 = vld [vmem:[#allocation6] sm:$0xf]
    %v1684 = vld [vmem:[#allocation6 + $0x4] sm:$0xf]
    %v1685 = vld [vmem:[#allocation6 + $0x8] sm:$0xf]
    %v1686 = vld [vmem:[#allocation6 + $0xc] sm:$0xf]
    %v1687 = vld [vmem:[#allocation6 + $0x10] sm:$0xf]
    %v1688 = vld [vmem:[#allocation6 + $0x14] sm:$0xf]
    %v1689 = vld [vmem:[#allocation6 + $0x18] sm:$0xf]
    %v1690 = vld [vmem:[#allocation6 + $0x1c] sm:$0xf]
    %v1691 = vld [vmem:[#allocation6 + $0x20] sm:$0xf]
    %v1692 = vld [vmem:[#allocation6 + $0x24] sm:$0xf]
    %v1693 = vld [vmem:[#allocation6 + $0x28] sm:$0xf]
    %v1694 = vld [vmem:[#allocation6 + $0x2c] sm:$0xf]
    %v1695 = vld [vmem:[#allocation6 + $0x30] sm:$0xf]
    %v1696 = vld [vmem:[#allocation6 + $0x34] sm:$0xf]
    %v1697 = vld [vmem:[#allocation6 + $0x38] sm:$0xf]
    %v1698 = vld [vmem:[#allocation6 + $0x3c] sm:$0xf]
    %v1699 = vld [vmem:[%s8] sm:$0x1]
    %v1700 = vlaneseq
    %v1701 = vshrl.u32 %v1700, 7
    %v1702 = vsub.s32 0, %v1701
    %v1703 = vrot.slane %v1699, %v1702
    %v1720 = vunpack.c.l.b16 %v1683
    %v1721 = vunpack.c.l.b16 %v1684
    %v1722 = vunpack.c.l.b16 %v1685
    %v1723 = vunpack.c.l.b16 %v1686
    %v1724 = vunpack.c.l.b16 %v1687
    %v1725 = vunpack.c.l.b16 %v1688
    %v1726 = vunpack.c.l.b16 %v1689
    %v1727 = vunpack.c.l.b16 %v1690
    %v1728 = vunpack.c.l.b16 %v1691
    %v1729 = vunpack.c.l.b16 %v1692
    %v1730 = vunpack.c.l.b16 %v1693
    %v1731 = vunpack.c.l.b16 %v1694
    %v1732 = vunpack.c.l.b16 %v1695
    %v1733 = vunpack.c.l.b16 %v1696
    %v1734 = vunpack.c.l.b16 %v1697
    %v1735 = vunpack.c.l.b16 %v1698
    %v1736 = vpack.c.b16 %v1721, %v1720
    %v1737 = vpack.c.b16 %v1723, %v1722
    %v1738 = vpack.c.b16 %v1725, %v1724
    %v1739 = vpack.c.b16 %v1727, %v1726
    %v1740 = vpack.c.b16 %v1729, %v1728
    %v1741 = vpack.c.b16 %v1731, %v1730
    %v1742 = vpack.c.b16 %v1733, %v1732
    %v1743 = vpack.c.b16 %v1735, %v1734
    %1752 = vmatprep.subr.bf16.mxu0 0
    %1753 = vmatpush1.bf16.msra.mxu0 %v1736
    %1754 = vmatprep.subr.bf16.mxu0 0
    %1755 = vmatpush1.bf16.msra.mxu0 %v1737
    %1756 = vmatprep.subr.bf16.mxu0 0
    %1757 = vmatpush1.bf16.msra.mxu0 %v1738
    %1758 = vmatprep.subr.bf16.mxu0 0
    %1759 = vmatpush1.bf16.msra.mxu0 %v1739
    %1760 = vmatprep.subr.bf16.mxu0 0
    %1761 = vmatpush1.bf16.msra.mxu0 %v1740
    %1762 = vmatprep.subr.bf16.mxu0 0
    %1763 = vmatpush1.bf16.msra.mxu0 %v1741
    %1764 = vmatprep.subr.bf16.mxu0 0
    %1765 = vmatpush1.bf16.msra.mxu0 %v1742
    %1766 = vmatprep.subr.bf16.mxu0 0
    %1767 = vmatpush1.bf16.msra.mxu0 %v1743
    %1768 = vmatprep.subr.bf16.mxu0 0
    %1769 = vmatpush1.bf16.msra.mxu0 0
    %1770 = vmatprep.subr.bf16.mxu0 0
    %1771 = vmatpush1.bf16.msra.mxu0 0
    %1772 = vmatprep.subr.bf16.mxu0 0
    %1773 = vmatpush1.bf16.msra.mxu0 0
    %1774 = vmatprep.subr.bf16.mxu0 0
    %1775 = vmatpush1.bf16.msra.mxu0 0
    %1776 = vmatprep.subr.bf16.mxu0 0
    %1777 = vmatpush1.bf16.msra.mxu0 0
    %1778 = vmatprep.subr.bf16.mxu0 0
    %1779 = vmatpush1.bf16.msra.mxu0 0
    %1780 = vmatprep.subr.bf16.mxu0 0
    %1781 = vmatpush1.bf16.msra.mxu0 0
    %1782 = vmatprep.subr.bf16.mxu0 0
    %1783 = vmatpush1.bf16.msra.mxu0 0
    %1784 = vmatprep.mubr.bf16.mxu0 0
    %1785 = vmatmul.mubr.bf16.gmra.mrb[0].mxu0 %v1682
    %v1786 = vpop.f32.mrb[0].mxu0
    %v1787 = vadd.f32 %v1703, %v1786
    %v1788 = vpop.f32.mrb[0].mxu0
    %v1789 = vpop.f32.mrb[0].mxu0
    %v1790 = vadd.f32 %v1703, %v1789
    %v1791 = vpop.f32.mrb[0].mxu0
    %1792 = vdwg.mxu0
    %v1793 = vadd.f32 %v446, %v1787
    %v1794 = vadd.f32 %v449, %v1790
    %v1795 = vld [vmem:[%s3 + $0x1] sm:$0x1]
    %v1796 = vld [vmem:[%s4 + $0x1] sm:$0x1]
    %1797 = vadd.xlane.f32.xlu0 %v1793
    %v1798 = vpop.xlane.xlu0 %1797
    %1799 = vadd.xlane.f32.xlu0 %v1794
    %v1800 = vpop.xlane.xlu0 %1799
    %v1801 = vmul.f32 %v1798, %v461
    %v1802 = vmul.f32 %v1800, %v461
    %v1803 = vsub.f32 %v1793, %v1801
    %v1804 = vsub.f32 %v1794, %v1802
    %v1805 = vmul.f32 %v1803, %v1803
    %v1806 = vmul.f32 %v1804, %v1804
    %1807 = vadd.xlane.f32.xlu0 %v1805
    %v1808 = vpop.xlane.xlu0 %1807
    %1809 = vadd.xlane.f32.xlu0 %v1806
    %v1810 = vpop.xlane.xlu0 %1809
    %v1811 = vmul.f32 %v1808, %v461
    %v1812 = vmul.f32 %v1810, %v461
    %v1813 = vadd.f32 %v1811, 1e-05
    %v1814 = vadd.f32 %v1812, 1e-05
    %v1815 = vrsqrt.pop %v1813
    %v1816 = vrsqrt.pop %v1814
    %v1817 = vmul.f32 %v1803, %v1815
    %v1818 = vmul.f32 %v1804, %v1816
    %v1819 = vlaneseq
    %v1820 = vshrl.u32 %v1819, 7
    %v1821 = vsub.s32 0, %v1820
    %v1822 = vrot.slane %v1795, %v1821
    %v1823 = vmul.f32 %v1817, %v1822
    %v1824 = vmul.f32 %v1818, %v1822
    %v1825 = vlaneseq
    %v1826 = vshrl.u32 %v1825, 7
    %v1827 = vsub.s32 0, %v1826
    %v1828 = vrot.slane %v1796, %v1827
    %v1829 = vadd.f32 %v1823, %v1828
    %v1830 = vadd.f32 %v1824, %v1828
    %v1831 = vpack.c.bf16 %v1830, %v1829
    %s1832 = scalar_lea.vmem [#allocation4], 192
    %v1833 = vld [vmem:[%s1832] sm:$0xff]
    %v1834 = vld [vmem:[%s1832 + $0x8] sm:$0xf]
    %v1835 = vld [vmem:[%s1832 + $0xc] sm:$0xff]
    %v1836 = vld [vmem:[%s1832 + $0x14] sm:$0xf]
    %v1837 = vld [vmem:[%s1832 + $0x18] sm:$0xff]
    %v1838 = vld [vmem:[%s1832 + $0x20] sm:$0xf]
    %v1839 = vld [vmem:[%s1832 + $0x24] sm:$0xff]
    %v1840 = vld [vmem:[%s1832 + $0x2c] sm:$0xf]
    %v1841 = vld [vmem:[%s1832 + $0x30] sm:$0xff]
    %v1842 = vld [vmem:[%s1832 + $0x38] sm:$0xf]
    %v1843 = vld [vmem:[%s1832 + $0x3c] sm:$0xff]
    %v1844 = vld [vmem:[%s1832 + $0x44] sm:$0xf]
    %v1845 = vld [vmem:[%s1832 + $0x48] sm:$0xff]
    %v1846 = vld [vmem:[%s1832 + $0x50] sm:$0xf]
    %v1847 = vld [vmem:[%s1832 + $0x54] sm:$0xff]
    %v1848 = vld [vmem:[%s1832 + $0x5c] sm:$0xf]
    %v1849 = vld [vmem:[%s1832 + $0x60] sm:$0xff]
    %v1850 = vld [vmem:[%s1832 + $0x68] sm:$0xf]
    %v1851 = vld [vmem:[%s1832 + $0x6c] sm:$0xff]
    %v1852 = vld [vmem:[%s1832 + $0x74] sm:$0xf]
    %v1853 = vld [vmem:[%s1832 + $0x78] sm:$0xff]
    %v1854 = vld [vmem:[%s1832 + $0x80] sm:$0xf]
    %v1855 = vld [vmem:[%s1832 + $0x84] sm:$0xff]
    %v1856 = vld [vmem:[%s1832 + $0x8c] sm:$0xf]
    %v1857 = vld [vmem:[%s1832 + $0x90] sm:$0xff]
    %v1858 = vld [vmem:[%s1832 + $0x98] sm:$0xf]
    %v1859 = vld [vmem:[%s1832 + $0x9c] sm:$0xff]
    %v1860 = vld [vmem:[%s1832 + $0xa4] sm:$0xf]
    %v1861 = vld [vmem:[%s1832 + $0xa8] sm:$0xff]
    %v1862 = vld [vmem:[%s1832 + $0xb0] sm:$0xf]
    %v1863 = vld [vmem:[%s1832 + $0xb4] sm:$0xff]
    %v1864 = vld [vmem:[%s1832 + $0xbc] sm:$0xf]
    %s1865 = scalar_lea.vmem %s6, 1
    %v1866 = vld [vmem:[%s1865] ss:$2 sm:$0x7]
    %v1868 = vlaneseq
    %v1869 = vshrl.u32 %v1868, 7
    %v1870 = vsub.s32 0, %v1869
    %v1871 = vrot.slane %v1866, %v1870
    %v1872 = vlaneseq
    %v1873 = vshrl.u32 %v1872, 7
    %v1874 = vsub.s32 1, %v1873
    %v1875 = vrot.slane %v1866, %v1874
    %v1876 = vlaneseq
    %v1877 = vshrl.u32 %v1876, 7
    %v1878 = vsub.s32 2, %v1877
    %v1879 = vrot.slane %v1866, %v1878
    %v1915 = vunpack.c.l.b16 %v1833
    %v1916 = vunpack.c.h.b16 %v1833
    %v1917 = vunpack.c.l.b16 %v1834
    %v1918 = vunpack.c.l.b16 %v1835
    %v1919 = vunpack.c.h.b16 %v1835
    %v1920 = vunpack.c.l.b16 %v1836
    %v1921 = vunpack.c.l.b16 %v1837
    %v1922 = vunpack.c.h.b16 %v1837
    %v1923 = vunpack.c.l.b16 %v1838
    %v1924 = vunpack.c.l.b16 %v1839
    %v1925 = vunpack.c.h.b16 %v1839
    %v1926 = vunpack.c.l.b16 %v1840
    %v1927 = vunpack.c.l.b16 %v1841
    %v1928 = vunpack.c.h.b16 %v1841
    %v1929 = vunpack.c.l.b16 %v1842
    %v1930 = vunpack.c.l.b16 %v1843
    %v1931 = vunpack.c.h.b16 %v1843
    %v1932 = vunpack.c.l.b16 %v1844
    %v1933 = vunpack.c.l.b16 %v1845
    %v1934 = vunpack.c.h.b16 %v1845
    %v1935 = vunpack.c.l.b16 %v1846
    %v1936 = vunpack.c.l.b16 %v1847
    %v1937 = vunpack.c.h.b16 %v1847
    %v1938 = vunpack.c.l.b16 %v1848
    %v1939 = vunpack.c.l.b16 %v1849
    %v1940 = vunpack.c.h.b16 %v1849
    %v1941 = vunpack.c.l.b16 %v1850
    %v1942 = vunpack.c.l.b16 %v1851
    %v1943 = vunpack.c.h.b16 %v1851
    %v1944 = vunpack.c.l.b16 %v1852
    %v1945 = vunpack.c.l.b16 %v1853
    %v1946 = vunpack.c.h.b16 %v1853
    %v1947 = vunpack.c.l.b16 %v1854
    %v1948 = vunpack.c.l.b16 %v1855
    %v1949 = vunpack.c.h.b16 %v1855
    %v1950 = vunpack.c.l.b16 %v1856
    %v1951 = vunpack.c.l.b16 %v1857
    %v1952 = vunpack.c.h.b16 %v1857
    %v1953 = vunpack.c.l.b16 %v1858
    %v1954 = vunpack.c.l.b16 %v1859
    %v1955 = vunpack.c.h.b16 %v1859
    %v1956 = vunpack.c.l.b16 %v1860
    %v1957 = vunpack.c.l.b16 %v1861
    %v1958 = vunpack.c.h.b16 %v1861
    %v1959 = vunpack.c.l.b16 %v1862
    %v1960 = vunpack.c.l.b16 %v1863
    %v1961 = vunpack.c.h.b16 %v1863
    %v1962 = vunpack.c.l.b16 %v1864
    %v1963 = vpack.c.b16 %v1918, %v1915
    %v1964 = vpack.c.b16 %v1919, %v1916
    %v1965 = vpack.c.b16 %v1920, %v1917
    %v1966 = vpack.c.b16 %v1924, %v1921
    %v1967 = vpack.c.b16 %v1925, %v1922
    %v1968 = vpack.c.b16 %v1926, %v1923
    %v1969 = vpack.c.b16 %v1930, %v1927
    %v1970 = vpack.c.b16 %v1931, %v1928
    %v1971 = vpack.c.b16 %v1932, %v1929
    %v1972 = vpack.c.b16 %v1936, %v1933
    %v1973 = vpack.c.b16 %v1937, %v1934
    %v1974 = vpack.c.b16 %v1938, %v1935
    %v1975 = vpack.c.b16 %v1942, %v1939
    %v1976 = vpack.c.b16 %v1943, %v1940
    %v1977 = vpack.c.b16 %v1944, %v1941
    %v1978 = vpack.c.b16 %v1948, %v1945
    %v1979 = vpack.c.b16 %v1949, %v1946
    %v1980 = vpack.c.b16 %v1950, %v1947
    %v1981 = vpack.c.b16 %v1954, %v1951
    %v1982 = vpack.c.b16 %v1955, %v1952
    %v1983 = vpack.c.b16 %v1956, %v1953
    %v1984 = vpack.c.b16 %v1960, %v1957
    %v1985 = vpack.c.b16 %v1961, %v1958
    %v1986 = vpack.c.b16 %v1962, %v1959
    %2011 = vmatprep.subr.bf16.mxu0 %v1964
    %2012 = vmatpush1.bf16.msra.mxu0 %v1963
    %2013 = vmatprep.subr.bf16.mxu0 %v1967
    %2014 = vmatpush1.bf16.msra.mxu0 %v1966
    %2015 = vmatprep.subr.bf16.mxu0 %v1970
    %2016 = vmatpush1.bf16.msra.mxu0 %v1969
    %2017 = vmatprep.subr.bf16.mxu0 %v1973
    %2018 = vmatpush1.bf16.msra.mxu0 %v1972
    %2019 = vmatprep.subr.bf16.mxu0 %v1976
    %2020 = vmatpush1.bf16.msra.mxu0 %v1975
    %2021 = vmatprep.subr.bf16.mxu0 %v1979
    %2022 = vmatpush1.bf16.msra.mxu0 %v1978
    %2023 = vmatprep.subr.bf16.mxu0 %v1982
    %2024 = vmatpush1.bf16.msra.mxu0 %v1981
    %2025 = vmatprep.subr.bf16.mxu0 %v1985
    %2026 = vmatpush1.bf16.msra.mxu0 %v1984
    %2027 = vmatprep.subr.bf16.mxu0 0
    %2028 = vmatpush1.bf16.msra.mxu0 0
    %2029 = vmatprep.subr.bf16.mxu0 0
    %2030 = vmatpush1.bf16.msra.mxu0 0
    %2031 = vmatprep.subr.bf16.mxu0 0
    %2032 = vmatpush1.bf16.msra.mxu0 0
    %2033 = vmatprep.subr.bf16.mxu0 0
    %2034 = vmatpush1.bf16.msra.mxu0 0
    %2035 = vmatprep.subr.bf16.mxu0 0
    %2036 = vmatpush1.bf16.msra.mxu0 0
    %2037 = vmatprep.subr.bf16.mxu0 0
    %2038 = vmatpush1.bf16.msra.mxu0 0
    %2039 = vmatprep.subr.bf16.mxu0 0
    %2040 = vmatpush1.bf16.msra.mxu0 0
    %2041 = vmatprep.subr.bf16.mxu0 0
    %2042 = vmatpush1.bf16.msra.mxu0 0
    %2043 = vmatprep.mubr.bf16.mxu0 0
    %2044 = vmatmul.mubr.bf16.gmra.mrb[0].mxu0 %v1831
    %v2045 = vpop.f32.mrb[0].mxu0
    %v2046 = vadd.f32 %v1871, %v2045
    %v2047 = vpop.f32.mrb[0].mxu0
    %v2048 = vadd.f32 %v1875, %v2047
    %v2049 = vpop.f32.mrb[0].mxu0
    %v2050 = vadd.f32 %v1871, %v2049
    %v2051 = vpop.f32.mrb[0].mxu0
    %v2052 = vadd.f32 %v1875, %v2051
    %2053 = vdwg.mxu0
    %2054 = vmatprep.subr.bf16.mxu0 0
    %2055 = vmatpush1.bf16.msra.mxu0 %v1965
    %2056 = vmatprep.subr.bf16.mxu0 0
    %2057 = vmatpush1.bf16.msra.mxu0 %v1968
    %2058 = vmatprep.subr.bf16.mxu0 0
    %2059 = vmatpush1.bf16.msra.mxu0 %v1971
    %2060 = vmatprep.subr.bf16.mxu0 0
    %2061 = vmatpush1.bf16.msra.mxu0 %v1974
    %2062 = vmatprep.subr.bf16.mxu0 0
    %2063 = vmatpush1.bf16.msra.mxu0 %v1977
    %2064 = vmatprep.subr.bf16.mxu0 0
    %2065 = vmatpush1.bf16.msra.mxu0 %v1980
    %2066 = vmatprep.subr.bf16.mxu0 0
    %2067 = vmatpush1.bf16.msra.mxu0 %v1983
    %2068 = vmatprep.subr.bf16.mxu0 0
    %2069 = vmatpush1.bf16.msra.mxu0 %v1986
    %2070 = vmatprep.subr.bf16.mxu0 0
    %2071 = vmatpush1.bf16.msra.mxu0 0
    %2072 = vmatprep.subr.bf16.mxu0 0
    %2073 = vmatpush1.bf16.msra.mxu0 0
    %2074 = vmatprep.subr.bf16.mxu0 0
    %2075 = vmatpush1.bf16.msra.mxu0 0
    %2076 = vmatprep.subr.bf16.mxu0 0
    %2077 = vmatpush1.bf16.msra.mxu0 0
    %2078 = vmatprep.subr.bf16.mxu0 0
    %2079 = vmatpush1.bf16.msra.mxu0 0
    %2080 = vmatprep.subr.bf16.mxu0 0
    %2081 = vmatpush1.bf16.msra.mxu0 0
    %2082 = vmatprep.subr.bf16.mxu0 0
    %2083 = vmatpush1.bf16.msra.mxu0 0
    %2084 = vmatprep.subr.bf16.mxu0 0
    %2085 = vmatpush1.bf16.msra.mxu0 0
    %2086 = vmatprep.mubr.bf16.mxu0 0
    %2087 = vmatmul.mubr.bf16.gmra.mrb[0].mxu0 %v1831
    %v2088 = vpop.f32.mrb[0].mxu0
    %v2089 = vadd.f32 %v1879, %v2088
    %v2090 = vpop.f32.mrb[0].mxu0
    %v2091 = vpop.f32.mrb[0].mxu0
    %v2092 = vadd.f32 %v1879, %v2091
    %v2093 = vpop.f32.mrb[0].mxu0
    %2094 = vdwg.mxu0
    %v2095 = vpack.c.bf16 %v2050, %v2046
    %v2096 = vpack.c.bf16 %v2052, %v2048
    %v2097 = vpack.c.bf16 %v2092, %v2089
    %v2099 = vsel %vm757, %v2095, 0
    %v2102 = vsel %vm757, %v2096, 0
    %2104 = vmatprep.subr.bf16.mxu0 0
    %2105 = vmatpush1.bf16.xpose.msra.mxu0 %v2102
    %2106 = vmatprep.subr.bf16.mxu0 0
    %2107 = vmatpush1.bf16.xpose.msra.mxu0 0
    %2108 = vmatprep.subr.bf16.mxu0 0
    %2109 = vmatpush1.bf16.xpose.msra.mxu0 0
    %2110 = vmatprep.subr.bf16.mxu0 0
    %2111 = vmatpush1.bf16.xpose.msra.mxu0 0
    %2112 = vmatprep.subr.bf16.mxu0 0
    %2113 = vmatpush1.bf16.xpose.msra.mxu0 0
    %2114 = vmatprep.subr.bf16.mxu0 0
    %2115 = vmatpush1.bf16.xpose.msra.mxu0 0
    %2116 = vmatprep.subr.bf16.mxu0 0
    %2117 = vmatpush1.bf16.xpose.msra.mxu0 0
    %2118 = vmatprep.subr.bf16.mxu0 0
    %2119 = vmatpush1.bf16.xpose.msra.mxu0 0
    %2120 = vmatprep.subr.bf16.mxu0 0
    %2121 = vmatpush1.bf16.xpose.msra.mxu0 0
    %2122 = vmatprep.subr.bf16.mxu0 0
    %2123 = vmatpush1.bf16.xpose.msra.mxu0 0
    %2124 = vmatprep.subr.bf16.mxu0 0
    %2125 = vmatpush1.bf16.xpose.msra.mxu0 0
    %2126 = vmatprep.subr.bf16.mxu0 0
    %2127 = vmatpush1.bf16.xpose.msra.mxu0 0
    %2128 = vmatprep.subr.bf16.mxu0 0
    %2129 = vmatpush1.bf16.xpose.msra.mxu0 0
    %2130 = vmatprep.subr.bf16.mxu0 0
    %2131 = vmatpush1.bf16.xpose.msra.mxu0 0
    %2132 = vmatprep.subr.bf16.mxu0 0
    %2133 = vmatpush1.bf16.xpose.msra.mxu0 0
    %2134 = vmatprep.subr.bf16.mxu0 0
    %2135 = vmatpush1.bf16.xpose.msra.mxu0 0
    %2136 = vmatprep.mubr.bf16.mxu0 0
    %2137 = vmatmul.mubr.bf16.gmra.mrb[0].mxu0 %v2099
    %v2138 = vpop.f32.mrb[0].mxu0
    %v2139 = vadd.f32 0.0, %v2138
    %v2140 = vpop.f32.mrb[0].mxu0
    %v2141 = vpop.f32.mrb[0].mxu0
    %v2142 = vpop.f32.mrb[0].mxu0
    %2143 = vdwg.mxu0
    %v2144 = vmul.f32 %v2139, 0.17677669
    %v2145 = vsel %vm454, %v2144, -1e+30
    %v2146 = vsel %vm806, %v2145, -inf
    %2147 = vmax.xlane.f32.xlu0 %v2146
    %v2148 = vpop.xlane.xlu0 %2147
    %v2149 = vsub.f32 %v2145, %v2148
    %v2150 = vmul.f32 %v2149, 1.442695
    %v2151 = vpow.pop %v2150
    %v2152 = vsel %vm806, %v2151, 0.0
    %2153 = vadd.xlane.f32.xlu0 %v2152
    %v2154 = vpop.xlane.xlu0 %2153
    %v2155 = vrcp.pop %v2154
    %v2156 = vmul.f32 %v2151, %v2155
    %v2157 = vpack.c.bf16 %v2156, %v2156
    %v2159 = vsel %vm806, %v2157, 0
    %v2162 = vsel %vm822, %v2097, 0
    %2164 = vmatprep.subr.bf16.mxu0 0
    %2165 = vmatpush1.bf16.msra.mxu0 %v2162
    %2166 = vmatprep.subr.bf16.mxu0 0
    %2167 = vmatpush1.bf16.msra.mxu0 0
    %2168 = vmatprep.subr.bf16.mxu0 0
    %2169 = vmatpush1.bf16.msra.mxu0 0
    %2170 = vmatprep.subr.bf16.mxu0 0
    %2171 = vmatpush1.bf16.msra.mxu0 0
    %2172 = vmatprep.subr.bf16.mxu0 0
    %2173 = vmatpush1.bf16.msra.mxu0 0
    %2174 = vmatprep.subr.bf16.mxu0 0
    %2175 = vmatpush1.bf16.msra.mxu0 0
    %2176 = vmatprep.subr.bf16.mxu0 0
    %2177 = vmatpush1.bf16.msra.mxu0 0
    %2178 = vmatprep.subr.bf16.mxu0 0
    %2179 = vmatpush1.bf16.msra.mxu0 0
    %2180 = vmatprep.subr.bf16.mxu0 0
    %2181 = vmatpush1.bf16.msra.mxu0 0
    %2182 = vmatprep.subr.bf16.mxu0 0
    %2183 = vmatpush1.bf16.msra.mxu0 0
    %2184 = vmatprep.subr.bf16.mxu0 0
    %2185 = vmatpush1.bf16.msra.mxu0 0
    %2186 = vmatprep.subr.bf16.mxu0 0
    %2187 = vmatpush1.bf16.msra.mxu0 0
    %2188 = vmatprep.subr.bf16.mxu0 0
    %2189 = vmatpush1.bf16.msra.mxu0 0
    %2190 = vmatprep.subr.bf16.mxu0 0
    %2191 = vmatpush1.bf16.msra.mxu0 0
    %2192 = vmatprep.subr.bf16.mxu0 0
    %2193 = vmatpush1.bf16.msra.mxu0 0
    %2194 = vmatprep.subr.bf16.mxu0 0
    %2195 = vmatpush1.bf16.msra.mxu0 0
    %2196 = vmatprep.mubr.bf16.mxu0 0
    %2197 = vmatmul.mubr.bf16.gmra.mrb[0].mxu0 %v2159
    %v2198 = vpop.f32.mrb[0].mxu0
    %v2199 = vadd.f32 0.0, %v2198
    %v2200 = vpop.f32.mrb[0].mxu0
    %v2201 = vpop.f32.mrb[0].mxu0
    %v2202 = vpop.f32.mrb[0].mxu0
    %2203 = vdwg.mxu0
    %2205 = vrot.lane.b32.xlu0 %v2095, 96
    %v2206 = vpop.permute.xlu0 %2205
    %2208 = vrot.lane.b32.xlu0 %v2096, 96
    %v2209 = vpop.permute.xlu0 %2208
    %v2211 = vsel %vm757, %v2206, 0
    %v2214 = vsel %vm757, %v2209, 0
    %2216 = vmatprep.subr.bf16.mxu0 0
    %2217 = vmatpush1.bf16.xpose.msra.mxu0 %v2214
    %2218 = vmatprep.subr.bf16.mxu0 0
    %2219 = vmatpush1.bf16.xpose.msra.mxu0 0
    %2220 = vmatprep.subr.bf16.mxu0 0
    %2221 = vmatpush1.bf16.xpose.msra.mxu0 0
    %2222 = vmatprep.subr.bf16.mxu0 0
    %2223 = vmatpush1.bf16.xpose.msra.mxu0 0
    %2224 = vmatprep.subr.bf16.mxu0 0
    %2225 = vmatpush1.bf16.xpose.msra.mxu0 0
    %2226 = vmatprep.subr.bf16.mxu0 0
    %2227 = vmatpush1.bf16.xpose.msra.mxu0 0
    %2228 = vmatprep.subr.bf16.mxu0 0
    %2229 = vmatpush1.bf16.xpose.msra.mxu0 0
    %2230 = vmatprep.subr.bf16.mxu0 0
    %2231 = vmatpush1.bf16.xpose.msra.mxu0 0
    %2232 = vmatprep.subr.bf16.mxu0 0
    %2233 = vmatpush1.bf16.xpose.msra.mxu0 0
    %2234 = vmatprep.subr.bf16.mxu0 0
    %2235 = vmatpush1.bf16.xpose.msra.mxu0 0
    %2236 = vmatprep.subr.bf16.mxu0 0
    %2237 = vmatpush1.bf16.xpose.msra.mxu0 0
    %2238 = vmatprep.subr.bf16.mxu0 0
    %2239 = vmatpush1.bf16.xpose.msra.mxu0 0
    %2240 = vmatprep.subr.bf16.mxu0 0
    %2241 = vmatpush1.bf16.xpose.msra.mxu0 0
    %2242 = vmatprep.subr.bf16.mxu0 0
    %2243 = vmatpush1.bf16.xpose.msra.mxu0 0
    %2244 = vmatprep.subr.bf16.mxu0 0
    %2245 = vmatpush1.bf16.xpose.msra.mxu0 0
    %2246 = vmatprep.subr.bf16.mxu0 0
    %2247 = vmatpush1.bf16.xpose.msra.mxu0 0
    %2248 = vmatprep.mubr.bf16.mxu0 0
    %2249 = vmatmul.mubr.bf16.gmra.mrb[0].mxu0 %v2211
    %v2250 = vpop.f32.mrb[0].mxu0
    %v2251 = vadd.f32 0.0, %v2250
    %v2252 = vpop.f32.mrb[0].mxu0
    %v2253 = vpop.f32.mrb[0].mxu0
    %v2254 = vpop.f32.mrb[0].mxu0
    %2255 = vdwg.mxu0
    %v2256 = vmul.f32 %v2251, 0.17677669
    %v2257 = vsel %vm454, %v2256, -1e+30
    %v2258 = vsel %vm806, %v2257, -inf
    %2259 = vmax.xlane.f32.xlu0 %v2258
    %v2260 = vpop.xlane.xlu0 %2259
    %v2261 = vsub.f32 %v2257, %v2260
    %v2262 = vmul.f32 %v2261, 1.442695
    %v2263 = vpow.pop %v2262
    %v2264 = vsel %vm806, %v2263, 0.0
    %2265 = vadd.xlane.f32.xlu0 %v2264
    %v2266 = vpop.xlane.xlu0 %2265
    %v2267 = vrcp.pop %v2266
    %v2268 = vmul.f32 %v2263, %v2267
    %v2269 = vpack.c.bf16 %v2268, %v2268
    %2271 = vrot.lane.b32.xlu0 %v2097, 96
    %v2272 = vpop.permute.xlu0 %2271
    %v2274 = vsel %vm806, %v2269, 0
    %v2277 = vsel %vm822, %v2272, 0
    %2279 = vmatprep.subr.bf16.mxu0 0
    %2280 = vmatpush1.bf16.msra.mxu0 %v2277
    %2281 = vmatprep.subr.bf16.mxu0 0
    %2282 = vmatpush1.bf16.msra.mxu0 0
    %2283 = vmatprep.subr.bf16.mxu0 0
    %2284 = vmatpush1.bf16.msra.mxu0 0
    %2285 = vmatprep.subr.bf16.mxu0 0
    %2286 = vmatpush1.bf16.msra.mxu0 0
    %2287 = vmatprep.subr.bf16.mxu0 0
    %2288 = vmatpush1.bf16.msra.mxu0 0
    %2289 = vmatprep.subr.bf16.mxu0 0
    %2290 = vmatpush1.bf16.msra.mxu0 0
    %2291 = vmatprep.subr.bf16.mxu0 0
    %2292 = vmatpush1.bf16.msra.mxu0 0
    %2293 = vmatprep.subr.bf16.mxu0 0
    %2294 = vmatpush1.bf16.msra.mxu0 0
    %2295 = vmatprep.subr.bf16.mxu0 0
    %2296 = vmatpush1.bf16.msra.mxu0 0
    %2297 = vmatprep.subr.bf16.mxu0 0
    %2298 = vmatpush1.bf16.msra.mxu0 0
    %2299 = vmatprep.subr.bf16.mxu0 0
    %2300 = vmatpush1.bf16.msra.mxu0 0
    %2301 = vmatprep.subr.bf16.mxu0 0
    %2302 = vmatpush1.bf16.msra.mxu0 0
    %2303 = vmatprep.subr.bf16.mxu0 0
    %2304 = vmatpush1.bf16.msra.mxu0 0
    %2305 = vmatprep.subr.bf16.mxu0 0
    %2306 = vmatpush1.bf16.msra.mxu0 0
    %2307 = vmatprep.subr.bf16.mxu0 0
    %2308 = vmatpush1.bf16.msra.mxu0 0
    %2309 = vmatprep.subr.bf16.mxu0 0
    %2310 = vmatpush1.bf16.msra.mxu0 0
    %2311 = vmatprep.mubr.bf16.mxu0 0
    %2312 = vmatmul.mubr.bf16.gmra.mrb[0].mxu0 %v2274
    %v2313 = vpop.f32.mrb[0].mxu0
    %v2314 = vadd.f32 0.0, %v2313
    %v2315 = vpop.f32.mrb[0].mxu0
    %v2316 = vpop.f32.mrb[0].mxu0
    %v2317 = vpop.f32.mrb[0].mxu0
    %2318 = vdwg.mxu0
    %2319 = vrot.lane.b32.xlu0 %v2095, 64
    %v2320 = vpop.permute.xlu0 %2319
    %2321 = vrot.lane.b32.xlu0 %v2096, 64
    %v2322 = vpop.permute.xlu0 %2321
    %v2324 = vsel %vm757, %v2320, 0
    %v2327 = vsel %vm757, %v2322, 0
    %2329 = vmatprep.subr.bf16.mxu0 0
    %2330 = vmatpush1.bf16.xpose.msra.mxu0 %v2327
    %2331 = vmatprep.subr.bf16.mxu0 0
    %2332 = vmatpush1.bf16.xpose.msra.mxu0 0
    %2333 = vmatprep.subr.bf16.mxu0 0
    %2334 = vmatpush1.bf16.xpose.msra.mxu0 0
    %2335 = vmatprep.subr.bf16.mxu0 0
    %2336 = vmatpush1.bf16.xpose.msra.mxu0 0
    %2337 = vmatprep.subr.bf16.mxu0 0
    %2338 = vmatpush1.bf16.xpose.msra.mxu0 0
    %2339 = vmatprep.subr.bf16.mxu0 0
    %2340 = vmatpush1.bf16.xpose.msra.mxu0 0
    %2341 = vmatprep.subr.bf16.mxu0 0
    %2342 = vmatpush1.bf16.xpose.msra.mxu0 0
    %2343 = vmatprep.subr.bf16.mxu0 0
    %2344 = vmatpush1.bf16.xpose.msra.mxu0 0
    %2345 = vmatprep.subr.bf16.mxu0 0
    %2346 = vmatpush1.bf16.xpose.msra.mxu0 0
    %2347 = vmatprep.subr.bf16.mxu0 0
    %2348 = vmatpush1.bf16.xpose.msra.mxu0 0
    %2349 = vmatprep.subr.bf16.mxu0 0
    %2350 = vmatpush1.bf16.xpose.msra.mxu0 0
    %2351 = vmatprep.subr.bf16.mxu0 0
    %2352 = vmatpush1.bf16.xpose.msra.mxu0 0
    %2353 = vmatprep.subr.bf16.mxu0 0
    %2354 = vmatpush1.bf16.xpose.msra.mxu0 0
    %2355 = vmatprep.subr.bf16.mxu0 0
    %2356 = vmatpush1.bf16.xpose.msra.mxu0 0
    %2357 = vmatprep.subr.bf16.mxu0 0
    %2358 = vmatpush1.bf16.xpose.msra.mxu0 0
    %2359 = vmatprep.subr.bf16.mxu0 0
    %2360 = vmatpush1.bf16.xpose.msra.mxu0 0
    %2361 = vmatprep.mubr.bf16.mxu0 0
    %2362 = vmatmul.mubr.bf16.gmra.mrb[0].mxu0 %v2324
    %v2363 = vpop.f32.mrb[0].mxu0
    %v2364 = vadd.f32 0.0, %v2363
    %v2365 = vpop.f32.mrb[0].mxu0
    %v2366 = vpop.f32.mrb[0].mxu0
    %v2367 = vpop.f32.mrb[0].mxu0
    %2368 = vdwg.mxu0
    %v2369 = vmul.f32 %v2364, 0.17677669
    %v2370 = vsel %vm454, %v2369, -1e+30
    %v2371 = vsel %vm806, %v2370, -inf
    %2372 = vmax.xlane.f32.xlu0 %v2371
    %v2373 = vpop.xlane.xlu0 %2372
    %v2374 = vsub.f32 %v2370, %v2373
    %v2375 = vmul.f32 %v2374, 1.442695
    %v2376 = vpow.pop %v2375
    %v2377 = vsel %vm806, %v2376, 0.0
    %2378 = vadd.xlane.f32.xlu0 %v2377
    %v2379 = vpop.xlane.xlu0 %2378
    %v2380 = vrcp.pop %v2379
    %v2381 = vmul.f32 %v2376, %v2380
    %v2382 = vpack.c.bf16 %v2381, %v2381
    %2383 = vrot.lane.b32.xlu0 %v2097, 64
    %v2384 = vpop.permute.xlu0 %2383
    %v2386 = vsel %vm806, %v2382, 0
    %v2389 = vsel %vm822, %v2384, 0
    %2391 = vmatprep.subr.bf16.mxu0 0
    %2392 = vmatpush1.bf16.msra.mxu0 %v2389
    %2393 = vmatprep.subr.bf16.mxu0 0
    %2394 = vmatpush1.bf16.msra.mxu0 0
    %2395 = vmatprep.subr.bf16.mxu0 0
    %2396 = vmatpush1.bf16.msra.mxu0 0
    %2397 = vmatprep.subr.bf16.mxu0 0
    %2398 = vmatpush1.bf16.msra.mxu0 0
    %2399 = vmatprep.subr.bf16.mxu0 0
    %2400 = vmatpush1.bf16.msra.mxu0 0
    %2401 = vmatprep.subr.bf16.mxu0 0
    %2402 = vmatpush1.bf16.msra.mxu0 0
    %2403 = vmatprep.subr.bf16.mxu0 0
    %2404 = vmatpush1.bf16.msra.mxu0 0
    %2405 = vmatprep.subr.bf16.mxu0 0
    %2406 = vmatpush1.bf16.msra.mxu0 0
    %2407 = vmatprep.subr.bf16.mxu0 0
    %2408 = vmatpush1.bf16.msra.mxu0 0
    %2409 = vmatprep.subr.bf16.mxu0 0
    %2410 = vmatpush1.bf16.msra.mxu0 0
    %2411 = vmatprep.subr.bf16.mxu0 0
    %2412 = vmatpush1.bf16.msra.mxu0 0
    %2413 = vmatprep.subr.bf16.mxu0 0
    %2414 = vmatpush1.bf16.msra.mxu0 0
    %2415 = vmatprep.subr.bf16.mxu0 0
    %2416 = vmatpush1.bf16.msra.mxu0 0
    %2417 = vmatprep.subr.bf16.mxu0 0
    %2418 = vmatpush1.bf16.msra.mxu0 0
    %2419 = vmatprep.subr.bf16.mxu0 0
    %2420 = vmatpush1.bf16.msra.mxu0 0
    %2421 = vmatprep.subr.bf16.mxu0 0
    %2422 = vmatpush1.bf16.msra.mxu0 0
    %2423 = vmatprep.mubr.bf16.mxu0 0
    %2424 = vmatmul.mubr.bf16.gmra.mrb[0].mxu0 %v2386
    %v2425 = vpop.f32.mrb[0].mxu0
    %v2426 = vadd.f32 0.0, %v2425
    %v2427 = vpop.f32.mrb[0].mxu0
    %v2428 = vpop.f32.mrb[0].mxu0
    %v2429 = vpop.f32.mrb[0].mxu0
    %2430 = vdwg.mxu0
    %2431 = vrot.lane.b32.xlu0 %v2095, 32
    %v2432 = vpop.permute.xlu0 %2431
    %2433 = vrot.lane.b32.xlu0 %v2096, 32
    %v2434 = vpop.permute.xlu0 %2433
    %v2436 = vsel %vm757, %v2432, 0
    %v2439 = vsel %vm757, %v2434, 0
    %2441 = vmatprep.subr.bf16.mxu0 0
    %2442 = vmatpush1.bf16.xpose.msra.mxu0 %v2439
    %2443 = vmatprep.subr.bf16.mxu0 0
    %2444 = vmatpush1.bf16.xpose.msra.mxu0 0
    %2445 = vmatprep.subr.bf16.mxu0 0
    %2446 = vmatpush1.bf16.xpose.msra.mxu0 0
    %2447 = vmatprep.subr.bf16.mxu0 0
    %2448 = vmatpush1.bf16.xpose.msra.mxu0 0
    %2449 = vmatprep.subr.bf16.mxu0 0
    %2450 = vmatpush1.bf16.xpose.msra.mxu0 0
    %2451 = vmatprep.subr.bf16.mxu0 0
    %2452 = vmatpush1.bf16.xpose.msra.mxu0 0
    %2453 = vmatprep.subr.bf16.mxu0 0
    %2454 = vmatpush1.bf16.xpose.msra.mxu0 0
    %2455 = vmatprep.subr.bf16.mxu0 0
    %2456 = vmatpush1.bf16.xpose.msra.mxu0 0
    %2457 = vmatprep.subr.bf16.mxu0 0
    %2458 = vmatpush1.bf16.xpose.msra.mxu0 0
    %2459 = vmatprep.subr.bf16.mxu0 0
    %2460 = vmatpush1.bf16.xpose.msra.mxu0 0
    %2461 = vmatprep.subr.bf16.mxu0 0
    %2462 = vmatpush1.bf16.xpose.msra.mxu0 0
    %2463 = vmatprep.subr.bf16.mxu0 0
    %2464 = vmatpush1.bf16.xpose.msra.mxu0 0
    %2465 = vmatprep.subr.bf16.mxu0 0
    %2466 = vmatpush1.bf16.xpose.msra.mxu0 0
    %2467 = vmatprep.subr.bf16.mxu0 0
    %2468 = vmatpush1.bf16.xpose.msra.mxu0 0
    %2469 = vmatprep.subr.bf16.mxu0 0
    %2470 = vmatpush1.bf16.xpose.msra.mxu0 0
    %2471 = vmatprep.subr.bf16.mxu0 0
    %2472 = vmatpush1.bf16.xpose.msra.mxu0 0
    %2473 = vmatprep.mubr.bf16.mxu0 0
    %2474 = vmatmul.mubr.bf16.gmra.mrb[0].mxu0 %v2436
    %v2475 = vpop.f32.mrb[0].mxu0
    %v2476 = vadd.f32 0.0, %v2475
    %v2477 = vpop.f32.mrb[0].mxu0
    %v2478 = vpop.f32.mrb[0].mxu0
    %v2479 = vpop.f32.mrb[0].mxu0
    %2480 = vdwg.mxu0
    %v2481 = vmul.f32 %v2476, 0.17677669
    %v2482 = vsel %vm454, %v2481, -1e+30
    %v2483 = vsel %vm806, %v2482, -inf
    %2484 = vmax.xlane.f32.xlu0 %v2483
    %v2485 = vpop.xlane.xlu0 %2484
    %v2486 = vsub.f32 %v2482, %v2485
    %v2487 = vmul.f32 %v2486, 1.442695
    %v2488 = vpow.pop %v2487
    %v2489 = vsel %vm806, %v2488, 0.0
    %2490 = vadd.xlane.f32.xlu0 %v2489
    %v2491 = vpop.xlane.xlu0 %2490
    %v2492 = vrcp.pop %v2491
    %v2493 = vmul.f32 %v2488, %v2492
    %v2494 = vpack.c.bf16 %v2493, %v2493
    %2495 = vrot.lane.b32.xlu0 %v2097, 32
    %v2496 = vpop.permute.xlu0 %2495
    %v2498 = vsel %vm806, %v2494, 0
    %v2501 = vsel %vm822, %v2496, 0
    %2503 = vmatprep.subr.bf16.mxu0 0
    %2504 = vmatpush1.bf16.msra.mxu0 %v2501
    %2505 = vmatprep.subr.bf16.mxu0 0
    %2506 = vmatpush1.bf16.msra.mxu0 0
    %2507 = vmatprep.subr.bf16.mxu0 0
    %2508 = vmatpush1.bf16.msra.mxu0 0
    %2509 = vmatprep.subr.bf16.mxu0 0
    %2510 = vmatpush1.bf16.msra.mxu0 0
    %2511 = vmatprep.subr.bf16.mxu0 0
    %2512 = vmatpush1.bf16.msra.mxu0 0
    %2513 = vmatprep.subr.bf16.mxu0 0
    %2514 = vmatpush1.bf16.msra.mxu0 0
    %2515 = vmatprep.subr.bf16.mxu0 0
    %2516 = vmatpush1.bf16.msra.mxu0 0
    %2517 = vmatprep.subr.bf16.mxu0 0
    %2518 = vmatpush1.bf16.msra.mxu0 0
    %2519 = vmatprep.subr.bf16.mxu0 0
    %2520 = vmatpush1.bf16.msra.mxu0 0
    %2521 = vmatprep.subr.bf16.mxu0 0
    %2522 = vmatpush1.bf16.msra.mxu0 0
    %2523 = vmatprep.subr.bf16.mxu0 0
    %2524 = vmatpush1.bf16.msra.mxu0 0
    %2525 = vmatprep.subr.bf16.mxu0 0
    %2526 = vmatpush1.bf16.msra.mxu0 0
    %2527 = vmatprep.subr.bf16.mxu0 0
    %2528 = vmatpush1.bf16.msra.mxu0 0
    %2529 = vmatprep.subr.bf16.mxu0 0
    %2530 = vmatpush1.bf16.msra.mxu0 0
    %2531 = vmatprep.subr.bf16.mxu0 0
    %2532 = vmatpush1.bf16.msra.mxu0 0
    %2533 = vmatprep.subr.bf16.mxu0 0
    %2534 = vmatpush1.bf16.msra.mxu0 0
    %2535 = vmatprep.mubr.bf16.mxu0 0
    %2536 = vmatmul.mubr.bf16.gmra.mrb[0].mxu0 %v2498
    %v2537 = vpop.f32.mrb[0].mxu0
    %v2538 = vadd.f32 0.0, %v2537
    %v2539 = vpop.f32.mrb[0].mxu0
    %v2540 = vpop.f32.mrb[0].mxu0
    %v2541 = vpop.f32.mrb[0].mxu0
    %2542 = vdwg.mxu0
    %2544 = vrot.lane.b32.xlu0 %v2314, 32
    %v2545 = vpop.permute.xlu0 %2544
    %2548 = vrot.lane.b32.xlu0 %v2426, 64
    %v2549 = vpop.permute.xlu0 %2548
    %2552 = vrot.lane.b32.xlu0 %v2538, 96
    %v2553 = vpop.permute.xlu0 %2552
    %v2555 = vsel %vm757, %v2199, %v2545
    %v2556 = vsel %vm1218, %v2555, %v2549
    %v2557 = vsel %vm1220, %v2556, %v2553
    %v2558 = vrot.slane %v2095, 4
    %v2559 = vrot.slane %v2096, 4
    %v2561 = vsel %vm757, %v2558, 0
    %v2564 = vsel %vm757, %v2559, 0
    %2566 = vmatprep.subr.bf16.mxu0 0
    %2567 = vmatpush1.bf16.xpose.msra.mxu0 %v2564
    %2568 = vmatprep.subr.bf16.mxu0 0
    %2569 = vmatpush1.bf16.xpose.msra.mxu0 0
    %2570 = vmatprep.subr.bf16.mxu0 0
    %2571 = vmatpush1.bf16.xpose.msra.mxu0 0
    %2572 = vmatprep.subr.bf16.mxu0 0
    %2573 = vmatpush1.bf16.xpose.msra.mxu0 0
    %2574 = vmatprep.subr.bf16.mxu0 0
    %2575 = vmatpush1.bf16.xpose.msra.mxu0 0
    %2576 = vmatprep.subr.bf16.mxu0 0
    %2577 = vmatpush1.bf16.xpose.msra.mxu0 0
    %2578 = vmatprep.subr.bf16.mxu0 0
    %2579 = vmatpush1.bf16.xpose.msra.mxu0 0
    %2580 = vmatprep.subr.bf16.mxu0 0
    %2581 = vmatpush1.bf16.xpose.msra.mxu0 0
    %2582 = vmatprep.subr.bf16.mxu0 0
    %2583 = vmatpush1.bf16.xpose.msra.mxu0 0
    %2584 = vmatprep.subr.bf16.mxu0 0
    %2585 = vmatpush1.bf16.xpose.msra.mxu0 0
    %2586 = vmatprep.subr.bf16.mxu0 0
    %2587 = vmatpush1.bf16.xpose.msra.mxu0 0
    %2588 = vmatprep.subr.bf16.mxu0 0
    %2589 = vmatpush1.bf16.xpose.msra.mxu0 0
    %2590 = vmatprep.subr.bf16.mxu0 0
    %2591 = vmatpush1.bf16.xpose.msra.mxu0 0
    %2592 = vmatprep.subr.bf16.mxu0 0
    %2593 = vmatpush1.bf16.xpose.msra.mxu0 0
    %2594 = vmatprep.subr.bf16.mxu0 0
    %2595 = vmatpush1.bf16.xpose.msra.mxu0 0
    %2596 = vmatprep.subr.bf16.mxu0 0
    %2597 = vmatpush1.bf16.xpose.msra.mxu0 0
    %2598 = vmatprep.mubr.bf16.mxu0 0
    %2599 = vmatmul.mubr.bf16.gmra.mrb[0].mxu0 %v2561
    %v2600 = vpop.f32.mrb[0].mxu0
    %v2601 = vadd.f32 0.0, %v2600
    %v2602 = vpop.f32.mrb[0].mxu0
    %v2603 = vpop.f32.mrb[0].mxu0
    %v2604 = vpop.f32.mrb[0].mxu0
    %2605 = vdwg.mxu0
    %v2606 = vmul.f32 %v2601, 0.17677669
    %v2607 = vsel %vm454, %v2606, -1e+30
    %v2608 = vsel %vm806, %v2607, -inf
    %2609 = vmax.xlane.f32.xlu0 %v2608
    %v2610 = vpop.xlane.xlu0 %2609
    %v2611 = vsub.f32 %v2607, %v2610
    %v2612 = vmul.f32 %v2611, 1.442695
    %v2613 = vpow.pop %v2612
    %v2614 = vsel %vm806, %v2613, 0.0
    %2615 = vadd.xlane.f32.xlu0 %v2614
    %v2616 = vpop.xlane.xlu0 %2615
    %v2617 = vrcp.pop %v2616
    %v2618 = vmul.f32 %v2613, %v2617
    %v2619 = vpack.c.bf16 %v2618, %v2618
    %v2620 = vrot.slane %v2097, 4
    %v2622 = vsel %vm806, %v2619, 0
    %v2625 = vsel %vm822, %v2620, 0
    %2627 = vmatprep.subr.bf16.mxu0 0
    %2628 = vmatpush1.bf16.msra.mxu0 %v2625
    %2629 = vmatprep.subr.bf16.mxu0 0
    %2630 = vmatpush1.bf16.msra.mxu0 0
    %2631 = vmatprep.subr.bf16.mxu0 0
    %2632 = vmatpush1.bf16.msra.mxu0 0
    %2633 = vmatprep.subr.bf16.mxu0 0
    %2634 = vmatpush1.bf16.msra.mxu0 0
    %2635 = vmatprep.subr.bf16.mxu0 0
    %2636 = vmatpush1.bf16.msra.mxu0 0
    %2637 = vmatprep.subr.bf16.mxu0 0
    %2638 = vmatpush1.bf16.msra.mxu0 0
    %2639 = vmatprep.subr.bf16.mxu0 0
    %2640 = vmatpush1.bf16.msra.mxu0 0
    %2641 = vmatprep.subr.bf16.mxu0 0
    %2642 = vmatpush1.bf16.msra.mxu0 0
    %2643 = vmatprep.subr.bf16.mxu0 0
    %2644 = vmatpush1.bf16.msra.mxu0 0
    %2645 = vmatprep.subr.bf16.mxu0 0
    %2646 = vmatpush1.bf16.msra.mxu0 0
    %2647 = vmatprep.subr.bf16.mxu0 0
    %2648 = vmatpush1.bf16.msra.mxu0 0
    %2649 = vmatprep.subr.bf16.mxu0 0
    %2650 = vmatpush1.bf16.msra.mxu0 0
    %2651 = vmatprep.subr.bf16.mxu0 0
    %2652 = vmatpush1.bf16.msra.mxu0 0
    %2653 = vmatprep.subr.bf16.mxu0 0
    %2654 = vmatpush1.bf16.msra.mxu0 0
    %2655 = vmatprep.subr.bf16.mxu0 0
    %2656 = vmatpush1.bf16.msra.mxu0 0
    %2657 = vmatprep.subr.bf16.mxu0 0
    %2658 = vmatpush1.bf16.msra.mxu0 0
    %2659 = vmatprep.mubr.bf16.mxu0 0
    %2660 = vmatmul.mubr.bf16.gmra.mrb[0].mxu0 %v2622
    %v2661 = vpop.f32.mrb[0].mxu0
    %v2662 = vadd.f32 0.0, %v2661
    %v2663 = vpop.f32.mrb[0].mxu0
    %v2664 = vpop.f32.mrb[0].mxu0
    %v2665 = vpop.f32.mrb[0].mxu0
    %2666 = vdwg.mxu0
    %2667 = vrot.lane.b32.xlu0 %v2558, 96
    %v2668 = vpop.permute.xlu0 %2667
    %2669 = vrot.lane.b32.xlu0 %v2559, 96
    %v2670 = vpop.permute.xlu0 %2669
    %v2672 = vsel %vm757, %v2668, 0
    %v2675 = vsel %vm757, %v2670, 0
    %2677 = vmatprep.subr.bf16.mxu0 0
    %2678 = vmatpush1.bf16.xpose.msra.mxu0 %v2675
    %2679 = vmatprep.subr.bf16.mxu0 0
    %2680 = vmatpush1.bf16.xpose.msra.mxu0 0
    %2681 = vmatprep.subr.bf16.mxu0 0
    %2682 = vmatpush1.bf16.xpose.msra.mxu0 0
    %2683 = vmatprep.subr.bf16.mxu0 0
    %2684 = vmatpush1.bf16.xpose.msra.mxu0 0
    %2685 = vmatprep.subr.bf16.mxu0 0
    %2686 = vmatpush1.bf16.xpose.msra.mxu0 0
    %2687 = vmatprep.subr.bf16.mxu0 0
    %2688 = vmatpush1.bf16.xpose.msra.mxu0 0
    %2689 = vmatprep.subr.bf16.mxu0 0
    %2690 = vmatpush1.bf16.xpose.msra.mxu0 0
    %2691 = vmatprep.subr.bf16.mxu0 0
    %2692 = vmatpush1.bf16.xpose.msra.mxu0 0
    %2693 = vmatprep.subr.bf16.mxu0 0
    %2694 = vmatpush1.bf16.xpose.msra.mxu0 0
    %2695 = vmatprep.subr.bf16.mxu0 0
    %2696 = vmatpush1.bf16.xpose.msra.mxu0 0
    %2697 = vmatprep.subr.bf16.mxu0 0
    %2698 = vmatpush1.bf16.xpose.msra.mxu0 0
    %2699 = vmatprep.subr.bf16.mxu0 0
    %2700 = vmatpush1.bf16.xpose.msra.mxu0 0
    %2701 = vmatprep.subr.bf16.mxu0 0
    %2702 = vmatpush1.bf16.xpose.msra.mxu0 0
    %2703 = vmatprep.subr.bf16.mxu0 0
    %2704 = vmatpush1.bf16.xpose.msra.mxu0 0
    %2705 = vmatprep.subr.bf16.mxu0 0
    %2706 = vmatpush1.bf16.xpose.msra.mxu0 0
    %2707 = vmatprep.subr.bf16.mxu0 0
    %2708 = vmatpush1.bf16.xpose.msra.mxu0 0
    %2709 = vmatprep.mubr.bf16.mxu0 0
    %2710 = vmatmul.mubr.bf16.gmra.mrb[0].mxu0 %v2672
    %v2711 = vpop.f32.mrb[0].mxu0
    %v2712 = vadd.f32 0.0, %v2711
    %v2713 = vpop.f32.mrb[0].mxu0
    %v2714 = vpop.f32.mrb[0].mxu0
    %v2715 = vpop.f32.mrb[0].mxu0
    %2716 = vdwg.mxu0
    %v2717 = vmul.f32 %v2712, 0.17677669
    %v2718 = vsel %vm454, %v2717, -1e+30
    %v2719 = vsel %vm806, %v2718, -inf
    %2720 = vmax.xlane.f32.xlu0 %v2719
    %v2721 = vpop.xlane.xlu0 %2720
    %v2722 = vsub.f32 %v2718, %v2721
    %v2723 = vmul.f32 %v2722, 1.442695
    %v2724 = vpow.pop %v2723
    %v2725 = vsel %vm806, %v2724, 0.0
    %2726 = vadd.xlane.f32.xlu0 %v2725
    %v2727 = vpop.xlane.xlu0 %2726
    %v2728 = vrcp.pop %v2727
    %v2729 = vmul.f32 %v2724, %v2728
    %v2730 = vpack.c.bf16 %v2729, %v2729
    %2731 = vrot.lane.b32.xlu0 %v2620, 96
    %v2732 = vpop.permute.xlu0 %2731
    %v2734 = vsel %vm806, %v2730, 0
    %v2737 = vsel %vm822, %v2732, 0
    %2739 = vmatprep.subr.bf16.mxu0 0
    %2740 = vmatpush1.bf16.msra.mxu0 %v2737
    %2741 = vmatprep.subr.bf16.mxu0 0
    %2742 = vmatpush1.bf16.msra.mxu0 0
    %2743 = vmatprep.subr.bf16.mxu0 0
    %2744 = vmatpush1.bf16.msra.mxu0 0
    %2745 = vmatprep.subr.bf16.mxu0 0
    %2746 = vmatpush1.bf16.msra.mxu0 0
    %2747 = vmatprep.subr.bf16.mxu0 0
    %2748 = vmatpush1.bf16.msra.mxu0 0
    %2749 = vmatprep.subr.bf16.mxu0 0
    %2750 = vmatpush1.bf16.msra.mxu0 0
    %2751 = vmatprep.subr.bf16.mxu0 0
    %2752 = vmatpush1.bf16.msra.mxu0 0
    %2753 = vmatprep.subr.bf16.mxu0 0
    %2754 = vmatpush1.bf16.msra.mxu0 0
    %2755 = vmatprep.subr.bf16.mxu0 0
    %2756 = vmatpush1.bf16.msra.mxu0 0
    %2757 = vmatprep.subr.bf16.mxu0 0
    %2758 = vmatpush1.bf16.msra.mxu0 0
    %2759 = vmatprep.subr.bf16.mxu0 0
    %2760 = vmatpush1.bf16.msra.mxu0 0
    %2761 = vmatprep.subr.bf16.mxu0 0
    %2762 = vmatpush1.bf16.msra.mxu0 0
    %2763 = vmatprep.subr.bf16.mxu0 0
    %2764 = vmatpush1.bf16.msra.mxu0 0
    %2765 = vmatprep.subr.bf16.mxu0 0
    %2766 = vmatpush1.bf16.msra.mxu0 0
    %2767 = vmatprep.subr.bf16.mxu0 0
    %2768 = vmatpush1.bf16.msra.mxu0 0
    %2769 = vmatprep.subr.bf16.mxu0 0
    %2770 = vmatpush1.bf16.msra.mxu0 0
    %2771 = vmatprep.mubr.bf16.mxu0 0
    %2772 = vmatmul.mubr.bf16.gmra.mrb[0].mxu0 %v2734
    %v2773 = vpop.f32.mrb[0].mxu0
    %v2774 = vadd.f32 0.0, %v2773
    %v2775 = vpop.f32.mrb[0].mxu0
    %v2776 = vpop.f32.mrb[0].mxu0
    %v2777 = vpop.f32.mrb[0].mxu0
    %2778 = vdwg.mxu0
    %2779 = vrot.lane.b32.xlu0 %v2558, 64
    %v2780 = vpop.permute.xlu0 %2779
    %2781 = vrot.lane.b32.xlu0 %v2559, 64
    %v2782 = vpop.permute.xlu0 %2781
    %v2784 = vsel %vm757, %v2780, 0
    %v2787 = vsel %vm757, %v2782, 0
    %2789 = vmatprep.subr.bf16.mxu0 0
    %2790 = vmatpush1.bf16.xpose.msra.mxu0 %v2787
    %2791 = vmatprep.subr.bf16.mxu0 0
    %2792 = vmatpush1.bf16.xpose.msra.mxu0 0
    %2793 = vmatprep.subr.bf16.mxu0 0
    %2794 = vmatpush1.bf16.xpose.msra.mxu0 0
    %2795 = vmatprep.subr.bf16.mxu0 0
    %2796 = vmatpush1.bf16.xpose.msra.mxu0 0
    %2797 = vmatprep.subr.bf16.mxu0 0
    %2798 = vmatpush1.bf16.xpose.msra.mxu0 0
    %2799 = vmatprep.subr.bf16.mxu0 0
    %2800 = vmatpush1.bf16.xpose.msra.mxu0 0
    %2801 = vmatprep.subr.bf16.mxu0 0
    %2802 = vmatpush1.bf16.xpose.msra.mxu0 0
    %2803 = vmatprep.subr.bf16.mxu0 0
    %2804 = vmatpush1.bf16.xpose.msra.mxu0 0
    %2805 = vmatprep.subr.bf16.mxu0 0
    %2806 = vmatpush1.bf16.xpose.msra.mxu0 0
    %2807 = vmatprep.subr.bf16.mxu0 0
    %2808 = vmatpush1.bf16.xpose.msra.mxu0 0
    %2809 = vmatprep.subr.bf16.mxu0 0
    %2810 = vmatpush1.bf16.xpose.msra.mxu0 0
    %2811 = vmatprep.subr.bf16.mxu0 0
    %2812 = vmatpush1.bf16.xpose.msra.mxu0 0
    %2813 = vmatprep.subr.bf16.mxu0 0
    %2814 = vmatpush1.bf16.xpose.msra.mxu0 0
    %2815 = vmatprep.subr.bf16.mxu0 0
    %2816 = vmatpush1.bf16.xpose.msra.mxu0 0
    %2817 = vmatprep.subr.bf16.mxu0 0
    %2818 = vmatpush1.bf16.xpose.msra.mxu0 0
    %2819 = vmatprep.subr.bf16.mxu0 0
    %2820 = vmatpush1.bf16.xpose.msra.mxu0 0
    %2821 = vmatprep.mubr.bf16.mxu0 0
    %2822 = vmatmul.mubr.bf16.gmra.mrb[0].mxu0 %v2784
    %v2823 = vpop.f32.mrb[0].mxu0
    %v2824 = vadd.f32 0.0, %v2823
    %v2825 = vpop.f32.mrb[0].mxu0
    %v2826 = vpop.f32.mrb[0].mxu0
    %v2827 = vpop.f32.mrb[0].mxu0
    %2828 = vdwg.mxu0
    %v2829 = vmul.f32 %v2824, 0.17677669
    %v2830 = vsel %vm454, %v2829, -1e+30
    %v2831 = vsel %vm806, %v2830, -inf
    %2832 = vmax.xlane.f32.xlu0 %v2831
    %v2833 = vpop.xlane.xlu0 %2832
    %v2834 = vsub.f32 %v2830, %v2833
    %v2835 = vmul.f32 %v2834, 1.442695
    %v2836 = vpow.pop %v2835
    %v2837 = vsel %vm806, %v2836, 0.0
    %2838 = vadd.xlane.f32.xlu0 %v2837
    %v2839 = vpop.xlane.xlu0 %2838
    %v2840 = vrcp.pop %v2839
    %v2841 = vmul.f32 %v2836, %v2840
    %v2842 = vpack.c.bf16 %v2841, %v2841
    %2843 = vrot.lane.b32.xlu0 %v2620, 64
    %v2844 = vpop.permute.xlu0 %2843
    %v2846 = vsel %vm806, %v2842, 0
    %v2849 = vsel %vm822, %v2844, 0
    %2851 = vmatprep.subr.bf16.mxu0 0
    %2852 = vmatpush1.bf16.msra.mxu0 %v2849
    %2853 = vmatprep.subr.bf16.mxu0 0
    %2854 = vmatpush1.bf16.msra.mxu0 0
    %2855 = vmatprep.subr.bf16.mxu0 0
    %2856 = vmatpush1.bf16.msra.mxu0 0
    %2857 = vmatprep.subr.bf16.mxu0 0
    %2858 = vmatpush1.bf16.msra.mxu0 0
    %2859 = vmatprep.subr.bf16.mxu0 0
    %2860 = vmatpush1.bf16.msra.mxu0 0
    %2861 = vmatprep.subr.bf16.mxu0 0
    %2862 = vmatpush1.bf16.msra.mxu0 0
    %2863 = vmatprep.subr.bf16.mxu0 0
    %2864 = vmatpush1.bf16.msra.mxu0 0
    %2865 = vmatprep.subr.bf16.mxu0 0
    %2866 = vmatpush1.bf16.msra.mxu0 0
    %2867 = vmatprep.subr.bf16.mxu0 0
    %2868 = vmatpush1.bf16.msra.mxu0 0
    %2869 = vmatprep.subr.bf16.mxu0 0
    %2870 = vmatpush1.bf16.msra.mxu0 0
    %2871 = vmatprep.subr.bf16.mxu0 0
    %2872 = vmatpush1.bf16.msra.mxu0 0
    %2873 = vmatprep.subr.bf16.mxu0 0
    %2874 = vmatpush1.bf16.msra.mxu0 0
    %2875 = vmatprep.subr.bf16.mxu0 0
    %2876 = vmatpush1.bf16.msra.mxu0 0
    %2877 = vmatprep.subr.bf16.mxu0 0
    %2878 = vmatpush1.bf16.msra.mxu0 0
    %2879 = vmatprep.subr.bf16.mxu0 0
    %2880 = vmatpush1.bf16.msra.mxu0 0
    %2881 = vmatprep.subr.bf16.mxu0 0
    %2882 = vmatpush1.bf16.msra.mxu0 0
    %2883 = vmatprep.mubr.bf16.mxu0 0
    %2884 = vmatmul.mubr.bf16.gmra.mrb[0].mxu0 %v2846
    %v2885 = vpop.f32.mrb[0].mxu0
    %v2886 = vadd.f32 0.0, %v2885
    %v2887 = vpop.f32.mrb[0].mxu0
    %v2888 = vpop.f32.mrb[0].mxu0
    %v2889 = vpop.f32.mrb[0].mxu0
    %2890 = vdwg.mxu0
    %2891 = vrot.lane.b32.xlu0 %v2558, 32
    %v2892 = vpop.permute.xlu0 %2891
    %2893 = vrot.lane.b32.xlu0 %v2559, 32
    %v2894 = vpop.permute.xlu0 %2893
    %v2896 = vsel %vm757, %v2892, 0
    %v2899 = vsel %vm757, %v2894, 0
    %2901 = vmatprep.subr.bf16.mxu0 0
    %2902 = vmatpush1.bf16.xpose.msra.mxu0 %v2899
    %2903 = vmatprep.subr.bf16.mxu0 0
    %2904 = vmatpush1.bf16.xpose.msra.mxu0 0
    %2905 = vmatprep.subr.bf16.mxu0 0
    %2906 = vmatpush1.bf16.xpose.msra.mxu0 0
    %2907 = vmatprep.subr.bf16.mxu0 0
    %2908 = vmatpush1.bf16.xpose.msra.mxu0 0
    %2909 = vmatprep.subr.bf16.mxu0 0
    %2910 = vmatpush1.bf16.xpose.msra.mxu0 0
    %2911 = vmatprep.subr.bf16.mxu0 0
    %2912 = vmatpush1.bf16.xpose.msra.mxu0 0
    %2913 = vmatprep.subr.bf16.mxu0 0
    %2914 = vmatpush1.bf16.xpose.msra.mxu0 0
    %2915 = vmatprep.subr.bf16.mxu0 0
    %2916 = vmatpush1.bf16.xpose.msra.mxu0 0
    %2917 = vmatprep.subr.bf16.mxu0 0
    %2918 = vmatpush1.bf16.xpose.msra.mxu0 0
    %2919 = vmatprep.subr.bf16.mxu0 0
    %2920 = vmatpush1.bf16.xpose.msra.mxu0 0
    %2921 = vmatprep.subr.bf16.mxu0 0
    %2922 = vmatpush1.bf16.xpose.msra.mxu0 0
    %2923 = vmatprep.subr.bf16.mxu0 0
    %2924 = vmatpush1.bf16.xpose.msra.mxu0 0
    %2925 = vmatprep.subr.bf16.mxu0 0
    %2926 = vmatpush1.bf16.xpose.msra.mxu0 0
    %2927 = vmatprep.subr.bf16.mxu0 0
    %2928 = vmatpush1.bf16.xpose.msra.mxu0 0
    %2929 = vmatprep.subr.bf16.mxu0 0
    %2930 = vmatpush1.bf16.xpose.msra.mxu0 0
    %2931 = vmatprep.subr.bf16.mxu0 0
    %2932 = vmatpush1.bf16.xpose.msra.mxu0 0
    %2933 = vmatprep.mubr.bf16.mxu0 0
    %2934 = vmatmul.mubr.bf16.gmra.mrb[0].mxu0 %v2896
    %v2935 = vpop.f32.mrb[0].mxu0
    %v2936 = vadd.f32 0.0, %v2935
    %v2937 = vpop.f32.mrb[0].mxu0
    %v2938 = vpop.f32.mrb[0].mxu0
    %v2939 = vpop.f32.mrb[0].mxu0
    %2940 = vdwg.mxu0
    %v2941 = vmul.f32 %v2936, 0.17677669
    %v2942 = vsel %vm454, %v2941, -1e+30
    %v2943 = vsel %vm806, %v2942, -inf
    %2944 = vmax.xlane.f32.xlu0 %v2943
    %v2945 = vpop.xlane.xlu0 %2944
    %v2946 = vsub.f32 %v2942, %v2945
    %v2947 = vmul.f32 %v2946, 1.442695
    %v2948 = vpow.pop %v2947
    %v2949 = vsel %vm806, %v2948, 0.0
    %2950 = vadd.xlane.f32.xlu0 %v2949
    %v2951 = vpop.xlane.xlu0 %2950
    %v2952 = vrcp.pop %v2951
    %v2953 = vmul.f32 %v2948, %v2952
    %v2954 = vpack.c.bf16 %v2953, %v2953
    %2955 = vrot.lane.b32.xlu0 %v2620, 32
    %v2956 = vpop.permute.xlu0 %2955
    %v2958 = vsel %vm806, %v2954, 0
    %v2961 = vsel %vm822, %v2956, 0
    %2963 = vmatprep.subr.bf16.mxu0 0
    %2964 = vmatpush1.bf16.msra.mxu0 %v2961
    %2965 = vmatprep.subr.bf16.mxu0 0
    %2966 = vmatpush1.bf16.msra.mxu0 0
    %2967 = vmatprep.subr.bf16.mxu0 0
    %2968 = vmatpush1.bf16.msra.mxu0 0
    %2969 = vmatprep.subr.bf16.mxu0 0
    %2970 = vmatpush1.bf16.msra.mxu0 0
    %2971 = vmatprep.subr.bf16.mxu0 0
    %2972 = vmatpush1.bf16.msra.mxu0 0
    %2973 = vmatprep.subr.bf16.mxu0 0
    %2974 = vmatpush1.bf16.msra.mxu0 0
    %2975 = vmatprep.subr.bf16.mxu0 0
    %2976 = vmatpush1.bf16.msra.mxu0 0
    %2977 = vmatprep.subr.bf16.mxu0 0
    %2978 = vmatpush1.bf16.msra.mxu0 0
    %2979 = vmatprep.subr.bf16.mxu0 0
    %2980 = vmatpush1.bf16.msra.mxu0 0
    %2981 = vmatprep.subr.bf16.mxu0 0
    %2982 = vmatpush1.bf16.msra.mxu0 0
    %2983 = vmatprep.subr.bf16.mxu0 0
    %2984 = vmatpush1.bf16.msra.mxu0 0
    %2985 = vmatprep.subr.bf16.mxu0 0
    %2986 = vmatpush1.bf16.msra.mxu0 0
    %2987 = vmatprep.subr.bf16.mxu0 0
    %2988 = vmatpush1.bf16.msra.mxu0 0
    %2989 = vmatprep.subr.bf16.mxu0 0
    %2990 = vmatpush1.bf16.msra.mxu0 0
    %2991 = vmatprep.subr.bf16.mxu0 0
    %2992 = vmatpush1.bf16.msra.mxu0 0
    %2993 = vmatprep.subr.bf16.mxu0 0
    %2994 = vmatpush1.bf16.msra.mxu0 0
    %2995 = vmatprep.mubr.bf16.mxu0 0
    %2996 = vmatmul.mubr.bf16.gmra.mrb[0].mxu0 %v2958
    %v2997 = vpop.f32.mrb[0].mxu0
    %v2998 = vadd.f32 0.0, %v2997
    %v2999 = vpop.f32.mrb[0].mxu0
    %v3000 = vpop.f32.mrb[0].mxu0
    %v3001 = vpop.f32.mrb[0].mxu0
    %3002 = vdwg.mxu0
    %3004 = vrot.lane.b32.xlu0 %v2774, 32
    %v3005 = vpop.permute.xlu0 %3004
    %3008 = vrot.lane.b32.xlu0 %v2886, 64
    %v3009 = vpop.permute.xlu0 %3008
    %3012 = vrot.lane.b32.xlu0 %v2998, 96
    %v3013 = vpop.permute.xlu0 %3012
    %v3015 = vsel %vm757, %v2662, %v3005
    %v3016 = vsel %vm1218, %v3015, %v3009
    %v3017 = vsel %vm1220, %v3016, %v3013
    %v3018 = vpack.c.bf16 %v3017, %v2557
    %s3019 = scalar_lea.vmem [#allocation6], 64
    %v3020 = vld [vmem:[%s3019] sm:$0xf]
    %v3021 = vld [vmem:[%s3019 + $0x4] sm:$0xf]
    %v3022 = vld [vmem:[%s3019 + $0x8] sm:$0xf]
    %v3023 = vld [vmem:[%s3019 + $0xc] sm:$0xf]
    %v3024 = vld [vmem:[%s3019 + $0x10] sm:$0xf]
    %v3025 = vld [vmem:[%s3019 + $0x14] sm:$0xf]
    %v3026 = vld [vmem:[%s3019 + $0x18] sm:$0xf]
    %v3027 = vld [vmem:[%s3019 + $0x1c] sm:$0xf]
    %v3028 = vld [vmem:[%s3019 + $0x20] sm:$0xf]
    %v3029 = vld [vmem:[%s3019 + $0x24] sm:$0xf]
    %v3030 = vld [vmem:[%s3019 + $0x28] sm:$0xf]
    %v3031 = vld [vmem:[%s3019 + $0x2c] sm:$0xf]
    %v3032 = vld [vmem:[%s3019 + $0x30] sm:$0xf]
    %v3033 = vld [vmem:[%s3019 + $0x34] sm:$0xf]
    %v3034 = vld [vmem:[%s3019 + $0x38] sm:$0xf]
    %v3035 = vld [vmem:[%s3019 + $0x3c] sm:$0xf]
    %v3036 = vld [vmem:[%s8 + $0x1] sm:$0x1]
    %v3037 = vlaneseq
    %v3038 = vshrl.u32 %v3037, 7
    %v3039 = vsub.s32 0, %v3038
    %v3040 = vrot.slane %v3036, %v3039
    %v3057 = vunpack.c.l.b16 %v3020
    %v3058 = vunpack.c.l.b16 %v3021
    %v3059 = vunpack.c.l.b16 %v3022
    %v3060 = vunpack.c.l.b16 %v3023
    %v3061 = vunpack.c.l.b16 %v3024
    %v3062 = vunpack.c.l.b16 %v3025
    %v3063 = vunpack.c.l.b16 %v3026
    %v3064 = vunpack.c.l.b16 %v3027
    %v3065 = vunpack.c.l.b16 %v3028
    %v3066 = vunpack.c.l.b16 %v3029
    %v3067 = vunpack.c.l.b16 %v3030
    %v3068 = vunpack.c.l.b16 %v3031
    %v3069 = vunpack.c.l.b16 %v3032
    %v3070 = vunpack.c.l.b16 %v3033
    %v3071 = vunpack.c.l.b16 %v3034
    %v3072 = vunpack.c.l.b16 %v3035
    %v3073 = vpack.c.b16 %v3058, %v3057
    %v3074 = vpack.c.b16 %v3060, %v3059
    %v3075 = vpack.c.b16 %v3062, %v3061
    %v3076 = vpack.c.b16 %v3064, %v3063
    %v3077 = vpack.c.b16 %v3066, %v3065
    %v3078 = vpack.c.b16 %v3068, %v3067
    %v3079 = vpack.c.b16 %v3070, %v3069
    %v3080 = vpack.c.b16 %v3072, %v3071
    %3089 = vmatprep.subr.bf16.mxu0 0
    %3090 = vmatpush1.bf16.msra.mxu0 %v3073
    %3091 = vmatprep.subr.bf16.mxu0 0
    %3092 = vmatpush1.bf16.msra.mxu0 %v3074
    %3093 = vmatprep.subr.bf16.mxu0 0
    %3094 = vmatpush1.bf16.msra.mxu0 %v3075
    %3095 = vmatprep.subr.bf16.mxu0 0
    %3096 = vmatpush1.bf16.msra.mxu0 %v3076
    %3097 = vmatprep.subr.bf16.mxu0 0
    %3098 = vmatpush1.bf16.msra.mxu0 %v3077
    %3099 = vmatprep.subr.bf16.mxu0 0
    %3100 = vmatpush1.bf16.msra.mxu0 %v3078
    %3101 = vmatprep.subr.bf16.mxu0 0
    %3102 = vmatpush1.bf16.msra.mxu0 %v3079
    %3103 = vmatprep.subr.bf16.mxu0 0
    %3104 = vmatpush1.bf16.msra.mxu0 %v3080
    %3105 = vmatprep.subr.bf16.mxu0 0
    %3106 = vmatpush1.bf16.msra.mxu0 0
    %3107 = vmatprep.subr.bf16.mxu0 0
    %3108 = vmatpush1.bf16.msra.mxu0 0
    %3109 = vmatprep.subr.bf16.mxu0 0
    %3110 = vmatpush1.bf16.msra.mxu0 0
    %3111 = vmatprep.subr.bf16.mxu0 0
    %3112 = vmatpush1.bf16.msra.mxu0 0
    %3113 = vmatprep.subr.bf16.mxu0 0
    %3114 = vmatpush1.bf16.msra.mxu0 0
    %3115 = vmatprep.subr.bf16.mxu0 0
    %3116 = vmatpush1.bf16.msra.mxu0 0
    %3117 = vmatprep.subr.bf16.mxu0 0
    %3118 = vmatpush1.bf16.msra.mxu0 0
    %3119 = vmatprep.subr.bf16.mxu0 0
    %3120 = vmatpush1.bf16.msra.mxu0 0
    %3121 = vmatprep.mubr.bf16.mxu0 0
    %3122 = vmatmul.mubr.bf16.gmra.mrb[0].mxu0 %v3018
    %v3123 = vpop.f32.mrb[0].mxu0
    %v3124 = vadd.f32 %v3040, %v3123
    %v3125 = vpop.f32.mrb[0].mxu0
    %v3126 = vpop.f32.mrb[0].mxu0
    %v3127 = vadd.f32 %v3040, %v3126
    %v3128 = vpop.f32.mrb[0].mxu0
    %3129 = vdwg.mxu0
    %v3130 = vadd.f32 %v1793, %v3124
    %v3131 = vadd.f32 %v1794, %v3127
    %v3133 = vrot.slane %v3130, 7
    %v3136 = vrot.slane %v3131, 6
    %vm3138 = vcmask 1040384
    %v3139 = vsel %vm3138, %v3133, %v3136
    %v3140 = vld [vmem:[%s9] sm:$0x1]
    %v3141 = vld [vmem:[%s10] sm:$0x1]
    %vm3142 = vcmask 1041408
    %v3143 = vsel %vm3142, %v3139, 0.0
    %3144 = vadd.xlane.f32.xlu0 %v3143
    %v3145 = vpop.xlane.xlu0 %3144
    %v3146 = vmul.f32 %v3145, %v461
    %v3147 = vsub.f32 %v3139, %v3146
    %v3148 = vmul.f32 %v3147, %v3147
    %v3149 = vsel %vm3142, %v3148, 0.0
    %3150 = vadd.xlane.f32.xlu0 %v3149
    %v3151 = vpop.xlane.xlu0 %3150
    %v3152 = vmul.f32 %v3151, %v461
    %v3153 = vadd.f32 %v3152, 1e-05
    %v3154 = vrsqrt.pop %v3153
    %v3155 = vmul.f32 %v3147, %v3154
    %v3157 = vlaneseq
    %v3158 = vshrl.u32 %v3157, 7
    %v3159 = vsub.s32 0, %v3158
    %v3160 = vrot.slane %v3140, %v3159
    %v3162 = vmul.f32 %v3155, %v3160
    %v3164 = vlaneseq
    %v3165 = vshrl.u32 %v3164, 7
    %v3166 = vsub.s32 0, %v3165
    %v3167 = vrot.slane %v3141, %v3166
    %v3169 = vadd.f32 %v3162, %v3167
    %v3170 = vpack.c.bf16 %v3169, %v3169
    %3171 = vmatprep.subr.bf16.mxu0 0
    %3172 = vmatpush1.bf16.xpose.msra.mxu0 %v306
    %3173 = vmatprep.subr.bf16.mxu0 0
    %3174 = vmatpush1.bf16.xpose.msra.mxu0 %v307
    %3175 = vmatprep.subr.bf16.mxu0 0
    %3176 = vmatpush1.bf16.xpose.msra.mxu0 %v308
    %3177 = vmatprep.subr.bf16.mxu0 0
    %3178 = vmatpush1.bf16.xpose.msra.mxu0 %v309
    %3179 = vmatprep.subr.bf16.mxu0 0
    %3180 = vmatpush1.bf16.xpose.msra.mxu0 %v310
    %3181 = vmatprep.subr.bf16.mxu0 0
    %3182 = vmatpush1.bf16.xpose.msra.mxu0 %v311
    %3183 = vmatprep.subr.bf16.mxu0 0
    %3184 = vmatpush1.bf16.xpose.msra.mxu0 %v312
    %3185 = vmatprep.subr.bf16.mxu0 0
    %3186 = vmatpush1.bf16.xpose.msra.mxu0 %v313
    %3187 = vmatprep.subr.bf16.mxu0 0
    %3188 = vmatpush1.bf16.xpose.msra.mxu0 %v314
    %3189 = vmatprep.subr.bf16.mxu0 0
    %3190 = vmatpush1.bf16.xpose.msra.mxu0 %v315
    %3191 = vmatprep.subr.bf16.mxu0 0
    %3192 = vmatpush1.bf16.xpose.msra.mxu0 %v316
    %3193 = vmatprep.subr.bf16.mxu0 0
    %3194 = vmatpush1.bf16.xpose.msra.mxu0 %v317
    %3195 = vmatprep.subr.bf16.mxu0 0
    %3196 = vmatpush1.bf16.xpose.msra.mxu0 %v318
    %3197 = vmatprep.subr.bf16.mxu0 0
    %3198 = vmatpush1.bf16.xpose.msra.mxu0 %v319
    %3199 = vmatprep.subr.bf16.mxu0 0
    %3200 = vmatpush1.bf16.xpose.msra.mxu0 %v320
    %3201 = vmatprep.subr.bf16.mxu0 0
    %3202 = vmatpush1.bf16.xpose.msra.mxu0 %v321
    %3203 = vmatprep.mubr.bf16.mxu0 0
    %3204 = vmatmul.mubr.bf16.gmra.mrb[0].mxu0 %v3170
    %v3205 = vpop.f32.mrb[0].mxu0
    %v3206 = vadd.f32 0.0, %v3205
    %v3207 = vpop.f32.mrb[0].mxu0
    %v3208 = vadd.f32 0.0, %v3207
    %v3209 = vpop.f32.mrb[0].mxu0
    %v3210 = vpop.f32.mrb[0].mxu0
    %3211 = vdwg.mxu0
    %3212 = vmatprep.subr.bf16.mxu0 0
    %3213 = vmatpush1.bf16.xpose.msra.mxu0 %v322
    %3214 = vmatprep.subr.bf16.mxu0 0
    %3215 = vmatpush1.bf16.xpose.msra.mxu0 %v323
    %3216 = vmatprep.subr.bf16.mxu0 0
    %3217 = vmatpush1.bf16.xpose.msra.mxu0 %v324
    %3218 = vmatprep.subr.bf16.mxu0 0
    %3219 = vmatpush1.bf16.xpose.msra.mxu0 %v325
    %3220 = vmatprep.subr.bf16.mxu0 0
    %3221 = vmatpush1.bf16.xpose.msra.mxu0 %v326
    %3222 = vmatprep.subr.bf16.mxu0 0
    %3223 = vmatpush1.bf16.xpose.msra.mxu0 %v327
    %3224 = vmatprep.subr.bf16.mxu0 0
    %3225 = vmatpush1.bf16.xpose.msra.mxu0 %v328
    %3226 = vmatprep.subr.bf16.mxu0 0
    %3227 = vmatpush1.bf16.xpose.msra.mxu0 %v329
    %3228 = vmatprep.subr.bf16.mxu0 0
    %3229 = vmatpush1.bf16.xpose.msra.mxu0 %v330
    %3230 = vmatprep.subr.bf16.mxu0 0
    %3231 = vmatpush1.bf16.xpose.msra.mxu0 %v331
    %3232 = vmatprep.subr.bf16.mxu0 0
    %3233 = vmatpush1.bf16.xpose.msra.mxu0 %v332
    %3234 = vmatprep.subr.bf16.mxu0 0
    %3235 = vmatpush1.bf16.xpose.msra.mxu0 %v333
    %3236 = vmatprep.subr.bf16.mxu0 0
    %3237 = vmatpush1.bf16.xpose.msra.mxu0 %v334
    %3238 = vmatprep.subr.bf16.mxu0 0
    %3239 = vmatpush1.bf16.xpose.msra.mxu0 %v335
    %3240 = vmatprep.subr.bf16.mxu0 0
    %3241 = vmatpush1.bf16.xpose.msra.mxu0 %v336
    %3242 = vmatprep.subr.bf16.mxu0 0
    %3243 = vmatpush1.bf16.xpose.msra.mxu0 %v337
    %3244 = vmatprep.mubr.bf16.mxu0 0
    %3245 = vmatmul.mubr.bf16.gmra.mrb[0].mxu0 %v3170
    %v3246 = vpop.f32.mrb[0].mxu0
    %v3247 = vadd.f32 0.0, %v3246
    %v3248 = vpop.f32.mrb[0].mxu0
    %v3249 = vadd.f32 0.0, %v3248
    %v3250 = vpop.f32.mrb[0].mxu0
    %v3251 = vpop.f32.mrb[0].mxu0
    %3252 = vdwg.mxu0
    %v3257 = vcombine.low %v3206, %v3208
    %v3258 = vcombine.low %v3247, %v3249
    %v3260 = vunpack.c.l.s4 1983009808
    %v3261 = vunpack.c.0.s8 %v3260
    %v3262 = vlaneseq
    %v3263 = vshrl.u32 %v3262, 7
    %v3264 = vsub.s32 %v3261, %v3263
    %v3265 = vrot.slane %v3257, %v3264
    %v3267 = vunpack.c.l.s4 1983009808
    %v3268 = vunpack.c.0.s8 %v3267
    %v3269 = vlaneseq
    %v3270 = vshrl.u32 %v3269, 7
    %v3271 = vsub.s32 %v3268, %v3270
    %v3272 = vrot.slane %v3258, %v3271
    %v3273 = vcombine.low %v3265, %v3272
    %3275 = vst [vmem:[%s11] sm:$0xff] %v3273
    // Predicated region
    $region58: #{gpt_forward.1} parent=1 // pred_check
      _
    $region59: #{gpt_forward.1} parent=1 // pred_check_branch
      %3277 = sbr.rel (0) target = $region61
    $region60: #{gpt_forward.1} parent=1 // pred_region
      _
    $region61: #{gpt_forward.1} parent=1 // pred_fallthru
      _
    // Predicated region
    $region62: #{gpt_forward.1} parent=1 // pred_check
      _
    $region63: #{gpt_forward.1} parent=1 // pred_check_branch
      %3279 = sbr.rel (0) target = $region65
    $region64: #{gpt_forward.1} parent=1 // pred_region
      _
    $region65: #{gpt_forward.1} parent=1 // pred_fallthru
      _
    %3280 = vsyncpa [#allocation3], 1
    %3281 = vsyncpa [#allocation5], 1

</llo_original>
